<compile_context>
chip_gen: v7x
topology: tpu7x:2x2x1
jax: 0.10.0
libtpu: 0.0.40
codegen_flags: <defaults>
</compile_context>

<pallas_src>
import functools
import math

import jax
import jax.numpy as jnp
from jax.experimental import pallas as pl
from jax.experimental.pallas import tpu as pltpu


# --------------------------------- kernel ----------------------------------

def _csab_kernel(x_ref, y_ref,
                 attn_w_ref, attn_b_ref,   # (2, D, 4D) bf16, (2, 1, 4D) f32
                 f1_w_ref, f1_b_ref,       # (2, D, Hd) bf16, (2, 1, Hd) f32
                 f2_w_ref, f2_b_ref,       # (2, Hd, D) bf16, (2, 1, D)  f32
                 fc_w_ref, fc_b_ref,       # (2, D, D)  bf16, (2, 1, D)  f32
                 xo_ref, yo_ref,
                 *, num_heads):
    x = x_ref[...]                         # (TB, Nx, D) f32
    y = y_ref[...]                         # (TB, Ny, D) f32
    tb, nx, d = x.shape
    ny = y.shape[1]
    dh = d // num_heads

    # Flatten batch*set so every projection / FC is one tall (TB*N, D) MXU matmul.
    x2 = x.reshape(tb * nx, d)
    y2 = y.reshape(tb * ny, d)
    x2b = x2.astype(jnp.bfloat16)
    y2b = y2.astype(jnp.bfloat16)

    def mm(a_bf16, w_bf16):
        return jnp.dot(a_bf16, w_bf16, preferred_element_type=jnp.float32)

    def mab(q2, q2b, k2b, nq, nk, idx):
        """One Multihead-Attention Block; idx 0 = XY path, 1 = YX path."""
        # Q projection (scale already folded into Wq / bq at pack time) and the
        # fused K|V projection as a single D -> 2D matmul.
        qp = mm(q2b, attn_w_ref[idx, :, 0:d]) + attn_b_ref[idx, :, 0:d]
        kvp = mm(k2b, attn_w_ref[idx, :, d:3 * d]) + attn_b_ref[idx, :, d:3 * d]
        qp = qp.astype(jnp.bfloat16).reshape(tb, nq, d)
        kvp = kvp.astype(jnp.bfloat16).reshape(tb, nk, 2 * d)

        # Per-head attention; each head's output is folded straight into the
        # output projection via a row-slice of Wo (ref slice -> free), so no
        # concat and no long-lived per-head outputs.
        bo = attn_b_ref[idx, :, 3 * d:4 * d]                 # (1, D) f32
        o = jnp.broadcast_to(bo, (tb * nq, d))
        for h in range(num_heads):
            lo = h * dh
            qh = qp[:, :, lo:lo + dh]                        # (TB, Nq, dh) bf16
            kh = kvp[:, :, lo:lo + dh]                       # (TB, Nk, dh) bf16
            vh = kvp[:, :, d + lo:d + lo + dh]               # (TB, Nk, dh) bf16
            e = jnp.einsum('bqd,bkd->bqk', qh, kh,
                           preferred_element_type=jnp.float32)
            e = e - jnp.max(e, axis=-1, keepdims=True)
            p = jnp.exp(e)
            a = (p * pl.reciprocal(jnp.sum(p, axis=-1, keepdims=True), approx=True)
                 ).astype(jnp.bfloat16)
            av = jnp.einsum('bqk,bkd->bqd', a, vh,
                            preferred_element_type=jnp.float32)
            o = o + mm(av.reshape(tb * nq, dh).astype(jnp.bfloat16),
                       attn_w_ref[idx, lo:lo + dh, 3 * d:4 * d])
        h1 = q2 + o                                          # residual 1 (f32)
        f = jnp.maximum(mm(h1.astype(jnp.bfloat16), f1_w_ref[idx]) + f1_b_ref[idx],
                        0.0)
        f = mm(f.astype(jnp.bfloat16), f2_w_ref[idx]) + f2_b_ref[idx]
        return h1 + f                                        # residual 2, (TB*Nq, D)

    xy = mab(x2, x2b, y2b, nx, ny, 0)
    yx = mab(y2, y2b, x2b, ny, nx, 1)
    x_out = x2 + mm(xy.astype(jnp.bfloat16), fc_w_ref[0]) + fc_b_ref[0]
    y_out = y2 + mm(yx.astype(jnp.bfloat16), fc_w_ref[1]) + fc_b_ref[1]
    xo_ref[...] = x_out.reshape(tb, nx, d).astype(xo_ref.dtype)
    yo_ref[...] = y_out.reshape(tb, ny, d).astype(yo_ref.dtype)


# ------------------------- block / VMEM sizing helpers ----------------------

def _tpu_vmem_and_cores():
    """Best-effort query of per-core VMEM and TensorCore count; safe fallbacks."""
    vmem = 64 * 1024 * 1024        # conservative (v7x per-TC)
    cores = 1
    try:
        info = pltpu.get_tpu_info()
        vmem = int(getattr(info, "vmem_capacity_bytes", vmem) or vmem)
        cores = int(getattr(info, "num_cores", 0)
                    or getattr(info, "tensorcores_per_chip", 0) or 1)
    except Exception:
        pass
    return vmem, cores


def _weight_bytes(weights):
    return sum(int(w.size) * w.dtype.itemsize for w in weights)


def _per_batch_block_bytes(nx, ny, d, hidden):
    """Rough VMEM cost (bytes) of one batch element inside a block."""
    f32 = 4
    io = 2 * 2 * (nx + ny) * d * f32              # x/y in + out blocks, double-buffered
    proj = (nx + ny) * (6 * d + 2 * hidden) * f32  # projections / FFN working set
    attn = 2 * nx * ny * f32                       # score / prob matrices
    return io + proj + attn


def _pick_block_b(batch, per_elem_bytes, weight_resident_bytes, vmem_capacity, num_cores):
    """Largest divisor of `batch` that fits the VMEM budget.  Only keep >= 2 grid
    steps when there are >= 2 TensorCores to feed (v7x); on single-core chips a
    single fat step maximizes the matmul M-dim and amortizes pipeline overhead."""
    budget = max(int(0.6 * vmem_capacity) - weight_resident_bytes, per_elem_bytes)
    cap = max(1, budget // max(per_elem_bytes, 1))
    if num_cores >= 2 and batch >= 2:
        cap = min(cap, max(1, batch // 2))
    cap = int(min(cap, batch))
    best = 1
    for cand in range(1, cap + 1):
        if batch % cand == 0:
            best = cand
    return best


# --------------------------------- wrapper ----------------------------------

def csab_forward(x, y, params, *, num_heads, block_b=None):
    """x: (B, Nx, D), y: (B, Ny, D) float32.  Returns (X_out, Y_out)."""
    B, Nx, D = x.shape
    Ny = y.shape[1]
    assert D % num_heads == 0
    hidden = params['f1_w'].shape[-1]

    weights = [params['attn_w'], params['attn_b'],
               params['f1_w'], params['f1_b'],
               params['f2_w'], params['f2_b'],
               params['fc_w'], params['fc_b']]

    vmem_cap, num_cores = _tpu_vmem_and_cores()
    per_elem = _per_batch_block_bytes(Nx, Ny, D, hidden)
    weight_resident = 2 * _weight_bytes(weights)   # default double-buffered BlockSpecs
    if block_b is None:
        block_b = _pick_block_b(B, per_elem, weight_resident, vmem_cap, num_cores)
    assert B % block_b == 0
    grid = (B // block_b,)

    requested = weight_resident + block_b * per_elem
    vmem_limit = int(min(int(0.9 * vmem_cap),
                         max(2 * requested, 32 * 1024 * 1024)))

    def full_spec(arr):
        nd = arr.ndim
        return pl.BlockSpec(arr.shape, lambda b, _nd=nd: (0,) * _nd)

    in_specs = [pl.BlockSpec((block_b, Nx, D), lambda b: (b, 0, 0)),
                pl.BlockSpec((block_b, Ny, D), lambda b: (b, 0, 0))]
    in_specs += [full_spec(w) for w in weights]
    out_specs = [pl.BlockSpec((block_b, Nx, D), lambda b: (b, 0, 0)),
                 pl.BlockSpec((block_b, Ny, D), lambda b: (b, 0, 0))]

    kernel = functools.partial(_csab_kernel, num_heads=num_heads)
    return pl.pallas_call(
        kernel,
        out_shape=(jax.ShapeDtypeStruct((B, Nx, D), x.dtype),
                   jax.ShapeDtypeStruct((B, Ny, D), y.dtype)),
        grid_spec=pltpu.PrefetchScalarGridSpec(
            num_scalar_prefetch=0,
            grid=grid,
            in_specs=in_specs,
            out_specs=out_specs),
        compiler_params=pltpu.CompilerParams(
            dimension_semantics=("parallel",),
            vmem_limit_bytes=vmem_limit),
    )(x, y, *weights)


# ---------------- parameter construction (matches nn.Linear shapes) ----------------

def _init_linear(key, d_in, d_out):
    kw, kb = jax.random.split(key)
    bound = 1.0 / math.sqrt(d_in)
    w = jax.random.uniform(kw, (d_in, d_out), jnp.float32, -bound, bound)
    b = jax.random.uniform(kb, (d_out,), jnp.float32, -bound, bound)
    return w, b


def make_params(key, latent, hidden):
    """Packed parameters: index 0 = MAB_XY path, index 1 = MAB_YX path.
    Weights are stored in bf16 (MXU-native); biases stay f32.  The 1/sqrt(latent)
    attention scale is folded into Wq / bq here (once, not per call)."""
    keys = jax.random.split(key, 14)
    scale = 1.0 / math.sqrt(latent)

    def mab_params(ks):
        wq, bq = _init_linear(ks[0], latent, latent)
        wk, bk = _init_linear(ks[1], latent, latent)
        wv, bv = _init_linear(ks[2], latent, latent)
        wo, bo = _init_linear(ks[3], latent, latent)
        w = jnp.concatenate([wq * scale, wk, wv, wo], axis=-1)      # (D, 4D)
        b = jnp.concatenate([bq * scale, bk, bv, bo], axis=-1)      # (4D,)
        f1w, f1b = _init_linear(ks[4], latent, hidden)
        f2w, f2b = _init_linear(ks[5], hidden, latent)
        return w, b, f1w, f1b, f2w, f2b

    xy = mab_params(keys[0:6])
    yx = mab_params(keys[6:12])
    fcx_w, fcx_b = _init_linear(keys[12], latent, latent)
    fcy_w, fcy_b = _init_linear(keys[13], latent, latent)

    bf = jnp.bfloat16
    return {
        'attn_w': jnp.stack([xy[0], yx[0]]).astype(bf),              # (2, D, 4D)
        'attn_b': jnp.stack([xy[1], yx[1]])[:, None, :],             # (2, 1, 4D) f32
        'f1_w': jnp.stack([xy[2], yx[2]]).astype(bf),                # (2, D, Hd)
        'f1_b': jnp.stack([xy[3], yx[3]])[:, None, :],               # (2, 1, Hd) f32
        'f2_w': jnp.stack([xy[4], yx[4]]).astype(bf),                # (2, Hd, D)
        'f2_b': jnp.stack([xy[5], yx[5]])[:, None, :],               # (2, 1, D) f32
        'fc_w': jnp.stack([fcx_w, fcy_w]).astype(bf),                # (2, D, D)
        'fc_b': jnp.stack([fcx_b, fcy_b])[:, None, :],               # (2, 1, D) f32
    }


# ---------------- pure-JAX reference mirroring the PyTorch forward ----------------

def csab_reference(x, y, params, *, num_heads):
    """f32 reference using the same packed weights (scale already folded into Wq)."""
    d = x.shape[-1]
    dh = d // num_heads
    aw = params['attn_w'].astype(jnp.float32)
    ab = params['attn_b'].astype(jnp.float32)
    f1w = params['f1_w'].astype(jnp.float32)
    f2w = params['f2_w'].astype(jnp.float32)
    fcw = params['fc_w'].astype(jnp.float32)

    def mha(q, k, idx):
        b, nq, _ = q.shape
        nk = k.shape[1]
        qp = q @ aw[idx, :, 0:d] + ab[idx, 0, 0:d]            # scale folded
        kp = k @ aw[idx, :, d:2 * d] + ab[idx, 0, d:2 * d]
        vp = k @ aw[idx, :, 2 * d:3 * d] + ab[idx, 0, 2 * d:3 * d]
        qh = qp.reshape(b, nq, num_heads, dh).transpose(0, 2, 1, 3)
        kh = kp.reshape(b, nk, num_heads, dh).transpose(0, 2, 1, 3)
        vh = vp.reshape(b, nk, num_heads, dh).transpose(0, 2, 1, 3)
        e = jnp.einsum('bhqd,bhkd->bhqk', qh, kh)             # no extra /sqrt(d)
        a = jax.nn.softmax(e, axis=-1)
        o = jnp.einsum('bhqk,bhkd->bhqd', a, vh)
        o = o.transpose(0, 2, 1, 3).reshape(b, nq, d)
        return o @ aw[idx, :, 3 * d:4 * d] + ab[idx, 0, 3 * d:4 * d]

    def mab(q, k, idx):
        h = q + mha(q, k, idx)
        f = jnp.maximum(h @ f1w[idx] + params['f1_b'][idx], 0.0)
        f = f @ f2w[idx] + params['f2_b'][idx]
        return h + f

    xy = mab(x, y, 0)
    yx = mab(y, x, 1)
    x_out = x + (xy @ fcw[0] + params['fc_b'][0])
    y_out = y + (yx @ fcw[1] + params['fc_b'][1])
    return x_out, y_out


if __name__ == "__main__":
    # Small shapes consistent with the module: inputs = (X, Y) sets,
    # input_size == latent_size (required by the residual connections).
    B = 2
    Nx, Ny = 8, 16
    latent_size = 32       # == input_size
    hidden_size = 64
    num_heads = 4

    key = jax.random.PRNGKey(0)
    kx, ky, kp = jax.random.split(key, 3)
    x = jax.random.normal(kx, (B, Nx, latent_size), dtype=jnp.float32)
    y = jax.random.normal(ky, (B, Ny, latent_size), dtype=jnp.float32)
    params = make_params(kp, latent_size, hidden_size)

    x_out, y_out = csab_forward(x, y, params, num_heads=num_heads)
    x_out = jax.block_until_ready(x_out)
    y_out = jax.block_until_ready(y_out)

    rx, ry = csab_reference(x, y, params, num_heads=num_heads)
    assert x_out.shape == (B, Nx, latent_size)
    assert y_out.shape == (B, Ny, latent_size)
    # bf16 matmul operands (f32 accumulation) + approx reciprocal -> relaxed tolerance.
    assert jnp.allclose(x_out, rx, atol=5e-2, rtol=5e-2), "X_out mismatch vs reference"
    assert jnp.allclose(y_out, ry, atol=5e-2, rtol=5e-2), "Y_out mismatch vs reference"

    print("KERNEL_OK")
</pallas_src>

<mosaic_0001>
module attributes {stable_mosaic.version = 11 : i64} {
  func.func @_csab_kernel(%arg0: i32, %arg1: memref<2x8x32xf32, #tpu.memory_space<vmem>>, %arg2: memref<2x16x32xf32, #tpu.memory_space<vmem>>, %arg3: memref<2x32x128xbf16, #tpu.memory_space<vmem>>, %arg4: memref<2x1x128xf32, #tpu.memory_space<vmem>>, %arg5: memref<2x32x64xbf16, #tpu.memory_space<vmem>>, %arg6: memref<2x1x64xf32, #tpu.memory_space<vmem>>, %arg7: memref<2x64x32xbf16, #tpu.memory_space<vmem>>, %arg8: memref<2x1x32xf32, #tpu.memory_space<vmem>>, %arg9: memref<2x32x32xbf16, #tpu.memory_space<vmem>>, %arg10: memref<2x1x32xf32, #tpu.memory_space<vmem>>, %arg11: memref<2x8x32xf32, #tpu.memory_space<vmem>>, %arg12: memref<2x16x32xf32, #tpu.memory_space<vmem>>) attributes {dimension_semantics = [#tpu.dimension_semantics<parallel>], iteration_bounds = array<i64: 1>, scalar_prefetch = 0 : i64, scratch_operands = 0 : i64, tpu.core_type = #tpu.core_type<tc>, window_params = [{transform_indices = @transform_0, window_bounds = array<i64: 2, 8, 32>}, {transform_indices = @transform_1, window_bounds = array<i64: 2, 16, 32>}, {pipeline_mode = #tpu.pipeline_mode<synchronous>, transform_indices = @transform_2, window_bounds = array<i64: 2, 32, 128>}, {pipeline_mode = #tpu.pipeline_mode<synchronous>, transform_indices = @transform_3, window_bounds = array<i64: 2, 1, 128>}, {pipeline_mode = #tpu.pipeline_mode<synchronous>, transform_indices = @transform_4, window_bounds = array<i64: 2, 32, 64>}, {pipeline_mode = #tpu.pipeline_mode<synchronous>, transform_indices = @transform_5, window_bounds = array<i64: 2, 1, 64>}, {pipeline_mode = #tpu.pipeline_mode<synchronous>, transform_indices = @transform_6, window_bounds = array<i64: 2, 64, 32>}, {pipeline_mode = #tpu.pipeline_mode<synchronous>, transform_indices = @transform_7, window_bounds = array<i64: 2, 1, 32>}, {pipeline_mode = #tpu.pipeline_mode<synchronous>, transform_indices = @transform_8, window_bounds = array<i64: 2, 32, 32>}, {pipeline_mode = #tpu.pipeline_mode<synchronous>, transform_indices = @transform_9, window_bounds = array<i64: 2, 1, 32>}, {transform_indices = @transform_10, window_bounds = array<i64: 2, 8, 32>}, {transform_indices = @transform_11, window_bounds = array<i64: 2, 16, 32>}]} {
    %c0 = arith.constant 0 : index
    %c0_0 = arith.constant 0 : index
    %c0_1 = arith.constant 0 : index
    %0 = vector.load %arg1[%c0, %c0_0, %c0_1] : memref<2x8x32xf32, #tpu.memory_space<vmem>>, vector<2x8x32xf32>
    %c0_2 = arith.constant 0 : index
    %c0_3 = arith.constant 0 : index
    %c0_4 = arith.constant 0 : index
    %1 = vector.load %arg2[%c0_2, %c0_3, %c0_4] : memref<2x16x32xf32, #tpu.memory_space<vmem>>, vector<2x16x32xf32>
    %2 = vector.shape_cast %0 : vector<2x8x32xf32> to vector<16x32xf32>
    %3 = vector.shape_cast %1 : vector<2x16x32xf32> to vector<32x32xf32>
    %4 = arith.truncf %2 : vector<16x32xf32> to vector<16x32xbf16>
    %5 = arith.truncf %3 : vector<32x32xf32> to vector<32x32xbf16>
    %c0_5 = arith.constant 0 : index
    %c0_6 = arith.constant 0 : index
    %c0_7 = arith.constant 0 : index
    %6 = vector.load %arg3[%c0_5, %c0_6, %c0_7] : memref<2x32x128xbf16, #tpu.memory_space<vmem>>, vector<1x32x32xbf16>
    %7 = vector.shape_cast %6 : vector<1x32x32xbf16> to vector<32x32xbf16>
    %cst = arith.constant dense<0.000000e+00> : vector<16x32xf32>
    %8 = tpu.matmul %4, %7, %cst {dimension_numbers = #tpu.dot_dimension_numbers<[1], [0], [0], [1], [0, 0, 1, 1], [], []>} : vector<16x32xbf16>, vector<32x32xbf16>, vector<16x32xf32> -> vector<16x32xf32>
    %c0_8 = arith.constant 0 : index
    %c0_9 = arith.constant 0 : index
    %c0_10 = arith.constant 0 : index
    %9 = vector.load %arg4[%c0_8, %c0_9, %c0_10] : memref<2x1x128xf32, #tpu.memory_space<vmem>>, vector<1x1x32xf32>
    %10 = vector.shape_cast %9 : vector<1x1x32xf32> to vector<1x32xf32>
    %11 = vector.broadcast %10 : vector<1x32xf32> to vector<16x32xf32>
    %12 = arith.addf %8, %11 : vector<16x32xf32>
    %c0_11 = arith.constant 0 : index
    %c0_12 = arith.constant 0 : index
    %c32 = arith.constant 32 : index
    %13 = vector.load %arg3[%c0_11, %c0_12, %c32] : memref<2x32x128xbf16, #tpu.memory_space<vmem>>, vector<1x32x64xbf16>
    %14 = vector.shape_cast %13 : vector<1x32x64xbf16> to vector<32x64xbf16>
    %cst_13 = arith.constant dense<0.000000e+00> : vector<32x64xf32>
    %15 = tpu.matmul %5, %14, %cst_13 {dimension_numbers = #tpu.dot_dimension_numbers<[1], [0], [0], [1], [0, 0, 1, 1], [], []>} : vector<32x32xbf16>, vector<32x64xbf16>, vector<32x64xf32> -> vector<32x64xf32>
    %c0_14 = arith.constant 0 : index
    %c0_15 = arith.constant 0 : index
    %c32_16 = arith.constant 32 : index
    %16 = vector.load %arg4[%c0_14, %c0_15, %c32_16] : memref<2x1x128xf32, #tpu.memory_space<vmem>>, vector<1x1x64xf32>
    %17 = vector.shape_cast %16 : vector<1x1x64xf32> to vector<1x64xf32>
    %18 = vector.broadcast %17 : vector<1x64xf32> to vector<32x64xf32>
    %19 = arith.addf %15, %18 : vector<32x64xf32>
    %20 = arith.truncf %12 : vector<16x32xf32> to vector<16x32xbf16>
    %21 = vector.shape_cast %20 : vector<16x32xbf16> to vector<2x8x32xbf16>
    %22 = arith.truncf %19 : vector<32x64xf32> to vector<32x64xbf16>
    %23 = vector.shape_cast %22 : vector<32x64xbf16> to vector<2x16x64xbf16>
    %c0_17 = arith.constant 0 : index
    %c0_18 = arith.constant 0 : index
    %c96 = arith.constant 96 : index
    %24 = vector.load %arg4[%c0_17, %c0_18, %c96] : memref<2x1x128xf32, #tpu.memory_space<vmem>>, vector<1x1x32xf32>
    %25 = vector.shape_cast %24 : vector<1x1x32xf32> to vector<1x32xf32>
    %26 = vector.shape_cast %25 : vector<1x32xf32> to vector<1x32xf32>
    %27 = vector.broadcast %26 : vector<1x32xf32> to vector<16x32xf32>
    %28 = vector.extract_strided_slice %21 {offsets = [0, 0, 0], sizes = [2, 8, 8], strides = [1, 1, 1]} : vector<2x8x32xbf16> to vector<2x8x8xbf16>
    %29 = vector.extract_strided_slice %23 {offsets = [0, 0, 0], sizes = [2, 16, 8], strides = [1, 1, 1]} : vector<2x16x64xbf16> to vector<2x16x8xbf16>
    %30 = vector.extract_strided_slice %23 {offsets = [0, 0, 32], sizes = [2, 16, 8], strides = [1, 1, 1]} : vector<2x16x64xbf16> to vector<2x16x8xbf16>
    "tpu.trace_start"() <{level = 10 : i32, message = "bqd,bkd->bqk"}> : () -> ()
    %cst_19 = arith.constant dense<0.000000e+00> : vector<2x8x16xf32>
    %31 = tpu.matmul %28, %29, %cst_19 {dimension_numbers = #tpu.dot_dimension_numbers<[2], [2], [1], [1], [0, 0, 0, 1, 1, 1], [0], [0]>} : vector<2x8x8xbf16>, vector<2x16x8xbf16>, vector<2x8x16xf32> -> vector<2x8x16xf32>
    "tpu.trace_stop"() : () -> ()
    %cst_20 = arith.constant dense<0xFF800000> : vector<2x8xf32>
    %32 = vector.multi_reduction <maximumf>, %31, %cst_20 [2] : vector<2x8x16xf32> to vector<2x8xf32>
    %33 = vector.shape_cast %32 : vector<2x8xf32> to vector<2x8x1xf32>
    %34 = vector.broadcast %33 : vector<2x8x1xf32> to vector<2x8x16xf32>
    %35 = arith.subf %31, %34 : vector<2x8x16xf32>
    %36 = math.exp %35 : vector<2x8x16xf32>
    %cst_21 = arith.constant dense<0.000000e+00> : vector<2x8xf32>
    %37 = vector.multi_reduction <add>, %36, %cst_21 [2] : vector<2x8x16xf32> to vector<2x8xf32>
    %38 = vector.shape_cast %37 : vector<2x8xf32> to vector<2x8x1xf32>
    %39 = tpu.reciprocal %38 {approx = true} : vector<2x8x1xf32> -> vector<2x8x1xf32>
    %40 = vector.broadcast %39 : vector<2x8x1xf32> to vector<2x8x16xf32>
    %41 = arith.mulf %36, %40 : vector<2x8x16xf32>
    %42 = arith.truncf %41 : vector<2x8x16xf32> to vector<2x8x16xbf16>
    "tpu.trace_start"() <{level = 10 : i32, message = "bqk,bkd->bqd"}> : () -> ()
    %cst_22 = arith.constant dense<0.000000e+00> : vector<2x8x8xf32>
    %43 = tpu.matmul %42, %30, %cst_22 {dimension_numbers = #tpu.dot_dimension_numbers<[2], [1], [1], [2], [0, 0, 0, 1, 1, 2], [0], [0]>} : vector<2x8x16xbf16>, vector<2x16x8xbf16>, vector<2x8x8xf32> -> vector<2x8x8xf32>
    "tpu.trace_stop"() : () -> ()
    %44 = vector.shape_cast %43 : vector<2x8x8xf32> to vector<16x8xf32>
    %45 = arith.truncf %44 : vector<16x8xf32> to vector<16x8xbf16>
    %c0_23 = arith.constant 0 : index
    %c0_24 = arith.constant 0 : index
    %c96_25 = arith.constant 96 : index
    %46 = vector.load %arg3[%c0_23, %c0_24, %c96_25] : memref<2x32x128xbf16, #tpu.memory_space<vmem>>, vector<1x8x32xbf16>
    %47 = vector.shape_cast %46 : vector<1x8x32xbf16> to vector<8x32xbf16>
    %cst_26 = arith.constant dense<0.000000e+00> : vector<16x32xf32>
    %48 = tpu.matmul %45, %47, %cst_26 {dimension_numbers = #tpu.dot_dimension_numbers<[1], [0], [0], [1], [0, 0, 1, 1], [], []>} : vector<16x8xbf16>, vector<8x32xbf16>, vector<16x32xf32> -> vector<16x32xf32>
    %49 = arith.addf %27, %48 : vector<16x32xf32>
    %50 = vector.extract_strided_slice %21 {offsets = [0, 0, 8], sizes = [2, 8, 8], strides = [1, 1, 1]} : vector<2x8x32xbf16> to vector<2x8x8xbf16>
    %51 = vector.extract_strided_slice %23 {offsets = [0, 0, 8], sizes = [2, 16, 8], strides = [1, 1, 1]} : vector<2x16x64xbf16> to vector<2x16x8xbf16>
    %52 = vector.extract_strided_slice %23 {offsets = [0, 0, 40], sizes = [2, 16, 8], strides = [1, 1, 1]} : vector<2x16x64xbf16> to vector<2x16x8xbf16>
    "tpu.trace_start"() <{level = 10 : i32, message = "bqd,bkd->bqk"}> : () -> ()
    %cst_27 = arith.constant dense<0.000000e+00> : vector<2x8x16xf32>
    %53 = tpu.matmul %50, %51, %cst_27 {dimension_numbers = #tpu.dot_dimension_numbers<[2], [2], [1], [1], [0, 0, 0, 1, 1, 1], [0], [0]>} : vector<2x8x8xbf16>, vector<2x16x8xbf16>, vector<2x8x16xf32> -> vector<2x8x16xf32>
    "tpu.trace_stop"() : () -> ()
    %cst_28 = arith.constant dense<0xFF800000> : vector<2x8xf32>
    %54 = vector.multi_reduction <maximumf>, %53, %cst_28 [2] : vector<2x8x16xf32> to vector<2x8xf32>
    %55 = vector.shape_cast %54 : vector<2x8xf32> to vector<2x8x1xf32>
    %56 = vector.broadcast %55 : vector<2x8x1xf32> to vector<2x8x16xf32>
    %57 = arith.subf %53, %56 : vector<2x8x16xf32>
    %58 = math.exp %57 : vector<2x8x16xf32>
    %cst_29 = arith.constant dense<0.000000e+00> : vector<2x8xf32>
    %59 = vector.multi_reduction <add>, %58, %cst_29 [2] : vector<2x8x16xf32> to vector<2x8xf32>
    %60 = vector.shape_cast %59 : vector<2x8xf32> to vector<2x8x1xf32>
    %61 = tpu.reciprocal %60 {approx = true} : vector<2x8x1xf32> -> vector<2x8x1xf32>
    %62 = vector.broadcast %61 : vector<2x8x1xf32> to vector<2x8x16xf32>
    %63 = arith.mulf %58, %62 : vector<2x8x16xf32>
    %64 = arith.truncf %63 : vector<2x8x16xf32> to vector<2x8x16xbf16>
    "tpu.trace_start"() <{level = 10 : i32, message = "bqk,bkd->bqd"}> : () -> ()
    %cst_30 = arith.constant dense<0.000000e+00> : vector<2x8x8xf32>
    %65 = tpu.matmul %64, %52, %cst_30 {dimension_numbers = #tpu.dot_dimension_numbers<[2], [1], [1], [2], [0, 0, 0, 1, 1, 2], [0], [0]>} : vector<2x8x16xbf16>, vector<2x16x8xbf16>, vector<2x8x8xf32> -> vector<2x8x8xf32>
    "tpu.trace_stop"() : () -> ()
    %66 = vector.shape_cast %65 : vector<2x8x8xf32> to vector<16x8xf32>
    %67 = arith.truncf %66 : vector<16x8xf32> to vector<16x8xbf16>
    %c0_31 = arith.constant 0 : index
    %c8 = arith.constant 8 : index
    %c96_32 = arith.constant 96 : index
    %68 = vector.load %arg3[%c0_31, %c8, %c96_32] : memref<2x32x128xbf16, #tpu.memory_space<vmem>>, vector<1x8x32xbf16>
    %69 = vector.shape_cast %68 : vector<1x8x32xbf16> to vector<8x32xbf16>
    %cst_33 = arith.constant dense<0.000000e+00> : vector<16x32xf32>
    %70 = tpu.matmul %67, %69, %cst_33 {dimension_numbers = #tpu.dot_dimension_numbers<[1], [0], [0], [1], [0, 0, 1, 1], [], []>} : vector<16x8xbf16>, vector<8x32xbf16>, vector<16x32xf32> -> vector<16x32xf32>
    %71 = arith.addf %49, %70 : vector<16x32xf32>
    %72 = vector.extract_strided_slice %21 {offsets = [0, 0, 16], sizes = [2, 8, 8], strides = [1, 1, 1]} : vector<2x8x32xbf16> to vector<2x8x8xbf16>
    %73 = vector.extract_strided_slice %23 {offsets = [0, 0, 16], sizes = [2, 16, 8], strides = [1, 1, 1]} : vector<2x16x64xbf16> to vector<2x16x8xbf16>
    %74 = vector.extract_strided_slice %23 {offsets = [0, 0, 48], sizes = [2, 16, 8], strides = [1, 1, 1]} : vector<2x16x64xbf16> to vector<2x16x8xbf16>
    "tpu.trace_start"() <{level = 10 : i32, message = "bqd,bkd->bqk"}> : () -> ()
    %cst_34 = arith.constant dense<0.000000e+00> : vector<2x8x16xf32>
    %75 = tpu.matmul %72, %73, %cst_34 {dimension_numbers = #tpu.dot_dimension_numbers<[2], [2], [1], [1], [0, 0, 0, 1, 1, 1], [0], [0]>} : vector<2x8x8xbf16>, vector<2x16x8xbf16>, vector<2x8x16xf32> -> vector<2x8x16xf32>
    "tpu.trace_stop"() : () -> ()
    %cst_35 = arith.constant dense<0xFF800000> : vector<2x8xf32>
    %76 = vector.multi_reduction <maximumf>, %75, %cst_35 [2] : vector<2x8x16xf32> to vector<2x8xf32>
    %77 = vector.shape_cast %76 : vector<2x8xf32> to vector<2x8x1xf32>
    %78 = vector.broadcast %77 : vector<2x8x1xf32> to vector<2x8x16xf32>
    %79 = arith.subf %75, %78 : vector<2x8x16xf32>
    %80 = math.exp %79 : vector<2x8x16xf32>
    %cst_36 = arith.constant dense<0.000000e+00> : vector<2x8xf32>
    %81 = vector.multi_reduction <add>, %80, %cst_36 [2] : vector<2x8x16xf32> to vector<2x8xf32>
    %82 = vector.shape_cast %81 : vector<2x8xf32> to vector<2x8x1xf32>
    %83 = tpu.reciprocal %82 {approx = true} : vector<2x8x1xf32> -> vector<2x8x1xf32>
    %84 = vector.broadcast %83 : vector<2x8x1xf32> to vector<2x8x16xf32>
    %85 = arith.mulf %80, %84 : vector<2x8x16xf32>
    %86 = arith.truncf %85 : vector<2x8x16xf32> to vector<2x8x16xbf16>
    "tpu.trace_start"() <{level = 10 : i32, message = "bqk,bkd->bqd"}> : () -> ()
    %cst_37 = arith.constant dense<0.000000e+00> : vector<2x8x8xf32>
    %87 = tpu.matmul %86, %74, %cst_37 {dimension_numbers = #tpu.dot_dimension_numbers<[2], [1], [1], [2], [0, 0, 0, 1, 1, 2], [0], [0]>} : vector<2x8x16xbf16>, vector<2x16x8xbf16>, vector<2x8x8xf32> -> vector<2x8x8xf32>
    "tpu.trace_stop"() : () -> ()
    %88 = vector.shape_cast %87 : vector<2x8x8xf32> to vector<16x8xf32>
    %89 = arith.truncf %88 : vector<16x8xf32> to vector<16x8xbf16>
    %c0_38 = arith.constant 0 : index
    %c16 = arith.constant 16 : index
    %c96_39 = arith.constant 96 : index
    %90 = vector.load %arg3[%c0_38, %c16, %c96_39] : memref<2x32x128xbf16, #tpu.memory_space<vmem>>, vector<1x8x32xbf16>
    %91 = vector.shape_cast %90 : vector<1x8x32xbf16> to vector<8x32xbf16>
    %cst_40 = arith.constant dense<0.000000e+00> : vector<16x32xf32>
    %92 = tpu.matmul %89, %91, %cst_40 {dimension_numbers = #tpu.dot_dimension_numbers<[1], [0], [0], [1], [0, 0, 1, 1], [], []>} : vector<16x8xbf16>, vector<8x32xbf16>, vector<16x32xf32> -> vector<16x32xf32>
    %93 = arith.addf %71, %92 : vector<16x32xf32>
    %94 = vector.extract_strided_slice %21 {offsets = [0, 0, 24], sizes = [2, 8, 8], strides = [1, 1, 1]} : vector<2x8x32xbf16> to vector<2x8x8xbf16>
    %95 = vector.extract_strided_slice %23 {offsets = [0, 0, 24], sizes = [2, 16, 8], strides = [1, 1, 1]} : vector<2x16x64xbf16> to vector<2x16x8xbf16>
    %96 = vector.extract_strided_slice %23 {offsets = [0, 0, 56], sizes = [2, 16, 8], strides = [1, 1, 1]} : vector<2x16x64xbf16> to vector<2x16x8xbf16>
    "tpu.trace_start"() <{level = 10 : i32, message = "bqd,bkd->bqk"}> : () -> ()
    %cst_41 = arith.constant dense<0.000000e+00> : vector<2x8x16xf32>
    %97 = tpu.matmul %94, %95, %cst_41 {dimension_numbers = #tpu.dot_dimension_numbers<[2], [2], [1], [1], [0, 0, 0, 1, 1, 1], [0], [0]>} : vector<2x8x8xbf16>, vector<2x16x8xbf16>, vector<2x8x16xf32> -> vector<2x8x16xf32>
    "tpu.trace_stop"() : () -> ()
    %cst_42 = arith.constant dense<0xFF800000> : vector<2x8xf32>
    %98 = vector.multi_reduction <maximumf>, %97, %cst_42 [2] : vector<2x8x16xf32> to vector<2x8xf32>
    %99 = vector.shape_cast %98 : vector<2x8xf32> to vector<2x8x1xf32>
    %100 = vector.broadcast %99 : vector<2x8x1xf32> to vector<2x8x16xf32>
    %101 = arith.subf %97, %100 : vector<2x8x16xf32>
    %102 = math.exp %101 : vector<2x8x16xf32>
    %cst_43 = arith.constant dense<0.000000e+00> : vector<2x8xf32>
    %103 = vector.multi_reduction <add>, %102, %cst_43 [2] : vector<2x8x16xf32> to vector<2x8xf32>
    %104 = vector.shape_cast %103 : vector<2x8xf32> to vector<2x8x1xf32>
    %105 = tpu.reciprocal %104 {approx = true} : vector<2x8x1xf32> -> vector<2x8x1xf32>
    %106 = vector.broadcast %105 : vector<2x8x1xf32> to vector<2x8x16xf32>
    %107 = arith.mulf %102, %106 : vector<2x8x16xf32>
    %108 = arith.truncf %107 : vector<2x8x16xf32> to vector<2x8x16xbf16>
    "tpu.trace_start"() <{level = 10 : i32, message = "bqk,bkd->bqd"}> : () -> ()
    %cst_44 = arith.constant dense<0.000000e+00> : vector<2x8x8xf32>
    %109 = tpu.matmul %108, %96, %cst_44 {dimension_numbers = #tpu.dot_dimension_numbers<[2], [1], [1], [2], [0, 0, 0, 1, 1, 2], [0], [0]>} : vector<2x8x16xbf16>, vector<2x16x8xbf16>, vector<2x8x8xf32> -> vector<2x8x8xf32>
    "tpu.trace_stop"() : () -> ()
    %110 = vector.shape_cast %109 : vector<2x8x8xf32> to vector<16x8xf32>
    %111 = arith.truncf %110 : vector<16x8xf32> to vector<16x8xbf16>
    %c0_45 = arith.constant 0 : index
    %c24 = arith.constant 24 : index
    %c96_46 = arith.constant 96 : index
    %112 = vector.load %arg3[%c0_45, %c24, %c96_46] : memref<2x32x128xbf16, #tpu.memory_space<vmem>>, vector<1x8x32xbf16>
    %113 = vector.shape_cast %112 : vector<1x8x32xbf16> to vector<8x32xbf16>
    %cst_47 = arith.constant dense<0.000000e+00> : vector<16x32xf32>
    %114 = tpu.matmul %111, %113, %cst_47 {dimension_numbers = #tpu.dot_dimension_numbers<[1], [0], [0], [1], [0, 0, 1, 1], [], []>} : vector<16x8xbf16>, vector<8x32xbf16>, vector<16x32xf32> -> vector<16x32xf32>
    %115 = arith.addf %93, %114 : vector<16x32xf32>
    %116 = arith.addf %2, %115 : vector<16x32xf32>
    %117 = arith.truncf %116 : vector<16x32xf32> to vector<16x32xbf16>
    %c0_48 = arith.constant 0 : index
    %c0_49 = arith.constant 0 : index
    %c0_50 = arith.constant 0 : index
    %118 = vector.load %arg5[%c0_48, %c0_49, %c0_50] : memref<2x32x64xbf16, #tpu.memory_space<vmem>>, vector<1x32x64xbf16>
    %119 = vector.shape_cast %118 : vector<1x32x64xbf16> to vector<32x64xbf16>
    %cst_51 = arith.constant dense<0.000000e+00> : vector<16x64xf32>
    %120 = tpu.matmul %117, %119, %cst_51 {dimension_numbers = #tpu.dot_dimension_numbers<[1], [0], [0], [1], [0, 0, 1, 1], [], []>} : vector<16x32xbf16>, vector<32x64xbf16>, vector<16x64xf32> -> vector<16x64xf32>
    %c0_52 = arith.constant 0 : index
    %c0_53 = arith.constant 0 : index
    %c0_54 = arith.constant 0 : index
    %121 = vector.load %arg6[%c0_52, %c0_53, %c0_54] : memref<2x1x64xf32, #tpu.memory_space<vmem>>, vector<1x1x64xf32>
    %122 = vector.shape_cast %121 : vector<1x1x64xf32> to vector<1x64xf32>
    %123 = vector.broadcast %122 : vector<1x64xf32> to vector<16x64xf32>
    %124 = arith.addf %120, %123 : vector<16x64xf32>
    %cst_55 = arith.constant 0.000000e+00 : f32
    %125 = vector.broadcast %cst_55 : f32 to vector<16x64xf32>
    %126 = arith.maximumf %124, %125 : vector<16x64xf32>
    %127 = arith.truncf %126 : vector<16x64xf32> to vector<16x64xbf16>
    %c0_56 = arith.constant 0 : index
    %c0_57 = arith.constant 0 : index
    %c0_58 = arith.constant 0 : index
    %128 = vector.load %arg7[%c0_56, %c0_57, %c0_58] : memref<2x64x32xbf16, #tpu.memory_space<vmem>>, vector<1x64x32xbf16>
    %129 = vector.shape_cast %128 : vector<1x64x32xbf16> to vector<64x32xbf16>
    %cst_59 = arith.constant dense<0.000000e+00> : vector<16x32xf32>
    %130 = tpu.matmul %127, %129, %cst_59 {dimension_numbers = #tpu.dot_dimension_numbers<[1], [0], [0], [1], [0, 0, 1, 1], [], []>} : vector<16x64xbf16>, vector<64x32xbf16>, vector<16x32xf32> -> vector<16x32xf32>
    %c0_60 = arith.constant 0 : index
    %c0_61 = arith.constant 0 : index
    %c0_62 = arith.constant 0 : index
    %131 = vector.load %arg8[%c0_60, %c0_61, %c0_62] : memref<2x1x32xf32, #tpu.memory_space<vmem>>, vector<1x1x32xf32>
    %132 = vector.shape_cast %131 : vector<1x1x32xf32> to vector<1x32xf32>
    %133 = vector.broadcast %132 : vector<1x32xf32> to vector<16x32xf32>
    %134 = arith.addf %130, %133 : vector<16x32xf32>
    %135 = arith.addf %116, %134 : vector<16x32xf32>
    %c1 = arith.constant 1 : index
    %c0_63 = arith.constant 0 : index
    %c0_64 = arith.constant 0 : index
    %136 = vector.load %arg3[%c1, %c0_63, %c0_64] : memref<2x32x128xbf16, #tpu.memory_space<vmem>>, vector<1x32x32xbf16>
    %137 = vector.shape_cast %136 : vector<1x32x32xbf16> to vector<32x32xbf16>
    %cst_65 = arith.constant dense<0.000000e+00> : vector<32x32xf32>
    %138 = tpu.matmul %5, %137, %cst_65 {dimension_numbers = #tpu.dot_dimension_numbers<[1], [0], [0], [1], [0, 0, 1, 1], [], []>} : vector<32x32xbf16>, vector<32x32xbf16>, vector<32x32xf32> -> vector<32x32xf32>
    %c1_66 = arith.constant 1 : index
    %c0_67 = arith.constant 0 : index
    %c0_68 = arith.constant 0 : index
    %139 = vector.load %arg4[%c1_66, %c0_67, %c0_68] : memref<2x1x128xf32, #tpu.memory_space<vmem>>, vector<1x1x32xf32>
    %140 = vector.shape_cast %139 : vector<1x1x32xf32> to vector<1x32xf32>
    %141 = vector.broadcast %140 : vector<1x32xf32> to vector<32x32xf32>
    %142 = arith.addf %138, %141 : vector<32x32xf32>
    %c1_69 = arith.constant 1 : index
    %c0_70 = arith.constant 0 : index
    %c32_71 = arith.constant 32 : index
    %143 = vector.load %arg3[%c1_69, %c0_70, %c32_71] : memref<2x32x128xbf16, #tpu.memory_space<vmem>>, vector<1x32x64xbf16>
    %144 = vector.shape_cast %143 : vector<1x32x64xbf16> to vector<32x64xbf16>
    %cst_72 = arith.constant dense<0.000000e+00> : vector<16x64xf32>
    %145 = tpu.matmul %4, %144, %cst_72 {dimension_numbers = #tpu.dot_dimension_numbers<[1], [0], [0], [1], [0, 0, 1, 1], [], []>} : vector<16x32xbf16>, vector<32x64xbf16>, vector<16x64xf32> -> vector<16x64xf32>
    %c1_73 = arith.constant 1 : index
    %c0_74 = arith.constant 0 : index
    %c32_75 = arith.constant 32 : index
    %146 = vector.load %arg4[%c1_73, %c0_74, %c32_75] : memref<2x1x128xf32, #tpu.memory_space<vmem>>, vector<1x1x64xf32>
    %147 = vector.shape_cast %146 : vector<1x1x64xf32> to vector<1x64xf32>
    %148 = vector.broadcast %147 : vector<1x64xf32> to vector<16x64xf32>
    %149 = arith.addf %145, %148 : vector<16x64xf32>
    %150 = arith.truncf %142 : vector<32x32xf32> to vector<32x32xbf16>
    %151 = vector.shape_cast %150 : vector<32x32xbf16> to vector<2x16x32xbf16>
    %152 = arith.truncf %149 : vector<16x64xf32> to vector<16x64xbf16>
    %153 = vector.shape_cast %152 : vector<16x64xbf16> to vector<2x8x64xbf16>
    %c1_76 = arith.constant 1 : index
    %c0_77 = arith.constant 0 : index
    %c96_78 = arith.constant 96 : index
    %154 = vector.load %arg4[%c1_76, %c0_77, %c96_78] : memref<2x1x128xf32, #tpu.memory_space<vmem>>, vector<1x1x32xf32>
    %155 = vector.shape_cast %154 : vector<1x1x32xf32> to vector<1x32xf32>
    %156 = vector.shape_cast %155 : vector<1x32xf32> to vector<1x32xf32>
    %157 = vector.broadcast %156 : vector<1x32xf32> to vector<32x32xf32>
    %158 = vector.extract_strided_slice %151 {offsets = [0, 0, 0], sizes = [2, 16, 8], strides = [1, 1, 1]} : vector<2x16x32xbf16> to vector<2x16x8xbf16>
    %159 = vector.extract_strided_slice %153 {offsets = [0, 0, 0], sizes = [2, 8, 8], strides = [1, 1, 1]} : vector<2x8x64xbf16> to vector<2x8x8xbf16>
    %160 = vector.extract_strided_slice %153 {offsets = [0, 0, 32], sizes = [2, 8, 8], strides = [1, 1, 1]} : vector<2x8x64xbf16> to vector<2x8x8xbf16>
    "tpu.trace_start"() <{level = 10 : i32, message = "bqd,bkd->bqk"}> : () -> ()
    %cst_79 = arith.constant dense<0.000000e+00> : vector<2x16x8xf32>
    %161 = tpu.matmul %158, %159, %cst_79 {dimension_numbers = #tpu.dot_dimension_numbers<[2], [2], [1], [1], [0, 0, 0, 1, 1, 1], [0], [0]>} : vector<2x16x8xbf16>, vector<2x8x8xbf16>, vector<2x16x8xf32> -> vector<2x16x8xf32>
    "tpu.trace_stop"() : () -> ()
    %cst_80 = arith.constant dense<0xFF800000> : vector<2x16xf32>
    %162 = vector.multi_reduction <maximumf>, %161, %cst_80 [2] : vector<2x16x8xf32> to vector<2x16xf32>
    %163 = vector.shape_cast %162 : vector<2x16xf32> to vector<2x16x1xf32>
    %164 = vector.broadcast %163 : vector<2x16x1xf32> to vector<2x16x8xf32>
    %165 = arith.subf %161, %164 : vector<2x16x8xf32>
    %166 = math.exp %165 : vector<2x16x8xf32>
    %cst_81 = arith.constant dense<0.000000e+00> : vector<2x16xf32>
    %167 = vector.multi_reduction <add>, %166, %cst_81 [2] : vector<2x16x8xf32> to vector<2x16xf32>
    %168 = vector.shape_cast %167 : vector<2x16xf32> to vector<2x16x1xf32>
    %169 = tpu.reciprocal %168 {approx = true} : vector<2x16x1xf32> -> vector<2x16x1xf32>
    %170 = vector.broadcast %169 : vector<2x16x1xf32> to vector<2x16x8xf32>
    %171 = arith.mulf %166, %170 : vector<2x16x8xf32>
    %172 = arith.truncf %171 : vector<2x16x8xf32> to vector<2x16x8xbf16>
    "tpu.trace_start"() <{level = 10 : i32, message = "bqk,bkd->bqd"}> : () -> ()
    %cst_82 = arith.constant dense<0.000000e+00> : vector<2x16x8xf32>
    %173 = tpu.matmul %172, %160, %cst_82 {dimension_numbers = #tpu.dot_dimension_numbers<[2], [1], [1], [2], [0, 0, 0, 1, 1, 2], [0], [0]>} : vector<2x16x8xbf16>, vector<2x8x8xbf16>, vector<2x16x8xf32> -> vector<2x16x8xf32>
    "tpu.trace_stop"() : () -> ()
    %174 = vector.shape_cast %173 : vector<2x16x8xf32> to vector<32x8xf32>
    %175 = arith.truncf %174 : vector<32x8xf32> to vector<32x8xbf16>
    %c1_83 = arith.constant 1 : index
    %c0_84 = arith.constant 0 : index
    %c96_85 = arith.constant 96 : index
    %176 = vector.load %arg3[%c1_83, %c0_84, %c96_85] : memref<2x32x128xbf16, #tpu.memory_space<vmem>>, vector<1x8x32xbf16>
    %177 = vector.shape_cast %176 : vector<1x8x32xbf16> to vector<8x32xbf16>
    %cst_86 = arith.constant dense<0.000000e+00> : vector<32x32xf32>
    %178 = tpu.matmul %175, %177, %cst_86 {dimension_numbers = #tpu.dot_dimension_numbers<[1], [0], [0], [1], [0, 0, 1, 1], [], []>} : vector<32x8xbf16>, vector<8x32xbf16>, vector<32x32xf32> -> vector<32x32xf32>
    %179 = arith.addf %157, %178 : vector<32x32xf32>
    %180 = vector.extract_strided_slice %151 {offsets = [0, 0, 8], sizes = [2, 16, 8], strides = [1, 1, 1]} : vector<2x16x32xbf16> to vector<2x16x8xbf16>
    %181 = vector.extract_strided_slice %153 {offsets = [0, 0, 8], sizes = [2, 8, 8], strides = [1, 1, 1]} : vector<2x8x64xbf16> to vector<2x8x8xbf16>
    %182 = vector.extract_strided_slice %153 {offsets = [0, 0, 40], sizes = [2, 8, 8], strides = [1, 1, 1]} : vector<2x8x64xbf16> to vector<2x8x8xbf16>
    "tpu.trace_start"() <{level = 10 : i32, message = "bqd,bkd->bqk"}> : () -> ()
    %cst_87 = arith.constant dense<0.000000e+00> : vector<2x16x8xf32>
    %183 = tpu.matmul %180, %181, %cst_87 {dimension_numbers = #tpu.dot_dimension_numbers<[2], [2], [1], [1], [0, 0, 0, 1, 1, 1], [0], [0]>} : vector<2x16x8xbf16>, vector<2x8x8xbf16>, vector<2x16x8xf32> -> vector<2x16x8xf32>
    "tpu.trace_stop"() : () -> ()
    %cst_88 = arith.constant dense<0xFF800000> : vector<2x16xf32>
    %184 = vector.multi_reduction <maximumf>, %183, %cst_88 [2] : vector<2x16x8xf32> to vector<2x16xf32>
    %185 = vector.shape_cast %184 : vector<2x16xf32> to vector<2x16x1xf32>
    %186 = vector.broadcast %185 : vector<2x16x1xf32> to vector<2x16x8xf32>
    %187 = arith.subf %183, %186 : vector<2x16x8xf32>
    %188 = math.exp %187 : vector<2x16x8xf32>
    %cst_89 = arith.constant dense<0.000000e+00> : vector<2x16xf32>
    %189 = vector.multi_reduction <add>, %188, %cst_89 [2] : vector<2x16x8xf32> to vector<2x16xf32>
    %190 = vector.shape_cast %189 : vector<2x16xf32> to vector<2x16x1xf32>
    %191 = tpu.reciprocal %190 {approx = true} : vector<2x16x1xf32> -> vector<2x16x1xf32>
    %192 = vector.broadcast %191 : vector<2x16x1xf32> to vector<2x16x8xf32>
    %193 = arith.mulf %188, %192 : vector<2x16x8xf32>
    %194 = arith.truncf %193 : vector<2x16x8xf32> to vector<2x16x8xbf16>
    "tpu.trace_start"() <{level = 10 : i32, message = "bqk,bkd->bqd"}> : () -> ()
    %cst_90 = arith.constant dense<0.000000e+00> : vector<2x16x8xf32>
    %195 = tpu.matmul %194, %182, %cst_90 {dimension_numbers = #tpu.dot_dimension_numbers<[2], [1], [1], [2], [0, 0, 0, 1, 1, 2], [0], [0]>} : vector<2x16x8xbf16>, vector<2x8x8xbf16>, vector<2x16x8xf32> -> vector<2x16x8xf32>
    "tpu.trace_stop"() : () -> ()
    %196 = vector.shape_cast %195 : vector<2x16x8xf32> to vector<32x8xf32>
    %197 = arith.truncf %196 : vector<32x8xf32> to vector<32x8xbf16>
    %c1_91 = arith.constant 1 : index
    %c8_92 = arith.constant 8 : index
    %c96_93 = arith.constant 96 : index
    %198 = vector.load %arg3[%c1_91, %c8_92, %c96_93] : memref<2x32x128xbf16, #tpu.memory_space<vmem>>, vector<1x8x32xbf16>
    %199 = vector.shape_cast %198 : vector<1x8x32xbf16> to vector<8x32xbf16>
    %cst_94 = arith.constant dense<0.000000e+00> : vector<32x32xf32>
    %200 = tpu.matmul %197, %199, %cst_94 {dimension_numbers = #tpu.dot_dimension_numbers<[1], [0], [0], [1], [0, 0, 1, 1], [], []>} : vector<32x8xbf16>, vector<8x32xbf16>, vector<32x32xf32> -> vector<32x32xf32>
    %201 = arith.addf %179, %200 : vector<32x32xf32>
    %202 = vector.extract_strided_slice %151 {offsets = [0, 0, 16], sizes = [2, 16, 8], strides = [1, 1, 1]} : vector<2x16x32xbf16> to vector<2x16x8xbf16>
    %203 = vector.extract_strided_slice %153 {offsets = [0, 0, 16], sizes = [2, 8, 8], strides = [1, 1, 1]} : vector<2x8x64xbf16> to vector<2x8x8xbf16>
    %204 = vector.extract_strided_slice %153 {offsets = [0, 0, 48], sizes = [2, 8, 8], strides = [1, 1, 1]} : vector<2x8x64xbf16> to vector<2x8x8xbf16>
    "tpu.trace_start"() <{level = 10 : i32, message = "bqd,bkd->bqk"}> : () -> ()
    %cst_95 = arith.constant dense<0.000000e+00> : vector<2x16x8xf32>
    %205 = tpu.matmul %202, %203, %cst_95 {dimension_numbers = #tpu.dot_dimension_numbers<[2], [2], [1], [1], [0, 0, 0, 1, 1, 1], [0], [0]>} : vector<2x16x8xbf16>, vector<2x8x8xbf16>, vector<2x16x8xf32> -> vector<2x16x8xf32>
    "tpu.trace_stop"() : () -> ()
    %cst_96 = arith.constant dense<0xFF800000> : vector<2x16xf32>
    %206 = vector.multi_reduction <maximumf>, %205, %cst_96 [2] : vector<2x16x8xf32> to vector<2x16xf32>
    %207 = vector.shape_cast %206 : vector<2x16xf32> to vector<2x16x1xf32>
    %208 = vector.broadcast %207 : vector<2x16x1xf32> to vector<2x16x8xf32>
    %209 = arith.subf %205, %208 : vector<2x16x8xf32>
    %210 = math.exp %209 : vector<2x16x8xf32>
    %cst_97 = arith.constant dense<0.000000e+00> : vector<2x16xf32>
    %211 = vector.multi_reduction <add>, %210, %cst_97 [2] : vector<2x16x8xf32> to vector<2x16xf32>
    %212 = vector.shape_cast %211 : vector<2x16xf32> to vector<2x16x1xf32>
    %213 = tpu.reciprocal %212 {approx = true} : vector<2x16x1xf32> -> vector<2x16x1xf32>
    %214 = vector.broadcast %213 : vector<2x16x1xf32> to vector<2x16x8xf32>
    %215 = arith.mulf %210, %214 : vector<2x16x8xf32>
    %216 = arith.truncf %215 : vector<2x16x8xf32> to vector<2x16x8xbf16>
    "tpu.trace_start"() <{level = 10 : i32, message = "bqk,bkd->bqd"}> : () -> ()
    %cst_98 = arith.constant dense<0.000000e+00> : vector<2x16x8xf32>
    %217 = tpu.matmul %216, %204, %cst_98 {dimension_numbers = #tpu.dot_dimension_numbers<[2], [1], [1], [2], [0, 0, 0, 1, 1, 2], [0], [0]>} : vector<2x16x8xbf16>, vector<2x8x8xbf16>, vector<2x16x8xf32> -> vector<2x16x8xf32>
    "tpu.trace_stop"() : () -> ()
    %218 = vector.shape_cast %217 : vector<2x16x8xf32> to vector<32x8xf32>
    %219 = arith.truncf %218 : vector<32x8xf32> to vector<32x8xbf16>
    %c1_99 = arith.constant 1 : index
    %c16_100 = arith.constant 16 : index
    %c96_101 = arith.constant 96 : index
    %220 = vector.load %arg3[%c1_99, %c16_100, %c96_101] : memref<2x32x128xbf16, #tpu.memory_space<vmem>>, vector<1x8x32xbf16>
    %221 = vector.shape_cast %220 : vector<1x8x32xbf16> to vector<8x32xbf16>
    %cst_102 = arith.constant dense<0.000000e+00> : vector<32x32xf32>
    %222 = tpu.matmul %219, %221, %cst_102 {dimension_numbers = #tpu.dot_dimension_numbers<[1], [0], [0], [1], [0, 0, 1, 1], [], []>} : vector<32x8xbf16>, vector<8x32xbf16>, vector<32x32xf32> -> vector<32x32xf32>
    %223 = arith.addf %201, %222 : vector<32x32xf32>
    %224 = vector.extract_strided_slice %151 {offsets = [0, 0, 24], sizes = [2, 16, 8], strides = [1, 1, 1]} : vector<2x16x32xbf16> to vector<2x16x8xbf16>
    %225 = vector.extract_strided_slice %153 {offsets = [0, 0, 24], sizes = [2, 8, 8], strides = [1, 1, 1]} : vector<2x8x64xbf16> to vector<2x8x8xbf16>
    %226 = vector.extract_strided_slice %153 {offsets = [0, 0, 56], sizes = [2, 8, 8], strides = [1, 1, 1]} : vector<2x8x64xbf16> to vector<2x8x8xbf16>
    "tpu.trace_start"() <{level = 10 : i32, message = "bqd,bkd->bqk"}> : () -> ()
    %cst_103 = arith.constant dense<0.000000e+00> : vector<2x16x8xf32>
    %227 = tpu.matmul %224, %225, %cst_103 {dimension_numbers = #tpu.dot_dimension_numbers<[2], [2], [1], [1], [0, 0, 0, 1, 1, 1], [0], [0]>} : vector<2x16x8xbf16>, vector<2x8x8xbf16>, vector<2x16x8xf32> -> vector<2x16x8xf32>
    "tpu.trace_stop"() : () -> ()
    %cst_104 = arith.constant dense<0xFF800000> : vector<2x16xf32>
    %228 = vector.multi_reduction <maximumf>, %227, %cst_104 [2] : vector<2x16x8xf32> to vector<2x16xf32>
    %229 = vector.shape_cast %228 : vector<2x16xf32> to vector<2x16x1xf32>
    %230 = vector.broadcast %229 : vector<2x16x1xf32> to vector<2x16x8xf32>
    %231 = arith.subf %227, %230 : vector<2x16x8xf32>
    %232 = math.exp %231 : vector<2x16x8xf32>
    %cst_105 = arith.constant dense<0.000000e+00> : vector<2x16xf32>
    %233 = vector.multi_reduction <add>, %232, %cst_105 [2] : vector<2x16x8xf32> to vector<2x16xf32>
    %234 = vector.shape_cast %233 : vector<2x16xf32> to vector<2x16x1xf32>
    %235 = tpu.reciprocal %234 {approx = true} : vector<2x16x1xf32> -> vector<2x16x1xf32>
    %236 = vector.broadcast %235 : vector<2x16x1xf32> to vector<2x16x8xf32>
    %237 = arith.mulf %232, %236 : vector<2x16x8xf32>
    %238 = arith.truncf %237 : vector<2x16x8xf32> to vector<2x16x8xbf16>
    "tpu.trace_start"() <{level = 10 : i32, message = "bqk,bkd->bqd"}> : () -> ()
    %cst_106 = arith.constant dense<0.000000e+00> : vector<2x16x8xf32>
    %239 = tpu.matmul %238, %226, %cst_106 {dimension_numbers = #tpu.dot_dimension_numbers<[2], [1], [1], [2], [0, 0, 0, 1, 1, 2], [0], [0]>} : vector<2x16x8xbf16>, vector<2x8x8xbf16>, vector<2x16x8xf32> -> vector<2x16x8xf32>
    "tpu.trace_stop"() : () -> ()
    %240 = vector.shape_cast %239 : vector<2x16x8xf32> to vector<32x8xf32>
    %241 = arith.truncf %240 : vector<32x8xf32> to vector<32x8xbf16>
    %c1_107 = arith.constant 1 : index
    %c24_108 = arith.constant 24 : index
    %c96_109 = arith.constant 96 : index
    %242 = vector.load %arg3[%c1_107, %c24_108, %c96_109] : memref<2x32x128xbf16, #tpu.memory_space<vmem>>, vector<1x8x32xbf16>
    %243 = vector.shape_cast %242 : vector<1x8x32xbf16> to vector<8x32xbf16>
    %cst_110 = arith.constant dense<0.000000e+00> : vector<32x32xf32>
    %244 = tpu.matmul %241, %243, %cst_110 {dimension_numbers = #tpu.dot_dimension_numbers<[1], [0], [0], [1], [0, 0, 1, 1], [], []>} : vector<32x8xbf16>, vector<8x32xbf16>, vector<32x32xf32> -> vector<32x32xf32>
    %245 = arith.addf %223, %244 : vector<32x32xf32>
    %246 = arith.addf %3, %245 : vector<32x32xf32>
    %247 = arith.truncf %246 : vector<32x32xf32> to vector<32x32xbf16>
    %c1_111 = arith.constant 1 : index
    %c0_112 = arith.constant 0 : index
    %c0_113 = arith.constant 0 : index
    %248 = vector.load %arg5[%c1_111, %c0_112, %c0_113] : memref<2x32x64xbf16, #tpu.memory_space<vmem>>, vector<1x32x64xbf16>
    %249 = vector.shape_cast %248 : vector<1x32x64xbf16> to vector<32x64xbf16>
    %cst_114 = arith.constant dense<0.000000e+00> : vector<32x64xf32>
    %250 = tpu.matmul %247, %249, %cst_114 {dimension_numbers = #tpu.dot_dimension_numbers<[1], [0], [0], [1], [0, 0, 1, 1], [], []>} : vector<32x32xbf16>, vector<32x64xbf16>, vector<32x64xf32> -> vector<32x64xf32>
    %c1_115 = arith.constant 1 : index
    %c0_116 = arith.constant 0 : index
    %c0_117 = arith.constant 0 : index
    %251 = vector.load %arg6[%c1_115, %c0_116, %c0_117] : memref<2x1x64xf32, #tpu.memory_space<vmem>>, vector<1x1x64xf32>
    %252 = vector.shape_cast %251 : vector<1x1x64xf32> to vector<1x64xf32>
    %253 = vector.broadcast %252 : vector<1x64xf32> to vector<32x64xf32>
    %254 = arith.addf %250, %253 : vector<32x64xf32>
    %cst_118 = arith.constant 0.000000e+00 : f32
    %255 = vector.broadcast %cst_118 : f32 to vector<32x64xf32>
    %256 = arith.maximumf %254, %255 : vector<32x64xf32>
    %257 = arith.truncf %256 : vector<32x64xf32> to vector<32x64xbf16>
    %c1_119 = arith.constant 1 : index
    %c0_120 = arith.constant 0 : index
    %c0_121 = arith.constant 0 : index
    %258 = vector.load %arg7[%c1_119, %c0_120, %c0_121] : memref<2x64x32xbf16, #tpu.memory_space<vmem>>, vector<1x64x32xbf16>
    %259 = vector.shape_cast %258 : vector<1x64x32xbf16> to vector<64x32xbf16>
    %cst_122 = arith.constant dense<0.000000e+00> : vector<32x32xf32>
    %260 = tpu.matmul %257, %259, %cst_122 {dimension_numbers = #tpu.dot_dimension_numbers<[1], [0], [0], [1], [0, 0, 1, 1], [], []>} : vector<32x64xbf16>, vector<64x32xbf16>, vector<32x32xf32> -> vector<32x32xf32>
    %c1_123 = arith.constant 1 : index
    %c0_124 = arith.constant 0 : index
    %c0_125 = arith.constant 0 : index
    %261 = vector.load %arg8[%c1_123, %c0_124, %c0_125] : memref<2x1x32xf32, #tpu.memory_space<vmem>>, vector<1x1x32xf32>
    %262 = vector.shape_cast %261 : vector<1x1x32xf32> to vector<1x32xf32>
    %263 = vector.broadcast %262 : vector<1x32xf32> to vector<32x32xf32>
    %264 = arith.addf %260, %263 : vector<32x32xf32>
    %265 = arith.addf %246, %264 : vector<32x32xf32>
    %266 = arith.truncf %135 : vector<16x32xf32> to vector<16x32xbf16>
    %c0_126 = arith.constant 0 : index
    %c0_127 = arith.constant 0 : index
    %c0_128 = arith.constant 0 : index
    %267 = vector.load %arg9[%c0_126, %c0_127, %c0_128] : memref<2x32x32xbf16, #tpu.memory_space<vmem>>, vector<1x32x32xbf16>
    %268 = vector.shape_cast %267 : vector<1x32x32xbf16> to vector<32x32xbf16>
    %cst_129 = arith.constant dense<0.000000e+00> : vector<16x32xf32>
    %269 = tpu.matmul %266, %268, %cst_129 {dimension_numbers = #tpu.dot_dimension_numbers<[1], [0], [0], [1], [0, 0, 1, 1], [], []>} : vector<16x32xbf16>, vector<32x32xbf16>, vector<16x32xf32> -> vector<16x32xf32>
    %270 = arith.addf %2, %269 : vector<16x32xf32>
    %c0_130 = arith.constant 0 : index
    %c0_131 = arith.constant 0 : index
    %c0_132 = arith.constant 0 : index
    %271 = vector.load %arg10[%c0_130, %c0_131, %c0_132] : memref<2x1x32xf32, #tpu.memory_space<vmem>>, vector<1x1x32xf32>
    %272 = vector.shape_cast %271 : vector<1x1x32xf32> to vector<1x32xf32>
    %273 = vector.broadcast %272 : vector<1x32xf32> to vector<16x32xf32>
    %274 = arith.addf %270, %273 : vector<16x32xf32>
    %275 = arith.truncf %265 : vector<32x32xf32> to vector<32x32xbf16>
    %c1_133 = arith.constant 1 : index
    %c0_134 = arith.constant 0 : index
    %c0_135 = arith.constant 0 : index
    %276 = vector.load %arg9[%c1_133, %c0_134, %c0_135] : memref<2x32x32xbf16, #tpu.memory_space<vmem>>, vector<1x32x32xbf16>
    %277 = vector.shape_cast %276 : vector<1x32x32xbf16> to vector<32x32xbf16>
    %cst_136 = arith.constant dense<0.000000e+00> : vector<32x32xf32>
    %278 = tpu.matmul %275, %277, %cst_136 {dimension_numbers = #tpu.dot_dimension_numbers<[1], [0], [0], [1], [0, 0, 1, 1], [], []>} : vector<32x32xbf16>, vector<32x32xbf16>, vector<32x32xf32> -> vector<32x32xf32>
    %279 = arith.addf %3, %278 : vector<32x32xf32>
    %c1_137 = arith.constant 1 : index
    %c0_138 = arith.constant 0 : index
    %c0_139 = arith.constant 0 : index
    %280 = vector.load %arg10[%c1_137, %c0_138, %c0_139] : memref<2x1x32xf32, #tpu.memory_space<vmem>>, vector<1x1x32xf32>
    %281 = vector.shape_cast %280 : vector<1x1x32xf32> to vector<1x32xf32>
    %282 = vector.broadcast %281 : vector<1x32xf32> to vector<32x32xf32>
    %283 = arith.addf %279, %282 : vector<32x32xf32>
    %284 = vector.shape_cast %274 : vector<16x32xf32> to vector<2x8x32xf32>
    %c0_140 = arith.constant 0 : index
    %c0_141 = arith.constant 0 : index
    %c0_142 = arith.constant 0 : index
    %285 = vector.load %arg11[%c0_140, %c0_141, %c0_142] : memref<2x8x32xf32, #tpu.memory_space<vmem>>, vector<2x8x32xf32>
    tpu.vector_store %arg11[%c0_140, %c0_141, %c0_142], %284 {strides = array<i32>} : memref<2x8x32xf32, #tpu.memory_space<vmem>>, vector<2x8x32xf32>,
    %286 = vector.shape_cast %283 : vector<32x32xf32> to vector<2x16x32xf32>
    %c0_143 = arith.constant 0 : index
    %c0_144 = arith.constant 0 : index
    %c0_145 = arith.constant 0 : index
    %287 = vector.load %arg12[%c0_143, %c0_144, %c0_145] : memref<2x16x32xf32, #tpu.memory_space<vmem>>, vector<2x16x32xf32>
    tpu.vector_store %arg12[%c0_143, %c0_144, %c0_145], %286 {strides = array<i32>} : memref<2x16x32xf32, #tpu.memory_space<vmem>>, vector<2x16x32xf32>,
    return
  }
  func.func @transform_0(%arg0: i32) -> (i32, i32, i32) {
    %c0_i32 = arith.constant 0 : i32
    %c0_i32_0 = arith.constant 0 : i32
    %c0_i32_1 = arith.constant 0 : i32
    return %arg0, %c0_i32, %c0_i32_0 : i32, i32, i32
  }
  func.func @transform_1(%arg0: i32) -> (i32, i32, i32) {
    %c0_i32 = arith.constant 0 : i32
    %c0_i32_0 = arith.constant 0 : i32
    %c0_i32_1 = arith.constant 0 : i32
    return %arg0, %c0_i32, %c0_i32_0 : i32, i32, i32
  }
  func.func @transform_2(%arg0: i32) -> (i32, i32, i32) {
    %c0_i32 = arith.constant 0 : i32
    %c0_i32_0 = arith.constant 0 : i32
    %c0_i32_1 = arith.constant 0 : i32
    %c0_i32_2 = arith.constant 0 : i32
    return %c0_i32, %c0_i32_0, %c0_i32_1 : i32, i32, i32
  }
  func.func @transform_3(%arg0: i32) -> (i32, i32, i32) {
    %c0_i32 = arith.constant 0 : i32
    %c0_i32_0 = arith.constant 0 : i32
    %c0_i32_1 = arith.constant 0 : i32
    %c0_i32_2 = arith.constant 0 : i32
    return %c0_i32, %c0_i32_0, %c0_i32_1 : i32, i32, i32
  }
  func.func @transform_4(%arg0: i32) -> (i32, i32, i32) {
    %c0_i32 = arith.constant 0 : i32
    %c0_i32_0 = arith.constant 0 : i32
    %c0_i32_1 = arith.constant 0 : i32
    %c0_i32_2 = arith.constant 0 : i32
    return %c0_i32, %c0_i32_0, %c0_i32_1 : i32, i32, i32
  }
  func.func @transform_5(%arg0: i32) -> (i32, i32, i32) {
    %c0_i32 = arith.constant 0 : i32
    %c0_i32_0 = arith.constant 0 : i32
    %c0_i32_1 = arith.constant 0 : i32
    %c0_i32_2 = arith.constant 0 : i32
    return %c0_i32, %c0_i32_0, %c0_i32_1 : i32, i32, i32
  }
  func.func @transform_6(%arg0: i32) -> (i32, i32, i32) {
    %c0_i32 = arith.constant 0 : i32
    %c0_i32_0 = arith.constant 0 : i32
    %c0_i32_1 = arith.constant 0 : i32
    %c0_i32_2 = arith.constant 0 : i32
    return %c0_i32, %c0_i32_0, %c0_i32_1 : i32, i32, i32
  }
  func.func @transform_7(%arg0: i32) -> (i32, i32, i32) {
    %c0_i32 = arith.constant 0 : i32
    %c0_i32_0 = arith.constant 0 : i32
    %c0_i32_1 = arith.constant 0 : i32
    %c0_i32_2 = arith.constant 0 : i32
    return %c0_i32, %c0_i32_0, %c0_i32_1 : i32, i32, i32
  }
  func.func @transform_8(%arg0: i32) -> (i32, i32, i32) {
    %c0_i32 = arith.constant 0 : i32
    %c0_i32_0 = arith.constant 0 : i32
    %c0_i32_1 = arith.constant 0 : i32
    %c0_i32_2 = arith.constant 0 : i32
    return %c0_i32, %c0_i32_0, %c0_i32_1 : i32, i32, i32
  }
  func.func @transform_9(%arg0: i32) -> (i32, i32, i32) {
    %c0_i32 = arith.constant 0 : i32
    %c0_i32_0 = arith.constant 0 : i32
    %c0_i32_1 = arith.constant 0 : i32
    %c0_i32_2 = arith.constant 0 : i32
    return %c0_i32, %c0_i32_0, %c0_i32_1 : i32, i32, i32
  }
  func.func @transform_10(%arg0: i32) -> (i32, i32, i32) {
    %c0_i32 = arith.constant 0 : i32
    %c0_i32_0 = arith.constant 0 : i32
    %c0_i32_1 = arith.constant 0 : i32
    return %arg0, %c0_i32, %c0_i32_0 : i32, i32, i32
  }
  func.func @transform_11(%arg0: i32) -> (i32, i32, i32) {
    %c0_i32 = arith.constant 0 : i32
    %c0_i32_0 = arith.constant 0 : i32
    %c0_i32_1 = arith.constant 0 : i32
    return %arg0, %c0_i32, %c0_i32_0 : i32, i32, i32
  }
}

</mosaic_0001>

<llo_original>
// kernel: tpu_custom_call.1
$region0: #{tpu_custom_call.1}
  #allocation0 [shape = 'u32[]', space=smem, size = 0x4, offset = 0x4, fixed_abs, tag = 'smem constant byte address 0x4 - core index']
  #allocation1 [shape = 'u32[144,128]{1,0:T(1,128)}', space=vmem, size = 0x12000, scoped, tag = 'internal scratch']
  %s0 = inlined_call_operand.hbm [shape: f32[2,8,32], index: 0, kind: input, shape index: {}]
  %s1 = inlined_call_operand.vmem [shape: f32[2,16,32], index: 1, kind: input, shape index: {}]
  %s2 = inlined_call_operand.vmem [shape: bf16[2,32,128], index: 2, kind: input, shape index: {}]
  %s3 = inlined_call_operand.vmem [shape: f32[2,1,128], index: 3, kind: input, shape index: {}]
  %s4 = inlined_call_operand.vmem [shape: bf16[2,32,64], index: 4, kind: input, shape index: {}]
  %s5 = inlined_call_operand.vmem [shape: f32[2,1,64], index: 5, kind: input, shape index: {}]
  %s6 = inlined_call_operand.vmem [shape: bf16[2,64,32], index: 6, kind: input, shape index: {}]
  %s7 = inlined_call_operand.vmem [shape: f32[2,1,32], index: 7, kind: input, shape index: {}]
  %s8 = inlined_call_operand.hbm [shape: bf16[2,32,32], index: 8, kind: input, shape index: {}]
  %s9 = inlined_call_operand.vmem [shape: f32[2,1,32], index: 9, kind: input, shape index: {}]
  %s10 = inlined_call_operand.hbm [shape: f32[2,8,32], index: 10, kind: output, shape index: {0}]
  %s11 = inlined_call_operand.hbm [shape: f32[2,16,32], index: 11, kind: output, shape index: {1}]
  %12 = xla_tuple %s10, %s11
  %s13 = sld [smem:[#allocation0]]
  $region66: #{tpu_custom_call.1} parent=0
    _
  %s15 = ssub.s32 1, %s13
  %s16 = scalar_select 0, %s15, %s13
  $region1: #{tpu_custom_call.1} parent=0
    #allocation2 [shape = 'u8[8192]{0}', space=vmem, size = 0x2000, scoped, tag = 'input window, operand 0, single buffered']
    #allocation3 [shape = 's32[1]{0}', space=sflag, size = 0x4, scoped, tag = 'scoped memory for tpu_custom_call.1']
    #allocation4 [shape = 's32[1]{0}', space=sflag, size = 0x4, scoped, tag = 'scoped memory for tpu_custom_call.1']
    #allocation5 [shape = 'u8[16384]{0}', space=vmem, size = 0x4000, scoped, tag = 'input window, operand 8, single buffered']
    #allocation6 [shape = 's32[1]{0}', space=sflag, size = 0x4, scoped, tag = 'scoped memory for tpu_custom_call.1']
    #allocation7 [shape = 'u8[8192]{0}', space=vmem, size = 0x2000, scoped, tag = 'output window, operand 0, single buffered']
    #allocation8 [shape = 'u8[16384]{0}', space=vmem, size = 0x4000, scoped, tag = 'output window, operand 1, single buffered']
    #allocation9 [shape = 's32[1]{0}', space=sflag, size = 0x4, scoped, tag = 'scoped memory for tpu_custom_call.1']
    %17 = vsyncpa [#allocation3], 0
    %18 = vsyncpa [#allocation6], 0
    %19 = vsyncpa [#allocation4], 0
    %20 = vsyncpa [#allocation9], 0
    // Predicated region
    $region2: #{tpu_custom_call.1} parent=1 // pred_check
      _
    $region3: #{tpu_custom_call.1} parent=1 // pred_check_branch
      %22 = sbr.rel (0) target = $region5
    $region4: #{tpu_custom_call.1} parent=1 // pred_region
      %s24 = ssub.s32 256, 256
      %25 = vsyncadd [#allocation3], %s24
      %s26 = sshll.u32 [#allocation2], 4
      %s27 = int_to_ptr.vmem [resolvable:$true] %s26
      %32 = dma.hbm_to_vmem [thread:$0]  %s0, 256, %s27, [#allocation3], 128, 128, 8
    $region5: #{tpu_custom_call.1} parent=1 // pred_fallthru
      _
    // Predicated region
    $region6: #{tpu_custom_call.1} parent=1 // pred_check
      _
    $region7: #{tpu_custom_call.1} parent=1 // pred_check_branch
      %34 = sbr.rel (0) target = $region9
    $region8: #{tpu_custom_call.1} parent=1 // pred_region
      _
    $region9: #{tpu_custom_call.1} parent=1 // pred_fallthru
      _
    // Predicated region
    $region10: #{tpu_custom_call.1} parent=1 // pred_check
      _
    $region11: #{tpu_custom_call.1} parent=1 // pred_check_branch
      %36 = sbr.rel (0) target = $region13
    $region12: #{tpu_custom_call.1} parent=1 // pred_region
      _
    $region13: #{tpu_custom_call.1} parent=1 // pred_fallthru
      _
    // Predicated region
    $region14: #{tpu_custom_call.1} parent=1 // pred_check
      _
    $region15: #{tpu_custom_call.1} parent=1 // pred_check_branch
      %38 = sbr.rel (0) target = $region17
    $region16: #{tpu_custom_call.1} parent=1 // pred_region
      _
    $region17: #{tpu_custom_call.1} parent=1 // pred_fallthru
      _
    // Predicated region
    $region18: #{tpu_custom_call.1} parent=1 // pred_check
      _
    $region19: #{tpu_custom_call.1} parent=1 // pred_check_branch
      %40 = sbr.rel (0) target = $region21
    $region20: #{tpu_custom_call.1} parent=1 // pred_region
      _
    $region21: #{tpu_custom_call.1} parent=1 // pred_fallthru
      _
    // Predicated region
    $region22: #{tpu_custom_call.1} parent=1 // pred_check
      _
    $region23: #{tpu_custom_call.1} parent=1 // pred_check_branch
      %42 = sbr.rel (0) target = $region25
    $region24: #{tpu_custom_call.1} parent=1 // pred_region
      _
    $region25: #{tpu_custom_call.1} parent=1 // pred_fallthru
      _
    // Predicated region
    $region26: #{tpu_custom_call.1} parent=1 // pred_check
      _
    $region27: #{tpu_custom_call.1} parent=1 // pred_check_branch
      %44 = sbr.rel (0) target = $region29
    $region28: #{tpu_custom_call.1} parent=1 // pred_region
      _
    $region29: #{tpu_custom_call.1} parent=1 // pred_fallthru
      _
    // Predicated region
    $region30: #{tpu_custom_call.1} parent=1 // pred_check
      _
    $region31: #{tpu_custom_call.1} parent=1 // pred_check_branch
      %46 = sbr.rel (0) target = $region33
    $region32: #{tpu_custom_call.1} parent=1 // pred_region
      _
    $region33: #{tpu_custom_call.1} parent=1 // pred_fallthru
      _
    // Predicated region
    $region34: #{tpu_custom_call.1} parent=1 // pred_check
      _
    $region35: #{tpu_custom_call.1} parent=1 // pred_check_branch
      %48 = sbr.rel (0) target = $region37
    $region36: #{tpu_custom_call.1} parent=1 // pred_region
      %s50 = ssub.s32 512, 512
      %51 = vsyncadd [#allocation6], %s50
      %s52 = sshll.u32 [#allocation5], 4
      %s53 = int_to_ptr.vmem [resolvable:$true] %s52
      %58 = dma.hbm_to_vmem [thread:$0]  %s8, 512, %s53, [#allocation6], 64, 64, 4
    $region37: #{tpu_custom_call.1} parent=1 // pred_fallthru
      _
    // Predicated region
    $region38: #{tpu_custom_call.1} parent=1 // pred_check
      _
    $region39: #{tpu_custom_call.1} parent=1 // pred_check_branch
      %60 = sbr.rel (0) target = $region41
    $region40: #{tpu_custom_call.1} parent=1 // pred_region
      _
    $region41: #{tpu_custom_call.1} parent=1 // pred_fallthru
      _
    // Predicated region
    $region42: #{tpu_custom_call.1} parent=1 // pred_check
      _
    $region43: #{tpu_custom_call.1} parent=1 // pred_check_branch
      %62 = sbr.rel (0) target = $region45
    $region44: #{tpu_custom_call.1} parent=1 // pred_region
      %63 = dma.done [#allocation3], 256
    $region45: #{tpu_custom_call.1} parent=1 // pred_fallthru
      _
    // Predicated region
    $region46: #{tpu_custom_call.1} parent=1 // pred_check
      _
    $region47: #{tpu_custom_call.1} parent=1 // pred_check_branch
      %65 = sbr.rel (0) target = $region49
    $region48: #{tpu_custom_call.1} parent=1 // pred_region
      %66 = dma.done [#allocation6], 512
    $region49: #{tpu_custom_call.1} parent=1 // pred_fallthru
      _
    %v68 = vld [vmem:[#allocation2] sm:$0xff]
    %v69 = vld [vmem:[#allocation2 + $0x8] sm:$0xff]
    %v70 = vld [vmem:[%s1] sm:$0xff]
    %v71 = vld [vmem:[%s1 + $0x8] sm:$0xff]
    %v72 = vld [vmem:[%s1 + $0x10] sm:$0xff]
    %v73 = vld [vmem:[%s1 + $0x18] sm:$0xff]
    %v74 = vpack.c.bf16 %v69, %v68
    %v75 = vpack.c.bf16 %v71, %v70
    %v76 = vpack.c.bf16 %v73, %v72
    %v77 = vld [vmem:[%s2] sm:$0xf]
    %v78 = vld [vmem:[%s2 + $0x4] sm:$0xf]
    %v79 = vld [vmem:[%s2 + $0x8] sm:$0xf]
    %v80 = vld [vmem:[%s2 + $0xc] sm:$0xf]
    %v81 = vld [vmem:[%s3] sm:$0x1]
    %v83 = vlaneseq
    %v84 = vshrl.u32 %v83, 7
    %v85 = vsub.s32 0, %v84
    %v86 = vrot.slane %v81, %v85
    %v92 = vunpack.c.l.b16 %v77
    %v93 = vunpack.c.l.b16 %v78
    %v94 = vunpack.c.l.b16 %v79
    %v95 = vunpack.c.l.b16 %v80
    %v96 = vpack.c.b16 %v93, %v92
    %v97 = vpack.c.b16 %v95, %v94
    %vm100 = vcmask 261120
    %v102 = vsel %vm100, %v74, 0
    %104 = vmatprep.subr.bf16.mxu0 0
    %105 = vmatpush1.bf16.msra.mxu0 %v96
    %106 = vmatprep.subr.bf16.mxu0 0
    %107 = vmatpush1.bf16.msra.mxu0 %v97
    %108 = vmatprep.subr.bf16.mxu0 0
    %109 = vmatpush1.bf16.msra.mxu0 0
    %110 = vmatprep.subr.bf16.mxu0 0
    %111 = vmatpush1.bf16.msra.mxu0 0
    %112 = vmatprep.subr.bf16.mxu0 0
    %113 = vmatpush1.bf16.msra.mxu0 0
    %114 = vmatprep.subr.bf16.mxu0 0
    %115 = vmatpush1.bf16.msra.mxu0 0
    %116 = vmatprep.subr.bf16.mxu0 0
    %117 = vmatpush1.bf16.msra.mxu0 0
    %118 = vmatprep.subr.bf16.mxu0 0
    %119 = vmatpush1.bf16.msra.mxu0 0
    %120 = vmatprep.subr.bf16.mxu0 0
    %121 = vmatpush1.bf16.msra.mxu0 0
    %122 = vmatprep.subr.bf16.mxu0 0
    %123 = vmatpush1.bf16.msra.mxu0 0
    %124 = vmatprep.subr.bf16.mxu0 0
    %125 = vmatpush1.bf16.msra.mxu0 0
    %126 = vmatprep.subr.bf16.mxu0 0
    %127 = vmatpush1.bf16.msra.mxu0 0
    %128 = vmatprep.subr.bf16.mxu0 0
    %129 = vmatpush1.bf16.msra.mxu0 0
    %130 = vmatprep.subr.bf16.mxu0 0
    %131 = vmatpush1.bf16.msra.mxu0 0
    %132 = vmatprep.subr.bf16.mxu0 0
    %133 = vmatpush1.bf16.msra.mxu0 0
    %134 = vmatprep.subr.bf16.mxu0 0
    %135 = vmatpush1.bf16.msra.mxu0 0
    %136 = vmatprep.mubr.bf16.mxu0 0
    %137 = vmatmul.mubr.bf16.gmra.mrb[0].mxu0 %v102
    %v138 = vpop.f32.mrb[0].mxu0
    %v139 = vadd.f32 %v86, %v138
    %v140 = vpop.f32.mrb[0].mxu0
    %v141 = vpop.f32.mrb[0].mxu0
    %v142 = vadd.f32 %v86, %v141
    %v143 = vpop.f32.mrb[0].mxu0
    %144 = vdwg.mxu0
    %145 = vrot.lane.b32.xlu0 %v96, 96
    %v146 = vpop.permute.xlu0 %145
    %147 = vrot.lane.b32.xlu0 %v97, 96
    %v148 = vpop.permute.xlu0 %147
    %151 = vrot.lane.b32.xlu0 %v86, 96
    %v152 = vpop.permute.xlu0 %151
    %v155 = vsel %vm100, %v75, 0
    %v158 = vsel %vm100, %v76, 0
    %160 = vmatprep.subr.bf16.mxu0 0
    %161 = vmatpush1.bf16.msra.mxu0 %v146
    %162 = vmatprep.subr.bf16.mxu0 0
    %163 = vmatpush1.bf16.msra.mxu0 %v148
    %164 = vmatprep.subr.bf16.mxu0 0
    %165 = vmatpush1.bf16.msra.mxu0 0
    %166 = vmatprep.subr.bf16.mxu0 0
    %167 = vmatpush1.bf16.msra.mxu0 0
    %168 = vmatprep.subr.bf16.mxu0 0
    %169 = vmatpush1.bf16.msra.mxu0 0
    %170 = vmatprep.subr.bf16.mxu0 0
    %171 = vmatpush1.bf16.msra.mxu0 0
    %172 = vmatprep.subr.bf16.mxu0 0
    %173 = vmatpush1.bf16.msra.mxu0 0
    %174 = vmatprep.subr.bf16.mxu0 0
    %175 = vmatpush1.bf16.msra.mxu0 0
    %176 = vmatprep.subr.bf16.mxu0 0
    %177 = vmatpush1.bf16.msra.mxu0 0
    %178 = vmatprep.subr.bf16.mxu0 0
    %179 = vmatpush1.bf16.msra.mxu0 0
    %180 = vmatprep.subr.bf16.mxu0 0
    %181 = vmatpush1.bf16.msra.mxu0 0
    %182 = vmatprep.subr.bf16.mxu0 0
    %183 = vmatpush1.bf16.msra.mxu0 0
    %184 = vmatprep.subr.bf16.mxu0 0
    %185 = vmatpush1.bf16.msra.mxu0 0
    %186 = vmatprep.subr.bf16.mxu0 0
    %187 = vmatpush1.bf16.msra.mxu0 0
    %188 = vmatprep.subr.bf16.mxu0 0
    %189 = vmatpush1.bf16.msra.mxu0 0
    %190 = vmatprep.subr.bf16.mxu0 0
    %191 = vmatpush1.bf16.msra.mxu0 0
    %192 = vmatprep.mubr.bf16.mxu0 0
    %193 = vmatmul.mubr.bf16.gmra.mrb[0].mxu0 %v155
    %v194 = vpop.f32.mrb[0].mxu0
    %v195 = vadd.f32 %v152, %v194
    %v196 = vpop.f32.mrb[0].mxu0
    %v197 = vpop.f32.mrb[0].mxu0
    %v198 = vadd.f32 %v152, %v197
    %v199 = vpop.f32.mrb[0].mxu0
    %200 = vmatprep.mubr.bf16.mxu0 0
    %201 = vmatmul.mubr.bf16.gmra.mrb[0].mxu0 %v158
    %v202 = vpop.f32.mrb[0].mxu0
    %v203 = vadd.f32 %v152, %v202
    %v204 = vpop.f32.mrb[0].mxu0
    %v205 = vpop.f32.mrb[0].mxu0
    %v206 = vadd.f32 %v152, %v205
    %v207 = vpop.f32.mrb[0].mxu0
    %208 = vdwg.mxu0
    %v209 = vpack.c.bf16 %v142, %v139
    %v211 = vunpack.c.l.b16 %v209
    %v212 = vunpack.c.h.b16 %v209
    %v213 = vpack.c.b16 %v211, %v211
    %v214 = vpack.c.b16 %v212, %v212
    %v215 = vpack.c.bf16 %v198, %v195
    %v216 = vpack.c.bf16 %v206, %v203
    %vm217 = vcmask 64512
    %v219 = vsel %vm217, %v213, 0
    %v222 = vsel %vm217, %v215, 0
    %224 = vmatprep.subr.bf16.mxu0 0
    %225 = vmatpush1.bf16.xpose.msra.mxu0 %v222
    %226 = vmatprep.subr.bf16.mxu0 0
    %227 = vmatpush1.bf16.xpose.msra.mxu0 0
    %228 = vmatprep.subr.bf16.mxu0 0
    %229 = vmatpush1.bf16.xpose.msra.mxu0 0
    %230 = vmatprep.subr.bf16.mxu0 0
    %231 = vmatpush1.bf16.xpose.msra.mxu0 0
    %232 = vmatprep.subr.bf16.mxu0 0
    %233 = vmatpush1.bf16.xpose.msra.mxu0 0
    %234 = vmatprep.subr.bf16.mxu0 0
    %235 = vmatpush1.bf16.xpose.msra.mxu0 0
    %236 = vmatprep.subr.bf16.mxu0 0
    %237 = vmatpush1.bf16.xpose.msra.mxu0 0
    %238 = vmatprep.subr.bf16.mxu0 0
    %239 = vmatpush1.bf16.xpose.msra.mxu0 0
    %240 = vmatprep.subr.bf16.mxu0 0
    %241 = vmatpush1.bf16.xpose.msra.mxu0 0
    %242 = vmatprep.subr.bf16.mxu0 0
    %243 = vmatpush1.bf16.xpose.msra.mxu0 0
    %244 = vmatprep.subr.bf16.mxu0 0
    %245 = vmatpush1.bf16.xpose.msra.mxu0 0
    %246 = vmatprep.subr.bf16.mxu0 0
    %247 = vmatpush1.bf16.xpose.msra.mxu0 0
    %248 = vmatprep.subr.bf16.mxu0 0
    %249 = vmatpush1.bf16.xpose.msra.mxu0 0
    %250 = vmatprep.subr.bf16.mxu0 0
    %251 = vmatpush1.bf16.xpose.msra.mxu0 0
    %252 = vmatprep.subr.bf16.mxu0 0
    %253 = vmatpush1.bf16.xpose.msra.mxu0 0
    %254 = vmatprep.subr.bf16.mxu0 0
    %255 = vmatpush1.bf16.xpose.msra.mxu0 0
    %256 = vmatprep.mubr.bf16.mxu0 0
    %257 = vmatmul.mubr.bf16.gmra.mrb[0].mxu0 %v219
    %v258 = vpop.f32.mrb[0].mxu0
    %v259 = vadd.f32 0.0, %v258
    %v260 = vpop.f32.mrb[0].mxu0
    %v261 = vpop.f32.mrb[0].mxu0
    %v262 = vpop.f32.mrb[0].mxu0
    %263 = vdwg.mxu0
    %v265 = vsel %vm217, %v214, 0
    %v268 = vsel %vm217, %v216, 0
    %270 = vmatprep.subr.bf16.mxu0 0
    %271 = vmatpush1.bf16.xpose.msra.mxu0 %v268
    %272 = vmatprep.subr.bf16.mxu0 0
    %273 = vmatpush1.bf16.xpose.msra.mxu0 0
    %274 = vmatprep.subr.bf16.mxu0 0
    %275 = vmatpush1.bf16.xpose.msra.mxu0 0
    %276 = vmatprep.subr.bf16.mxu0 0
    %277 = vmatpush1.bf16.xpose.msra.mxu0 0
    %278 = vmatprep.subr.bf16.mxu0 0
    %279 = vmatpush1.bf16.xpose.msra.mxu0 0
    %280 = vmatprep.subr.bf16.mxu0 0
    %281 = vmatpush1.bf16.xpose.msra.mxu0 0
    %282 = vmatprep.subr.bf16.mxu0 0
    %283 = vmatpush1.bf16.xpose.msra.mxu0 0
    %284 = vmatprep.subr.bf16.mxu0 0
    %285 = vmatpush1.bf16.xpose.msra.mxu0 0
    %286 = vmatprep.subr.bf16.mxu0 0
    %287 = vmatpush1.bf16.xpose.msra.mxu0 0
    %288 = vmatprep.subr.bf16.mxu0 0
    %289 = vmatpush1.bf16.xpose.msra.mxu0 0
    %290 = vmatprep.subr.bf16.mxu0 0
    %291 = vmatpush1.bf16.xpose.msra.mxu0 0
    %292 = vmatprep.subr.bf16.mxu0 0
    %293 = vmatpush1.bf16.xpose.msra.mxu0 0
    %294 = vmatprep.subr.bf16.mxu0 0
    %295 = vmatpush1.bf16.xpose.msra.mxu0 0
    %296 = vmatprep.subr.bf16.mxu0 0
    %297 = vmatpush1.bf16.xpose.msra.mxu0 0
    %298 = vmatprep.subr.bf16.mxu0 0
    %299 = vmatpush1.bf16.xpose.msra.mxu0 0
    %300 = vmatprep.subr.bf16.mxu0 0
    %301 = vmatpush1.bf16.xpose.msra.mxu0 0
    %302 = vmatprep.mubr.bf16.mxu0 0
    %303 = vmatmul.mubr.bf16.gmra.mrb[0].mxu0 %v265
    %v304 = vpop.f32.mrb[0].mxu0
    %v305 = vadd.f32 0.0, %v304
    %v306 = vpop.f32.mrb[0].mxu0
    %v307 = vpop.f32.mrb[0].mxu0
    %v308 = vpop.f32.mrb[0].mxu0
    %309 = vdwg.mxu0
    %vm310 = vcmask 130048
    %v311 = vsel %vm310, %v259, -inf
    %312 = vmax.xlane.f32.xlu0 %v311
    %v313 = vpop.xlane.xlu0 %312
    %v314 = vsel %vm310, %v305, -inf
    %315 = vmax.xlane.f32.xlu0 %v314
    %v316 = vpop.xlane.xlu0 %315
    %v317 = vsub.f32 %v259, %v313
    %v318 = vsub.f32 %v305, %v316
    %v319 = vmul.f32 %v317, 1.442695
    %v320 = vpow.pop %v319
    %v321 = vmul.f32 %v318, 1.442695
    %v322 = vpow.pop %v321
    %v323 = vsel %vm310, %v320, 0.0
    %324 = vadd.xlane.f32.xlu0 %v323
    %v325 = vpop.xlane.xlu0 %324
    %v326 = vsel %vm310, %v322, 0.0
    %327 = vadd.xlane.f32.xlu0 %v326
    %v328 = vpop.xlane.xlu0 %327
    %v329 = vrcp.pop %v325
    %v330 = vrcp.pop %v328
    %v331 = vmul.f32 %v320, %v329
    %v332 = vmul.f32 %v322, %v330
    %v333 = vpack.c.bf16 %v331, %v331
    %v334 = vpack.c.bf16 %v332, %v332
    %336 = vrot.lane.b32.xlu0 %v215, 96
    %v337 = vpop.permute.xlu0 %336
    %v340 = vsel %vm310, %v333, 0
    %342 = vmatprep.subr.bf16.mxu0 0
    %343 = vmatpush1.bf16.msra.mxu0 %v337
    %344 = vmatprep.subr.bf16.mxu0 0
    %345 = vmatpush1.bf16.msra.mxu0 0
    %346 = vmatprep.subr.bf16.mxu0 0
    %347 = vmatpush1.bf16.msra.mxu0 0
    %348 = vmatprep.subr.bf16.mxu0 0
    %349 = vmatpush1.bf16.msra.mxu0 0
    %350 = vmatprep.subr.bf16.mxu0 0
    %351 = vmatpush1.bf16.msra.mxu0 0
    %352 = vmatprep.subr.bf16.mxu0 0
    %353 = vmatpush1.bf16.msra.mxu0 0
    %354 = vmatprep.subr.bf16.mxu0 0
    %355 = vmatpush1.bf16.msra.mxu0 0
    %356 = vmatprep.subr.bf16.mxu0 0
    %357 = vmatpush1.bf16.msra.mxu0 0
    %358 = vmatprep.subr.bf16.mxu0 0
    %359 = vmatpush1.bf16.msra.mxu0 0
    %360 = vmatprep.subr.bf16.mxu0 0
    %361 = vmatpush1.bf16.msra.mxu0 0
    %362 = vmatprep.subr.bf16.mxu0 0
    %363 = vmatpush1.bf16.msra.mxu0 0
    %364 = vmatprep.subr.bf16.mxu0 0
    %365 = vmatpush1.bf16.msra.mxu0 0
    %366 = vmatprep.subr.bf16.mxu0 0
    %367 = vmatpush1.bf16.msra.mxu0 0
    %368 = vmatprep.subr.bf16.mxu0 0
    %369 = vmatpush1.bf16.msra.mxu0 0
    %370 = vmatprep.subr.bf16.mxu0 0
    %371 = vmatpush1.bf16.msra.mxu0 0
    %372 = vmatprep.subr.bf16.mxu0 0
    %373 = vmatpush1.bf16.msra.mxu0 0
    %374 = vmatprep.mubr.bf16.mxu0 0
    %375 = vmatmul.mubr.bf16.gmra.mrb[0].mxu0 %v340
    %v376 = vpop.f32.mrb[0].mxu0
    %v377 = vadd.f32 0.0, %v376
    %v378 = vpop.f32.mrb[0].mxu0
    %v379 = vpop.f32.mrb[0].mxu0
    %v380 = vpop.f32.mrb[0].mxu0
    %381 = vdwg.mxu0
    %383 = vrot.lane.b32.xlu0 %v216, 96
    %v384 = vpop.permute.xlu0 %383
    %v387 = vsel %vm310, %v334, 0
    %389 = vmatprep.subr.bf16.mxu0 0
    %390 = vmatpush1.bf16.msra.mxu0 %v384
    %391 = vmatprep.subr.bf16.mxu0 0
    %392 = vmatpush1.bf16.msra.mxu0 0
    %393 = vmatprep.subr.bf16.mxu0 0
    %394 = vmatpush1.bf16.msra.mxu0 0
    %395 = vmatprep.subr.bf16.mxu0 0
    %396 = vmatpush1.bf16.msra.mxu0 0
    %397 = vmatprep.subr.bf16.mxu0 0
    %398 = vmatpush1.bf16.msra.mxu0 0
    %399 = vmatprep.subr.bf16.mxu0 0
    %400 = vmatpush1.bf16.msra.mxu0 0
    %401 = vmatprep.subr.bf16.mxu0 0
    %402 = vmatpush1.bf16.msra.mxu0 0
    %403 = vmatprep.subr.bf16.mxu0 0
    %404 = vmatpush1.bf16.msra.mxu0 0
    %405 = vmatprep.subr.bf16.mxu0 0
    %406 = vmatpush1.bf16.msra.mxu0 0
    %407 = vmatprep.subr.bf16.mxu0 0
    %408 = vmatpush1.bf16.msra.mxu0 0
    %409 = vmatprep.subr.bf16.mxu0 0
    %410 = vmatpush1.bf16.msra.mxu0 0
    %411 = vmatprep.subr.bf16.mxu0 0
    %412 = vmatpush1.bf16.msra.mxu0 0
    %413 = vmatprep.subr.bf16.mxu0 0
    %414 = vmatpush1.bf16.msra.mxu0 0
    %415 = vmatprep.subr.bf16.mxu0 0
    %416 = vmatpush1.bf16.msra.mxu0 0
    %417 = vmatprep.subr.bf16.mxu0 0
    %418 = vmatpush1.bf16.msra.mxu0 0
    %419 = vmatprep.subr.bf16.mxu0 0
    %420 = vmatpush1.bf16.msra.mxu0 0
    %421 = vmatprep.mubr.bf16.mxu0 0
    %422 = vmatmul.mubr.bf16.gmra.mrb[0].mxu0 %v387
    %v423 = vpop.f32.mrb[0].mxu0
    %v424 = vadd.f32 0.0, %v423
    %v425 = vpop.f32.mrb[0].mxu0
    %v426 = vpop.f32.mrb[0].mxu0
    %v427 = vpop.f32.mrb[0].mxu0
    %428 = vdwg.mxu0
    %v429 = vpack.c.bf16 %v424, %v377
    %v430 = vld [vmem:[%s2] sm:$0xf]
    %v432 = vunpack.c.l.b16 %v430
    %v433 = vpack.c.b16 %v432, %v432
    %434 = vrot.lane.b32.xlu0 %v433, 32
    %v435 = vpop.permute.xlu0 %434
    %v437 = vsel %vm217, %v429, 0
    %vm439 = vcmask 1043456
    %v441 = vsel %vm439, %v435, 0
    %443 = vmatprep.subr.bf16.mxu0 0
    %444 = vmatpush1.bf16.msra.mxu0 %v441
    %445 = vmatprep.subr.bf16.mxu0 0
    %446 = vmatpush1.bf16.msra.mxu0 0
    %447 = vmatprep.subr.bf16.mxu0 0
    %448 = vmatpush1.bf16.msra.mxu0 0
    %449 = vmatprep.subr.bf16.mxu0 0
    %450 = vmatpush1.bf16.msra.mxu0 0
    %451 = vmatprep.subr.bf16.mxu0 0
    %452 = vmatpush1.bf16.msra.mxu0 0
    %453 = vmatprep.subr.bf16.mxu0 0
    %454 = vmatpush1.bf16.msra.mxu0 0
    %455 = vmatprep.subr.bf16.mxu0 0
    %456 = vmatpush1.bf16.msra.mxu0 0
    %457 = vmatprep.subr.bf16.mxu0 0
    %458 = vmatpush1.bf16.msra.mxu0 0
    %459 = vmatprep.subr.bf16.mxu0 0
    %460 = vmatpush1.bf16.msra.mxu0 0
    %461 = vmatprep.subr.bf16.mxu0 0
    %462 = vmatpush1.bf16.msra.mxu0 0
    %463 = vmatprep.subr.bf16.mxu0 0
    %464 = vmatpush1.bf16.msra.mxu0 0
    %465 = vmatprep.subr.bf16.mxu0 0
    %466 = vmatpush1.bf16.msra.mxu0 0
    %467 = vmatprep.subr.bf16.mxu0 0
    %468 = vmatpush1.bf16.msra.mxu0 0
    %469 = vmatprep.subr.bf16.mxu0 0
    %470 = vmatpush1.bf16.msra.mxu0 0
    %471 = vmatprep.subr.bf16.mxu0 0
    %472 = vmatpush1.bf16.msra.mxu0 0
    %473 = vmatprep.subr.bf16.mxu0 0
    %474 = vmatpush1.bf16.msra.mxu0 0
    %475 = vmatprep.mubr.bf16.mxu0 0
    %476 = vmatmul.mubr.bf16.gmra.mrb[0].mxu0 %v437
    %v477 = vpop.f32.mrb[0].mxu0
    %v478 = vadd.f32 0.0, %v477
    %v479 = vpop.f32.mrb[0].mxu0
    %v480 = vpop.f32.mrb[0].mxu0
    %v481 = vadd.f32 0.0, %v480
    %v482 = vpop.f32.mrb[0].mxu0
    %483 = vdwg.mxu0
    %486 = vrot.lane.b32.xlu0 %v478, 96
    %v487 = vpop.permute.xlu0 %486
    %488 = vrot.lane.b32.xlu0 %v481, 96
    %v489 = vpop.permute.xlu0 %488
    %v492 = vadd.f32 %v86, %v487
    %v493 = vadd.f32 %v86, %v489
    %494 = vrot.lane.b32.xlu0 %v213, 120
    %v495 = vpop.permute.xlu0 %494
    %496 = vrot.lane.b32.xlu0 %v215, 120
    %v497 = vpop.permute.xlu0 %496
    %v499 = vsel %vm217, %v495, 0
    %v502 = vsel %vm217, %v497, 0
    %504 = vmatprep.subr.bf16.mxu0 0
    %505 = vmatpush1.bf16.xpose.msra.mxu0 %v502
    %506 = vmatprep.subr.bf16.mxu0 0
    %507 = vmatpush1.bf16.xpose.msra.mxu0 0
    %508 = vmatprep.subr.bf16.mxu0 0
    %509 = vmatpush1.bf16.xpose.msra.mxu0 0
    %510 = vmatprep.subr.bf16.mxu0 0
    %511 = vmatpush1.bf16.xpose.msra.mxu0 0
    %512 = vmatprep.subr.bf16.mxu0 0
    %513 = vmatpush1.bf16.xpose.msra.mxu0 0
    %514 = vmatprep.subr.bf16.mxu0 0
    %515 = vmatpush1.bf16.xpose.msra.mxu0 0
    %516 = vmatprep.subr.bf16.mxu0 0
    %517 = vmatpush1.bf16.xpose.msra.mxu0 0
    %518 = vmatprep.subr.bf16.mxu0 0
    %519 = vmatpush1.bf16.xpose.msra.mxu0 0
    %520 = vmatprep.subr.bf16.mxu0 0
    %521 = vmatpush1.bf16.xpose.msra.mxu0 0
    %522 = vmatprep.subr.bf16.mxu0 0
    %523 = vmatpush1.bf16.xpose.msra.mxu0 0
    %524 = vmatprep.subr.bf16.mxu0 0
    %525 = vmatpush1.bf16.xpose.msra.mxu0 0
    %526 = vmatprep.subr.bf16.mxu0 0
    %527 = vmatpush1.bf16.xpose.msra.mxu0 0
    %528 = vmatprep.subr.bf16.mxu0 0
    %529 = vmatpush1.bf16.xpose.msra.mxu0 0
    %530 = vmatprep.subr.bf16.mxu0 0
    %531 = vmatpush1.bf16.xpose.msra.mxu0 0
    %532 = vmatprep.subr.bf16.mxu0 0
    %533 = vmatpush1.bf16.xpose.msra.mxu0 0
    %534 = vmatprep.subr.bf16.mxu0 0
    %535 = vmatpush1.bf16.xpose.msra.mxu0 0
    %536 = vmatprep.mubr.bf16.mxu0 0
    %537 = vmatmul.mubr.bf16.gmra.mrb[0].mxu0 %v499
    %v538 = vpop.f32.mrb[0].mxu0
    %v539 = vadd.f32 0.0, %v538
    %v540 = vpop.f32.mrb[0].mxu0
    %v541 = vpop.f32.mrb[0].mxu0
    %v542 = vpop.f32.mrb[0].mxu0
    %543 = vdwg.mxu0
    %544 = vrot.lane.b32.xlu0 %v214, 120
    %v545 = vpop.permute.xlu0 %544
    %546 = vrot.lane.b32.xlu0 %v216, 120
    %v547 = vpop.permute.xlu0 %546
    %v549 = vsel %vm217, %v545, 0
    %v552 = vsel %vm217, %v547, 0
    %554 = vmatprep.subr.bf16.mxu0 0
    %555 = vmatpush1.bf16.xpose.msra.mxu0 %v552
    %556 = vmatprep.subr.bf16.mxu0 0
    %557 = vmatpush1.bf16.xpose.msra.mxu0 0
    %558 = vmatprep.subr.bf16.mxu0 0
    %559 = vmatpush1.bf16.xpose.msra.mxu0 0
    %560 = vmatprep.subr.bf16.mxu0 0
    %561 = vmatpush1.bf16.xpose.msra.mxu0 0
    %562 = vmatprep.subr.bf16.mxu0 0
    %563 = vmatpush1.bf16.xpose.msra.mxu0 0
    %564 = vmatprep.subr.bf16.mxu0 0
    %565 = vmatpush1.bf16.xpose.msra.mxu0 0
    %566 = vmatprep.subr.bf16.mxu0 0
    %567 = vmatpush1.bf16.xpose.msra.mxu0 0
    %568 = vmatprep.subr.bf16.mxu0 0
    %569 = vmatpush1.bf16.xpose.msra.mxu0 0
    %570 = vmatprep.subr.bf16.mxu0 0
    %571 = vmatpush1.bf16.xpose.msra.mxu0 0
    %572 = vmatprep.subr.bf16.mxu0 0
    %573 = vmatpush1.bf16.xpose.msra.mxu0 0
    %574 = vmatprep.subr.bf16.mxu0 0
    %575 = vmatpush1.bf16.xpose.msra.mxu0 0
    %576 = vmatprep.subr.bf16.mxu0 0
    %577 = vmatpush1.bf16.xpose.msra.mxu0 0
    %578 = vmatprep.subr.bf16.mxu0 0
    %579 = vmatpush1.bf16.xpose.msra.mxu0 0
    %580 = vmatprep.subr.bf16.mxu0 0
    %581 = vmatpush1.bf16.xpose.msra.mxu0 0
    %582 = vmatprep.subr.bf16.mxu0 0
    %583 = vmatpush1.bf16.xpose.msra.mxu0 0
    %584 = vmatprep.subr.bf16.mxu0 0
    %585 = vmatpush1.bf16.xpose.msra.mxu0 0
    %586 = vmatprep.mubr.bf16.mxu0 0
    %587 = vmatmul.mubr.bf16.gmra.mrb[0].mxu0 %v549
    %v588 = vpop.f32.mrb[0].mxu0
    %v589 = vadd.f32 0.0, %v588
    %v590 = vpop.f32.mrb[0].mxu0
    %v591 = vpop.f32.mrb[0].mxu0
    %v592 = vpop.f32.mrb[0].mxu0
    %593 = vdwg.mxu0
    %v594 = vsel %vm310, %v539, -inf
    %595 = vmax.xlane.f32.xlu0 %v594
    %v596 = vpop.xlane.xlu0 %595
    %v597 = vsel %vm310, %v589, -inf
    %598 = vmax.xlane.f32.xlu0 %v597
    %v599 = vpop.xlane.xlu0 %598
    %v600 = vsub.f32 %v539, %v596
    %v601 = vsub.f32 %v589, %v599
    %v602 = vmul.f32 %v600, 1.442695
    %v603 = vpow.pop %v602
    %v604 = vmul.f32 %v601, 1.442695
    %v605 = vpow.pop %v604
    %v606 = vsel %vm310, %v603, 0.0
    %607 = vadd.xlane.f32.xlu0 %v606
    %v608 = vpop.xlane.xlu0 %607
    %v609 = vsel %vm310, %v605, 0.0
    %610 = vadd.xlane.f32.xlu0 %v609
    %v611 = vpop.xlane.xlu0 %610
    %v612 = vrcp.pop %v608
    %v613 = vrcp.pop %v611
    %v614 = vmul.f32 %v603, %v612
    %v615 = vmul.f32 %v605, %v613
    %v616 = vpack.c.bf16 %v614, %v614
    %v617 = vpack.c.bf16 %v615, %v615
    %618 = vrot.lane.b32.xlu0 %v215, 88
    %v619 = vpop.permute.xlu0 %618
    %v622 = vsel %vm310, %v616, 0
    %624 = vmatprep.subr.bf16.mxu0 0
    %625 = vmatpush1.bf16.msra.mxu0 %v619
    %626 = vmatprep.subr.bf16.mxu0 0
    %627 = vmatpush1.bf16.msra.mxu0 0
    %628 = vmatprep.subr.bf16.mxu0 0
    %629 = vmatpush1.bf16.msra.mxu0 0
    %630 = vmatprep.subr.bf16.mxu0 0
    %631 = vmatpush1.bf16.msra.mxu0 0
    %632 = vmatprep.subr.bf16.mxu0 0
    %633 = vmatpush1.bf16.msra.mxu0 0
    %634 = vmatprep.subr.bf16.mxu0 0
    %635 = vmatpush1.bf16.msra.mxu0 0
    %636 = vmatprep.subr.bf16.mxu0 0
    %637 = vmatpush1.bf16.msra.mxu0 0
    %638 = vmatprep.subr.bf16.mxu0 0
    %639 = vmatpush1.bf16.msra.mxu0 0
    %640 = vmatprep.subr.bf16.mxu0 0
    %641 = vmatpush1.bf16.msra.mxu0 0
    %642 = vmatprep.subr.bf16.mxu0 0
    %643 = vmatpush1.bf16.msra.mxu0 0
    %644 = vmatprep.subr.bf16.mxu0 0
    %645 = vmatpush1.bf16.msra.mxu0 0
    %646 = vmatprep.subr.bf16.mxu0 0
    %647 = vmatpush1.bf16.msra.mxu0 0
    %648 = vmatprep.subr.bf16.mxu0 0
    %649 = vmatpush1.bf16.msra.mxu0 0
    %650 = vmatprep.subr.bf16.mxu0 0
    %651 = vmatpush1.bf16.msra.mxu0 0
    %652 = vmatprep.subr.bf16.mxu0 0
    %653 = vmatpush1.bf16.msra.mxu0 0
    %654 = vmatprep.subr.bf16.mxu0 0
    %655 = vmatpush1.bf16.msra.mxu0 0
    %656 = vmatprep.mubr.bf16.mxu0 0
    %657 = vmatmul.mubr.bf16.gmra.mrb[0].mxu0 %v622
    %v658 = vpop.f32.mrb[0].mxu0
    %v659 = vadd.f32 0.0, %v658
    %v660 = vpop.f32.mrb[0].mxu0
    %v661 = vpop.f32.mrb[0].mxu0
    %v662 = vpop.f32.mrb[0].mxu0
    %663 = vdwg.mxu0
    %664 = vrot.lane.b32.xlu0 %v216, 88
    %v665 = vpop.permute.xlu0 %664
    %v668 = vsel %vm310, %v617, 0
    %670 = vmatprep.subr.bf16.mxu0 0
    %671 = vmatpush1.bf16.msra.mxu0 %v665
    %672 = vmatprep.subr.bf16.mxu0 0
    %673 = vmatpush1.bf16.msra.mxu0 0
    %674 = vmatprep.subr.bf16.mxu0 0
    %675 = vmatpush1.bf16.msra.mxu0 0
    %676 = vmatprep.subr.bf16.mxu0 0
    %677 = vmatpush1.bf16.msra.mxu0 0
    %678 = vmatprep.subr.bf16.mxu0 0
    %679 = vmatpush1.bf16.msra.mxu0 0
    %680 = vmatprep.subr.bf16.mxu0 0
    %681 = vmatpush1.bf16.msra.mxu0 0
    %682 = vmatprep.subr.bf16.mxu0 0
    %683 = vmatpush1.bf16.msra.mxu0 0
    %684 = vmatprep.subr.bf16.mxu0 0
    %685 = vmatpush1.bf16.msra.mxu0 0
    %686 = vmatprep.subr.bf16.mxu0 0
    %687 = vmatpush1.bf16.msra.mxu0 0
    %688 = vmatprep.subr.bf16.mxu0 0
    %689 = vmatpush1.bf16.msra.mxu0 0
    %690 = vmatprep.subr.bf16.mxu0 0
    %691 = vmatpush1.bf16.msra.mxu0 0
    %692 = vmatprep.subr.bf16.mxu0 0
    %693 = vmatpush1.bf16.msra.mxu0 0
    %694 = vmatprep.subr.bf16.mxu0 0
    %695 = vmatpush1.bf16.msra.mxu0 0
    %696 = vmatprep.subr.bf16.mxu0 0
    %697 = vmatpush1.bf16.msra.mxu0 0
    %698 = vmatprep.subr.bf16.mxu0 0
    %699 = vmatpush1.bf16.msra.mxu0 0
    %700 = vmatprep.subr.bf16.mxu0 0
    %701 = vmatpush1.bf16.msra.mxu0 0
    %702 = vmatprep.mubr.bf16.mxu0 0
    %703 = vmatmul.mubr.bf16.gmra.mrb[0].mxu0 %v668
    %v704 = vpop.f32.mrb[0].mxu0
    %v705 = vadd.f32 0.0, %v704
    %v706 = vpop.f32.mrb[0].mxu0
    %v707 = vpop.f32.mrb[0].mxu0
    %v708 = vpop.f32.mrb[0].mxu0
    %709 = vdwg.mxu0
    %v710 = vpack.c.bf16 %v705, %v659
    %v711 = vld [vmem:[%s2 + $0x4] sm:$0xf]
    %v713 = vunpack.c.l.b16 %v711
    %v714 = vpack.c.b16 %v713, %v713
    %715 = vrot.lane.b32.xlu0 %v714, 32
    %v716 = vpop.permute.xlu0 %715
    %v718 = vsel %vm217, %v710, 0
    %v721 = vsel %vm439, %v716, 0
    %723 = vmatprep.subr.bf16.mxu0 0
    %724 = vmatpush1.bf16.msra.mxu0 %v721
    %725 = vmatprep.subr.bf16.mxu0 0
    %726 = vmatpush1.bf16.msra.mxu0 0
    %727 = vmatprep.subr.bf16.mxu0 0
    %728 = vmatpush1.bf16.msra.mxu0 0
    %729 = vmatprep.subr.bf16.mxu0 0
    %730 = vmatpush1.bf16.msra.mxu0 0
    %731 = vmatprep.subr.bf16.mxu0 0
    %732 = vmatpush1.bf16.msra.mxu0 0
    %733 = vmatprep.subr.bf16.mxu0 0
    %734 = vmatpush1.bf16.msra.mxu0 0
    %735 = vmatprep.subr.bf16.mxu0 0
    %736 = vmatpush1.bf16.msra.mxu0 0
    %737 = vmatprep.subr.bf16.mxu0 0
    %738 = vmatpush1.bf16.msra.mxu0 0
    %739 = vmatprep.subr.bf16.mxu0 0
    %740 = vmatpush1.bf16.msra.mxu0 0
    %741 = vmatprep.subr.bf16.mxu0 0
    %742 = vmatpush1.bf16.msra.mxu0 0
    %743 = vmatprep.subr.bf16.mxu0 0
    %744 = vmatpush1.bf16.msra.mxu0 0
    %745 = vmatprep.subr.bf16.mxu0 0
    %746 = vmatpush1.bf16.msra.mxu0 0
    %747 = vmatprep.subr.bf16.mxu0 0
    %748 = vmatpush1.bf16.msra.mxu0 0
    %749 = vmatprep.subr.bf16.mxu0 0
    %750 = vmatpush1.bf16.msra.mxu0 0
    %751 = vmatprep.subr.bf16.mxu0 0
    %752 = vmatpush1.bf16.msra.mxu0 0
    %753 = vmatprep.subr.bf16.mxu0 0
    %754 = vmatpush1.bf16.msra.mxu0 0
    %755 = vmatprep.mubr.bf16.mxu0 0
    %756 = vmatmul.mubr.bf16.gmra.mrb[0].mxu0 %v718
    %v757 = vpop.f32.mrb[0].mxu0
    %v758 = vadd.f32 0.0, %v757
    %v759 = vpop.f32.mrb[0].mxu0
    %v760 = vpop.f32.mrb[0].mxu0
    %v761 = vadd.f32 0.0, %v760
    %v762 = vpop.f32.mrb[0].mxu0
    %763 = vdwg.mxu0
    %766 = vrot.lane.b32.xlu0 %v758, 96
    %v767 = vpop.permute.xlu0 %766
    %768 = vrot.lane.b32.xlu0 %v761, 96
    %v769 = vpop.permute.xlu0 %768
    %v772 = vadd.f32 %v492, %v767
    %v773 = vadd.f32 %v493, %v769
    %774 = vrot.lane.b32.xlu0 %v213, 112
    %v775 = vpop.permute.xlu0 %774
    %776 = vrot.lane.b32.xlu0 %v215, 112
    %v777 = vpop.permute.xlu0 %776
    %v779 = vsel %vm217, %v775, 0
    %v782 = vsel %vm217, %v777, 0
    %784 = vmatprep.subr.bf16.mxu0 0
    %785 = vmatpush1.bf16.xpose.msra.mxu0 %v782
    %786 = vmatprep.subr.bf16.mxu0 0
    %787 = vmatpush1.bf16.xpose.msra.mxu0 0
    %788 = vmatprep.subr.bf16.mxu0 0
    %789 = vmatpush1.bf16.xpose.msra.mxu0 0
    %790 = vmatprep.subr.bf16.mxu0 0
    %791 = vmatpush1.bf16.xpose.msra.mxu0 0
    %792 = vmatprep.subr.bf16.mxu0 0
    %793 = vmatpush1.bf16.xpose.msra.mxu0 0
    %794 = vmatprep.subr.bf16.mxu0 0
    %795 = vmatpush1.bf16.xpose.msra.mxu0 0
    %796 = vmatprep.subr.bf16.mxu0 0
    %797 = vmatpush1.bf16.xpose.msra.mxu0 0
    %798 = vmatprep.subr.bf16.mxu0 0
    %799 = vmatpush1.bf16.xpose.msra.mxu0 0
    %800 = vmatprep.subr.bf16.mxu0 0
    %801 = vmatpush1.bf16.xpose.msra.mxu0 0
    %802 = vmatprep.subr.bf16.mxu0 0
    %803 = vmatpush1.bf16.xpose.msra.mxu0 0
    %804 = vmatprep.subr.bf16.mxu0 0
    %805 = vmatpush1.bf16.xpose.msra.mxu0 0
    %806 = vmatprep.subr.bf16.mxu0 0
    %807 = vmatpush1.bf16.xpose.msra.mxu0 0
    %808 = vmatprep.subr.bf16.mxu0 0
    %809 = vmatpush1.bf16.xpose.msra.mxu0 0
    %810 = vmatprep.subr.bf16.mxu0 0
    %811 = vmatpush1.bf16.xpose.msra.mxu0 0
    %812 = vmatprep.subr.bf16.mxu0 0
    %813 = vmatpush1.bf16.xpose.msra.mxu0 0
    %814 = vmatprep.subr.bf16.mxu0 0
    %815 = vmatpush1.bf16.xpose.msra.mxu0 0
    %816 = vmatprep.mubr.bf16.mxu0 0
    %817 = vmatmul.mubr.bf16.gmra.mrb[0].mxu0 %v779
    %v818 = vpop.f32.mrb[0].mxu0
    %v819 = vadd.f32 0.0, %v818
    %v820 = vpop.f32.mrb[0].mxu0
    %v821 = vpop.f32.mrb[0].mxu0
    %v822 = vpop.f32.mrb[0].mxu0
    %823 = vdwg.mxu0
    %824 = vrot.lane.b32.xlu0 %v214, 112
    %v825 = vpop.permute.xlu0 %824
    %826 = vrot.lane.b32.xlu0 %v216, 112
    %v827 = vpop.permute.xlu0 %826
    %v829 = vsel %vm217, %v825, 0
    %v832 = vsel %vm217, %v827, 0
    %834 = vmatprep.subr.bf16.mxu0 0
    %835 = vmatpush1.bf16.xpose.msra.mxu0 %v832
    %836 = vmatprep.subr.bf16.mxu0 0
    %837 = vmatpush1.bf16.xpose.msra.mxu0 0
    %838 = vmatprep.subr.bf16.mxu0 0
    %839 = vmatpush1.bf16.xpose.msra.mxu0 0
    %840 = vmatprep.subr.bf16.mxu0 0
    %841 = vmatpush1.bf16.xpose.msra.mxu0 0
    %842 = vmatprep.subr.bf16.mxu0 0
    %843 = vmatpush1.bf16.xpose.msra.mxu0 0
    %844 = vmatprep.subr.bf16.mxu0 0
    %845 = vmatpush1.bf16.xpose.msra.mxu0 0
    %846 = vmatprep.subr.bf16.mxu0 0
    %847 = vmatpush1.bf16.xpose.msra.mxu0 0
    %848 = vmatprep.subr.bf16.mxu0 0
    %849 = vmatpush1.bf16.xpose.msra.mxu0 0
    %850 = vmatprep.subr.bf16.mxu0 0
    %851 = vmatpush1.bf16.xpose.msra.mxu0 0
    %852 = vmatprep.subr.bf16.mxu0 0
    %853 = vmatpush1.bf16.xpose.msra.mxu0 0
    %854 = vmatprep.subr.bf16.mxu0 0
    %855 = vmatpush1.bf16.xpose.msra.mxu0 0
    %856 = vmatprep.subr.bf16.mxu0 0
    %857 = vmatpush1.bf16.xpose.msra.mxu0 0
    %858 = vmatprep.subr.bf16.mxu0 0
    %859 = vmatpush1.bf16.xpose.msra.mxu0 0
    %860 = vmatprep.subr.bf16.mxu0 0
    %861 = vmatpush1.bf16.xpose.msra.mxu0 0
    %862 = vmatprep.subr.bf16.mxu0 0
    %863 = vmatpush1.bf16.xpose.msra.mxu0 0
    %864 = vmatprep.subr.bf16.mxu0 0
    %865 = vmatpush1.bf16.xpose.msra.mxu0 0
    %866 = vmatprep.mubr.bf16.mxu0 0
    %867 = vmatmul.mubr.bf16.gmra.mrb[0].mxu0 %v829
    %v868 = vpop.f32.mrb[0].mxu0
    %v869 = vadd.f32 0.0, %v868
    %v870 = vpop.f32.mrb[0].mxu0
    %v871 = vpop.f32.mrb[0].mxu0
    %v872 = vpop.f32.mrb[0].mxu0
    %873 = vdwg.mxu0
    %v874 = vsel %vm310, %v819, -inf
    %875 = vmax.xlane.f32.xlu0 %v874
    %v876 = vpop.xlane.xlu0 %875
    %v877 = vsel %vm310, %v869, -inf
    %878 = vmax.xlane.f32.xlu0 %v877
    %v879 = vpop.xlane.xlu0 %878
    %v880 = vsub.f32 %v819, %v876
    %v881 = vsub.f32 %v869, %v879
    %v882 = vmul.f32 %v880, 1.442695
    %v883 = vpow.pop %v882
    %v884 = vmul.f32 %v881, 1.442695
    %v885 = vpow.pop %v884
    %v886 = vsel %vm310, %v883, 0.0
    %887 = vadd.xlane.f32.xlu0 %v886
    %v888 = vpop.xlane.xlu0 %887
    %v889 = vsel %vm310, %v885, 0.0
    %890 = vadd.xlane.f32.xlu0 %v889
    %v891 = vpop.xlane.xlu0 %890
    %v892 = vrcp.pop %v888
    %v893 = vrcp.pop %v891
    %v894 = vmul.f32 %v883, %v892
    %v895 = vmul.f32 %v885, %v893
    %v896 = vpack.c.bf16 %v894, %v894
    %v897 = vpack.c.bf16 %v895, %v895
    %898 = vrot.lane.b32.xlu0 %v215, 80
    %v899 = vpop.permute.xlu0 %898
    %v902 = vsel %vm310, %v896, 0
    %904 = vmatprep.subr.bf16.mxu0 0
    %905 = vmatpush1.bf16.msra.mxu0 %v899
    %906 = vmatprep.subr.bf16.mxu0 0
    %907 = vmatpush1.bf16.msra.mxu0 0
    %908 = vmatprep.subr.bf16.mxu0 0
    %909 = vmatpush1.bf16.msra.mxu0 0
    %910 = vmatprep.subr.bf16.mxu0 0
    %911 = vmatpush1.bf16.msra.mxu0 0
    %912 = vmatprep.subr.bf16.mxu0 0
    %913 = vmatpush1.bf16.msra.mxu0 0
    %914 = vmatprep.subr.bf16.mxu0 0
    %915 = vmatpush1.bf16.msra.mxu0 0
    %916 = vmatprep.subr.bf16.mxu0 0
    %917 = vmatpush1.bf16.msra.mxu0 0
    %918 = vmatprep.subr.bf16.mxu0 0
    %919 = vmatpush1.bf16.msra.mxu0 0
    %920 = vmatprep.subr.bf16.mxu0 0
    %921 = vmatpush1.bf16.msra.mxu0 0
    %922 = vmatprep.subr.bf16.mxu0 0
    %923 = vmatpush1.bf16.msra.mxu0 0
    %924 = vmatprep.subr.bf16.mxu0 0
    %925 = vmatpush1.bf16.msra.mxu0 0
    %926 = vmatprep.subr.bf16.mxu0 0
    %927 = vmatpush1.bf16.msra.mxu0 0
    %928 = vmatprep.subr.bf16.mxu0 0
    %929 = vmatpush1.bf16.msra.mxu0 0
    %930 = vmatprep.subr.bf16.mxu0 0
    %931 = vmatpush1.bf16.msra.mxu0 0
    %932 = vmatprep.subr.bf16.mxu0 0
    %933 = vmatpush1.bf16.msra.mxu0 0
    %934 = vmatprep.subr.bf16.mxu0 0
    %935 = vmatpush1.bf16.msra.mxu0 0
    %936 = vmatprep.mubr.bf16.mxu0 0
    %937 = vmatmul.mubr.bf16.gmra.mrb[0].mxu0 %v902
    %v938 = vpop.f32.mrb[0].mxu0
    %v939 = vadd.f32 0.0, %v938
    %v940 = vpop.f32.mrb[0].mxu0
    %v941 = vpop.f32.mrb[0].mxu0
    %v942 = vpop.f32.mrb[0].mxu0
    %943 = vdwg.mxu0
    %944 = vrot.lane.b32.xlu0 %v216, 80
    %v945 = vpop.permute.xlu0 %944
    %v948 = vsel %vm310, %v897, 0
    %950 = vmatprep.subr.bf16.mxu0 0
    %951 = vmatpush1.bf16.msra.mxu0 %v945
    %952 = vmatprep.subr.bf16.mxu0 0
    %953 = vmatpush1.bf16.msra.mxu0 0
    %954 = vmatprep.subr.bf16.mxu0 0
    %955 = vmatpush1.bf16.msra.mxu0 0
    %956 = vmatprep.subr.bf16.mxu0 0
    %957 = vmatpush1.bf16.msra.mxu0 0
    %958 = vmatprep.subr.bf16.mxu0 0
    %959 = vmatpush1.bf16.msra.mxu0 0
    %960 = vmatprep.subr.bf16.mxu0 0
    %961 = vmatpush1.bf16.msra.mxu0 0
    %962 = vmatprep.subr.bf16.mxu0 0
    %963 = vmatpush1.bf16.msra.mxu0 0
    %964 = vmatprep.subr.bf16.mxu0 0
    %965 = vmatpush1.bf16.msra.mxu0 0
    %966 = vmatprep.subr.bf16.mxu0 0
    %967 = vmatpush1.bf16.msra.mxu0 0
    %968 = vmatprep.subr.bf16.mxu0 0
    %969 = vmatpush1.bf16.msra.mxu0 0
    %970 = vmatprep.subr.bf16.mxu0 0
    %971 = vmatpush1.bf16.msra.mxu0 0
    %972 = vmatprep.subr.bf16.mxu0 0
    %973 = vmatpush1.bf16.msra.mxu0 0
    %974 = vmatprep.subr.bf16.mxu0 0
    %975 = vmatpush1.bf16.msra.mxu0 0
    %976 = vmatprep.subr.bf16.mxu0 0
    %977 = vmatpush1.bf16.msra.mxu0 0
    %978 = vmatprep.subr.bf16.mxu0 0
    %979 = vmatpush1.bf16.msra.mxu0 0
    %980 = vmatprep.subr.bf16.mxu0 0
    %981 = vmatpush1.bf16.msra.mxu0 0
    %982 = vmatprep.mubr.bf16.mxu0 0
    %983 = vmatmul.mubr.bf16.gmra.mrb[0].mxu0 %v948
    %v984 = vpop.f32.mrb[0].mxu0
    %v985 = vadd.f32 0.0, %v984
    %v986 = vpop.f32.mrb[0].mxu0
    %v987 = vpop.f32.mrb[0].mxu0
    %v988 = vpop.f32.mrb[0].mxu0
    %989 = vdwg.mxu0
    %v990 = vpack.c.bf16 %v985, %v939
    %v991 = vld [vmem:[%s2 + $0x8] sm:$0xf]
    %v993 = vunpack.c.l.b16 %v991
    %v994 = vpack.c.b16 %v993, %v993
    %995 = vrot.lane.b32.xlu0 %v994, 32
    %v996 = vpop.permute.xlu0 %995
    %v998 = vsel %vm217, %v990, 0
    %v1001 = vsel %vm439, %v996, 0
    %1003 = vmatprep.subr.bf16.mxu0 0
    %1004 = vmatpush1.bf16.msra.mxu0 %v1001
    %1005 = vmatprep.subr.bf16.mxu0 0
    %1006 = vmatpush1.bf16.msra.mxu0 0
    %1007 = vmatprep.subr.bf16.mxu0 0
    %1008 = vmatpush1.bf16.msra.mxu0 0
    %1009 = vmatprep.subr.bf16.mxu0 0
    %1010 = vmatpush1.bf16.msra.mxu0 0
    %1011 = vmatprep.subr.bf16.mxu0 0
    %1012 = vmatpush1.bf16.msra.mxu0 0
    %1013 = vmatprep.subr.bf16.mxu0 0
    %1014 = vmatpush1.bf16.msra.mxu0 0
    %1015 = vmatprep.subr.bf16.mxu0 0
    %1016 = vmatpush1.bf16.msra.mxu0 0
    %1017 = vmatprep.subr.bf16.mxu0 0
    %1018 = vmatpush1.bf16.msra.mxu0 0
    %1019 = vmatprep.subr.bf16.mxu0 0
    %1020 = vmatpush1.bf16.msra.mxu0 0
    %1021 = vmatprep.subr.bf16.mxu0 0
    %1022 = vmatpush1.bf16.msra.mxu0 0
    %1023 = vmatprep.subr.bf16.mxu0 0
    %1024 = vmatpush1.bf16.msra.mxu0 0
    %1025 = vmatprep.subr.bf16.mxu0 0
    %1026 = vmatpush1.bf16.msra.mxu0 0
    %1027 = vmatprep.subr.bf16.mxu0 0
    %1028 = vmatpush1.bf16.msra.mxu0 0
    %1029 = vmatprep.subr.bf16.mxu0 0
    %1030 = vmatpush1.bf16.msra.mxu0 0
    %1031 = vmatprep.subr.bf16.mxu0 0
    %1032 = vmatpush1.bf16.msra.mxu0 0
    %1033 = vmatprep.subr.bf16.mxu0 0
    %1034 = vmatpush1.bf16.msra.mxu0 0
    %1035 = vmatprep.mubr.bf16.mxu0 0
    %1036 = vmatmul.mubr.bf16.gmra.mrb[0].mxu0 %v998
    %v1037 = vpop.f32.mrb[0].mxu0
    %v1038 = vadd.f32 0.0, %v1037
    %v1039 = vpop.f32.mrb[0].mxu0
    %v1040 = vpop.f32.mrb[0].mxu0
    %v1041 = vadd.f32 0.0, %v1040
    %v1042 = vpop.f32.mrb[0].mxu0
    %1043 = vdwg.mxu0
    %1046 = vrot.lane.b32.xlu0 %v1038, 96
    %v1047 = vpop.permute.xlu0 %1046
    %1048 = vrot.lane.b32.xlu0 %v1041, 96
    %v1049 = vpop.permute.xlu0 %1048
    %v1052 = vadd.f32 %v772, %v1047
    %v1053 = vadd.f32 %v773, %v1049
    %1054 = vrot.lane.b32.xlu0 %v213, 104
    %v1055 = vpop.permute.xlu0 %1054
    %1056 = vrot.lane.b32.xlu0 %v215, 104
    %v1057 = vpop.permute.xlu0 %1056
    %v1059 = vsel %vm217, %v1055, 0
    %v1062 = vsel %vm217, %v1057, 0
    %1064 = vmatprep.subr.bf16.mxu0 0
    %1065 = vmatpush1.bf16.xpose.msra.mxu0 %v1062
    %1066 = vmatprep.subr.bf16.mxu0 0
    %1067 = vmatpush1.bf16.xpose.msra.mxu0 0
    %1068 = vmatprep.subr.bf16.mxu0 0
    %1069 = vmatpush1.bf16.xpose.msra.mxu0 0
    %1070 = vmatprep.subr.bf16.mxu0 0
    %1071 = vmatpush1.bf16.xpose.msra.mxu0 0
    %1072 = vmatprep.subr.bf16.mxu0 0
    %1073 = vmatpush1.bf16.xpose.msra.mxu0 0
    %1074 = vmatprep.subr.bf16.mxu0 0
    %1075 = vmatpush1.bf16.xpose.msra.mxu0 0
    %1076 = vmatprep.subr.bf16.mxu0 0
    %1077 = vmatpush1.bf16.xpose.msra.mxu0 0
    %1078 = vmatprep.subr.bf16.mxu0 0
    %1079 = vmatpush1.bf16.xpose.msra.mxu0 0
    %1080 = vmatprep.subr.bf16.mxu0 0
    %1081 = vmatpush1.bf16.xpose.msra.mxu0 0
    %1082 = vmatprep.subr.bf16.mxu0 0
    %1083 = vmatpush1.bf16.xpose.msra.mxu0 0
    %1084 = vmatprep.subr.bf16.mxu0 0
    %1085 = vmatpush1.bf16.xpose.msra.mxu0 0
    %1086 = vmatprep.subr.bf16.mxu0 0
    %1087 = vmatpush1.bf16.xpose.msra.mxu0 0
    %1088 = vmatprep.subr.bf16.mxu0 0
    %1089 = vmatpush1.bf16.xpose.msra.mxu0 0
    %1090 = vmatprep.subr.bf16.mxu0 0
    %1091 = vmatpush1.bf16.xpose.msra.mxu0 0
    %1092 = vmatprep.subr.bf16.mxu0 0
    %1093 = vmatpush1.bf16.xpose.msra.mxu0 0
    %1094 = vmatprep.subr.bf16.mxu0 0
    %1095 = vmatpush1.bf16.xpose.msra.mxu0 0
    %1096 = vmatprep.mubr.bf16.mxu0 0
    %1097 = vmatmul.mubr.bf16.gmra.mrb[0].mxu0 %v1059
    %v1098 = vpop.f32.mrb[0].mxu0
    %v1099 = vadd.f32 0.0, %v1098
    %v1100 = vpop.f32.mrb[0].mxu0
    %v1101 = vpop.f32.mrb[0].mxu0
    %v1102 = vpop.f32.mrb[0].mxu0
    %1103 = vdwg.mxu0
    %1104 = vrot.lane.b32.xlu0 %v214, 104
    %v1105 = vpop.permute.xlu0 %1104
    %1106 = vrot.lane.b32.xlu0 %v216, 104
    %v1107 = vpop.permute.xlu0 %1106
    %v1109 = vsel %vm217, %v1105, 0
    %v1112 = vsel %vm217, %v1107, 0
    %1114 = vmatprep.subr.bf16.mxu0 0
    %1115 = vmatpush1.bf16.xpose.msra.mxu0 %v1112
    %1116 = vmatprep.subr.bf16.mxu0 0
    %1117 = vmatpush1.bf16.xpose.msra.mxu0 0
    %1118 = vmatprep.subr.bf16.mxu0 0
    %1119 = vmatpush1.bf16.xpose.msra.mxu0 0
    %1120 = vmatprep.subr.bf16.mxu0 0
    %1121 = vmatpush1.bf16.xpose.msra.mxu0 0
    %1122 = vmatprep.subr.bf16.mxu0 0
    %1123 = vmatpush1.bf16.xpose.msra.mxu0 0
    %1124 = vmatprep.subr.bf16.mxu0 0
    %1125 = vmatpush1.bf16.xpose.msra.mxu0 0
    %1126 = vmatprep.subr.bf16.mxu0 0
    %1127 = vmatpush1.bf16.xpose.msra.mxu0 0
    %1128 = vmatprep.subr.bf16.mxu0 0
    %1129 = vmatpush1.bf16.xpose.msra.mxu0 0
    %1130 = vmatprep.subr.bf16.mxu0 0
    %1131 = vmatpush1.bf16.xpose.msra.mxu0 0
    %1132 = vmatprep.subr.bf16.mxu0 0
    %1133 = vmatpush1.bf16.xpose.msra.mxu0 0
    %1134 = vmatprep.subr.bf16.mxu0 0
    %1135 = vmatpush1.bf16.xpose.msra.mxu0 0
    %1136 = vmatprep.subr.bf16.mxu0 0
    %1137 = vmatpush1.bf16.xpose.msra.mxu0 0
    %1138 = vmatprep.subr.bf16.mxu0 0
    %1139 = vmatpush1.bf16.xpose.msra.mxu0 0
    %1140 = vmatprep.subr.bf16.mxu0 0
    %1141 = vmatpush1.bf16.xpose.msra.mxu0 0
    %1142 = vmatprep.subr.bf16.mxu0 0
    %1143 = vmatpush1.bf16.xpose.msra.mxu0 0
    %1144 = vmatprep.subr.bf16.mxu0 0
    %1145 = vmatpush1.bf16.xpose.msra.mxu0 0
    %1146 = vmatprep.mubr.bf16.mxu0 0
    %1147 = vmatmul.mubr.bf16.gmra.mrb[0].mxu0 %v1109
    %v1148 = vpop.f32.mrb[0].mxu0
    %v1149 = vadd.f32 0.0, %v1148
    %v1150 = vpop.f32.mrb[0].mxu0
    %v1151 = vpop.f32.mrb[0].mxu0
    %v1152 = vpop.f32.mrb[0].mxu0
    %1153 = vdwg.mxu0
    %v1154 = vsel %vm310, %v1099, -inf
    %1155 = vmax.xlane.f32.xlu0 %v1154
    %v1156 = vpop.xlane.xlu0 %1155
    %v1157 = vsel %vm310, %v1149, -inf
    %1158 = vmax.xlane.f32.xlu0 %v1157
    %v1159 = vpop.xlane.xlu0 %1158
    %v1160 = vsub.f32 %v1099, %v1156
    %v1161 = vsub.f32 %v1149, %v1159
    %v1162 = vmul.f32 %v1160, 1.442695
    %v1163 = vpow.pop %v1162
    %v1164 = vmul.f32 %v1161, 1.442695
    %v1165 = vpow.pop %v1164
    %v1166 = vsel %vm310, %v1163, 0.0
    %1167 = vadd.xlane.f32.xlu0 %v1166
    %v1168 = vpop.xlane.xlu0 %1167
    %v1169 = vsel %vm310, %v1165, 0.0
    %1170 = vadd.xlane.f32.xlu0 %v1169
    %v1171 = vpop.xlane.xlu0 %1170
    %v1172 = vrcp.pop %v1168
    %v1173 = vrcp.pop %v1171
    %v1174 = vmul.f32 %v1163, %v1172
    %v1175 = vmul.f32 %v1165, %v1173
    %v1176 = vpack.c.bf16 %v1174, %v1174
    %v1177 = vpack.c.bf16 %v1175, %v1175
    %1178 = vrot.lane.b32.xlu0 %v215, 72
    %v1179 = vpop.permute.xlu0 %1178
    %v1182 = vsel %vm310, %v1176, 0
    %1184 = vmatprep.subr.bf16.mxu0 0
    %1185 = vmatpush1.bf16.msra.mxu0 %v1179
    %1186 = vmatprep.subr.bf16.mxu0 0
    %1187 = vmatpush1.bf16.msra.mxu0 0
    %1188 = vmatprep.subr.bf16.mxu0 0
    %1189 = vmatpush1.bf16.msra.mxu0 0
    %1190 = vmatprep.subr.bf16.mxu0 0
    %1191 = vmatpush1.bf16.msra.mxu0 0
    %1192 = vmatprep.subr.bf16.mxu0 0
    %1193 = vmatpush1.bf16.msra.mxu0 0
    %1194 = vmatprep.subr.bf16.mxu0 0
    %1195 = vmatpush1.bf16.msra.mxu0 0
    %1196 = vmatprep.subr.bf16.mxu0 0
    %1197 = vmatpush1.bf16.msra.mxu0 0
    %1198 = vmatprep.subr.bf16.mxu0 0
    %1199 = vmatpush1.bf16.msra.mxu0 0
    %1200 = vmatprep.subr.bf16.mxu0 0
    %1201 = vmatpush1.bf16.msra.mxu0 0
    %1202 = vmatprep.subr.bf16.mxu0 0
    %1203 = vmatpush1.bf16.msra.mxu0 0
    %1204 = vmatprep.subr.bf16.mxu0 0
    %1205 = vmatpush1.bf16.msra.mxu0 0
    %1206 = vmatprep.subr.bf16.mxu0 0
    %1207 = vmatpush1.bf16.msra.mxu0 0
    %1208 = vmatprep.subr.bf16.mxu0 0
    %1209 = vmatpush1.bf16.msra.mxu0 0
    %1210 = vmatprep.subr.bf16.mxu0 0
    %1211 = vmatpush1.bf16.msra.mxu0 0
    %1212 = vmatprep.subr.bf16.mxu0 0
    %1213 = vmatpush1.bf16.msra.mxu0 0
    %1214 = vmatprep.subr.bf16.mxu0 0
    %1215 = vmatpush1.bf16.msra.mxu0 0
    %1216 = vmatprep.mubr.bf16.mxu0 0
    %1217 = vmatmul.mubr.bf16.gmra.mrb[0].mxu0 %v1182
    %v1218 = vpop.f32.mrb[0].mxu0
    %v1219 = vadd.f32 0.0, %v1218
    %v1220 = vpop.f32.mrb[0].mxu0
    %v1221 = vpop.f32.mrb[0].mxu0
    %v1222 = vpop.f32.mrb[0].mxu0
    %1223 = vdwg.mxu0
    %1224 = vrot.lane.b32.xlu0 %v216, 72
    %v1225 = vpop.permute.xlu0 %1224
    %v1228 = vsel %vm310, %v1177, 0
    %1230 = vmatprep.subr.bf16.mxu0 0
    %1231 = vmatpush1.bf16.msra.mxu0 %v1225
    %1232 = vmatprep.subr.bf16.mxu0 0
    %1233 = vmatpush1.bf16.msra.mxu0 0
    %1234 = vmatprep.subr.bf16.mxu0 0
    %1235 = vmatpush1.bf16.msra.mxu0 0
    %1236 = vmatprep.subr.bf16.mxu0 0
    %1237 = vmatpush1.bf16.msra.mxu0 0
    %1238 = vmatprep.subr.bf16.mxu0 0
    %1239 = vmatpush1.bf16.msra.mxu0 0
    %1240 = vmatprep.subr.bf16.mxu0 0
    %1241 = vmatpush1.bf16.msra.mxu0 0
    %1242 = vmatprep.subr.bf16.mxu0 0
    %1243 = vmatpush1.bf16.msra.mxu0 0
    %1244 = vmatprep.subr.bf16.mxu0 0
    %1245 = vmatpush1.bf16.msra.mxu0 0
    %1246 = vmatprep.subr.bf16.mxu0 0
    %1247 = vmatpush1.bf16.msra.mxu0 0
    %1248 = vmatprep.subr.bf16.mxu0 0
    %1249 = vmatpush1.bf16.msra.mxu0 0
    %1250 = vmatprep.subr.bf16.mxu0 0
    %1251 = vmatpush1.bf16.msra.mxu0 0
    %1252 = vmatprep.subr.bf16.mxu0 0
    %1253 = vmatpush1.bf16.msra.mxu0 0
    %1254 = vmatprep.subr.bf16.mxu0 0
    %1255 = vmatpush1.bf16.msra.mxu0 0
    %1256 = vmatprep.subr.bf16.mxu0 0
    %1257 = vmatpush1.bf16.msra.mxu0 0
    %1258 = vmatprep.subr.bf16.mxu0 0
    %1259 = vmatpush1.bf16.msra.mxu0 0
    %1260 = vmatprep.subr.bf16.mxu0 0
    %1261 = vmatpush1.bf16.msra.mxu0 0
    %1262 = vmatprep.mubr.bf16.mxu0 0
    %1263 = vmatmul.mubr.bf16.gmra.mrb[0].mxu0 %v1228
    %v1264 = vpop.f32.mrb[0].mxu0
    %v1265 = vadd.f32 0.0, %v1264
    %v1266 = vpop.f32.mrb[0].mxu0
    %v1267 = vpop.f32.mrb[0].mxu0
    %v1268 = vpop.f32.mrb[0].mxu0
    %1269 = vdwg.mxu0
    %v1270 = vpack.c.bf16 %v1265, %v1219
    %v1271 = vld [vmem:[%s2 + $0xc] sm:$0xf]
    %v1273 = vunpack.c.l.b16 %v1271
    %v1274 = vpack.c.b16 %v1273, %v1273
    %1275 = vrot.lane.b32.xlu0 %v1274, 32
    %v1276 = vpop.permute.xlu0 %1275
    %v1278 = vsel %vm217, %v1270, 0
    %v1281 = vsel %vm439, %v1276, 0
    %1283 = vmatprep.subr.bf16.mxu0 0
    %1284 = vmatpush1.bf16.msra.mxu0 %v1281
    %1285 = vmatprep.subr.bf16.mxu0 0
    %1286 = vmatpush1.bf16.msra.mxu0 0
    %1287 = vmatprep.subr.bf16.mxu0 0
    %1288 = vmatpush1.bf16.msra.mxu0 0
    %1289 = vmatprep.subr.bf16.mxu0 0
    %1290 = vmatpush1.bf16.msra.mxu0 0
    %1291 = vmatprep.subr.bf16.mxu0 0
    %1292 = vmatpush1.bf16.msra.mxu0 0
    %1293 = vmatprep.subr.bf16.mxu0 0
    %1294 = vmatpush1.bf16.msra.mxu0 0
    %1295 = vmatprep.subr.bf16.mxu0 0
    %1296 = vmatpush1.bf16.msra.mxu0 0
    %1297 = vmatprep.subr.bf16.mxu0 0
    %1298 = vmatpush1.bf16.msra.mxu0 0
    %1299 = vmatprep.subr.bf16.mxu0 0
    %1300 = vmatpush1.bf16.msra.mxu0 0
    %1301 = vmatprep.subr.bf16.mxu0 0
    %1302 = vmatpush1.bf16.msra.mxu0 0
    %1303 = vmatprep.subr.bf16.mxu0 0
    %1304 = vmatpush1.bf16.msra.mxu0 0
    %1305 = vmatprep.subr.bf16.mxu0 0
    %1306 = vmatpush1.bf16.msra.mxu0 0
    %1307 = vmatprep.subr.bf16.mxu0 0
    %1308 = vmatpush1.bf16.msra.mxu0 0
    %1309 = vmatprep.subr.bf16.mxu0 0
    %1310 = vmatpush1.bf16.msra.mxu0 0
    %1311 = vmatprep.subr.bf16.mxu0 0
    %1312 = vmatpush1.bf16.msra.mxu0 0
    %1313 = vmatprep.subr.bf16.mxu0 0
    %1314 = vmatpush1.bf16.msra.mxu0 0
    %1315 = vmatprep.mubr.bf16.mxu0 0
    %1316 = vmatmul.mubr.bf16.gmra.mrb[0].mxu0 %v1278
    %v1317 = vpop.f32.mrb[0].mxu0
    %v1318 = vadd.f32 0.0, %v1317
    %v1319 = vpop.f32.mrb[0].mxu0
    %v1320 = vpop.f32.mrb[0].mxu0
    %v1321 = vadd.f32 0.0, %v1320
    %v1322 = vpop.f32.mrb[0].mxu0
    %1323 = vdwg.mxu0
    %1326 = vrot.lane.b32.xlu0 %v1318, 96
    %v1327 = vpop.permute.xlu0 %1326
    %1328 = vrot.lane.b32.xlu0 %v1321, 96
    %v1329 = vpop.permute.xlu0 %1328
    %v1332 = vadd.f32 %v1052, %v1327
    %v1333 = vadd.f32 %v1053, %v1329
    %1336 = vrot.lane.b32.xlu0 %v1332, 32
    %v1337 = vpop.permute.xlu0 %1336
    %1338 = vrot.lane.b32.xlu0 %v1333, 32
    %v1339 = vpop.permute.xlu0 %1338
    %v1342 = vadd.f32 %v68, %v1337
    %v1343 = vadd.f32 %v69, %v1339
    %v1344 = vpack.c.bf16 %v1343, %v1342
    %v1345 = vld [vmem:[%s4] sm:$0xf]
    %v1346 = vld [vmem:[%s4 + $0x4] sm:$0xf]
    %v1347 = vld [vmem:[%s4 + $0x8] sm:$0xf]
    %v1348 = vld [vmem:[%s4 + $0xc] sm:$0xf]
    %v1349 = vld [vmem:[%s5] sm:$0x1]
    %v1351 = vlaneseq
    %v1352 = vshrl.u32 %v1351, 7
    %v1353 = vsub.s32 0, %v1352
    %v1354 = vrot.slane %v1349, %v1353
    %v1360 = vunpack.c.l.b16 %v1345
    %v1361 = vunpack.c.l.b16 %v1346
    %v1362 = vunpack.c.l.b16 %v1347
    %v1363 = vunpack.c.l.b16 %v1348
    %v1364 = vpack.c.b16 %v1361, %v1360
    %v1365 = vpack.c.b16 %v1363, %v1362
    %v1369 = vsel %vm100, %v1344, 0
    %1371 = vmatprep.subr.bf16.mxu0 0
    %1372 = vmatpush1.bf16.msra.mxu0 %v1364
    %1373 = vmatprep.subr.bf16.mxu0 0
    %1374 = vmatpush1.bf16.msra.mxu0 %v1365
    %1375 = vmatprep.subr.bf16.mxu0 0
    %1376 = vmatpush1.bf16.msra.mxu0 0
    %1377 = vmatprep.subr.bf16.mxu0 0
    %1378 = vmatpush1.bf16.msra.mxu0 0
    %1379 = vmatprep.subr.bf16.mxu0 0
    %1380 = vmatpush1.bf16.msra.mxu0 0
    %1381 = vmatprep.subr.bf16.mxu0 0
    %1382 = vmatpush1.bf16.msra.mxu0 0
    %1383 = vmatprep.subr.bf16.mxu0 0
    %1384 = vmatpush1.bf16.msra.mxu0 0
    %1385 = vmatprep.subr.bf16.mxu0 0
    %1386 = vmatpush1.bf16.msra.mxu0 0
    %1387 = vmatprep.subr.bf16.mxu0 0
    %1388 = vmatpush1.bf16.msra.mxu0 0
    %1389 = vmatprep.subr.bf16.mxu0 0
    %1390 = vmatpush1.bf16.msra.mxu0 0
    %1391 = vmatprep.subr.bf16.mxu0 0
    %1392 = vmatpush1.bf16.msra.mxu0 0
    %1393 = vmatprep.subr.bf16.mxu0 0
    %1394 = vmatpush1.bf16.msra.mxu0 0
    %1395 = vmatprep.subr.bf16.mxu0 0
    %1396 = vmatpush1.bf16.msra.mxu0 0
    %1397 = vmatprep.subr.bf16.mxu0 0
    %1398 = vmatpush1.bf16.msra.mxu0 0
    %1399 = vmatprep.subr.bf16.mxu0 0
    %1400 = vmatpush1.bf16.msra.mxu0 0
    %1401 = vmatprep.subr.bf16.mxu0 0
    %1402 = vmatpush1.bf16.msra.mxu0 0
    %1403 = vmatprep.mubr.bf16.mxu0 0
    %1404 = vmatmul.mubr.bf16.gmra.mrb[0].mxu0 %v1369
    %v1405 = vpop.f32.mrb[0].mxu0
    %v1406 = vadd.f32 %v1354, %v1405
    %v1407 = vpop.f32.mrb[0].mxu0
    %v1408 = vpop.f32.mrb[0].mxu0
    %v1409 = vadd.f32 %v1354, %v1408
    %v1410 = vpop.f32.mrb[0].mxu0
    %1411 = vdwg.mxu0
    %v1412 = vmax.f32 %v1406, 0.0
    %v1413 = vmax.f32 %v1409, 0.0
    %v1414 = vpack.c.bf16 %v1413, %v1412
    %v1415 = vld [vmem:[%s6] sm:$0xf]
    %v1416 = vld [vmem:[%s6 + $0x4] sm:$0xf]
    %v1417 = vld [vmem:[%s6 + $0x8] sm:$0xf]
    %v1418 = vld [vmem:[%s6 + $0xc] sm:$0xf]
    %v1419 = vld [vmem:[%s6 + $0x10] sm:$0xf]
    %v1420 = vld [vmem:[%s6 + $0x14] sm:$0xf]
    %v1421 = vld [vmem:[%s6 + $0x18] sm:$0xf]
    %v1422 = vld [vmem:[%s6 + $0x1c] sm:$0xf]
    %v1423 = vld [vmem:[%s7] sm:$0x1]
    %v1425 = vlaneseq
    %v1426 = vshrl.u32 %v1425, 7
    %v1427 = vsub.s32 0, %v1426
    %v1428 = vrot.slane %v1423, %v1427
    %v1438 = vunpack.c.l.b16 %v1415
    %v1439 = vunpack.c.l.b16 %v1416
    %v1440 = vunpack.c.l.b16 %v1417
    %v1441 = vunpack.c.l.b16 %v1418
    %v1442 = vunpack.c.l.b16 %v1419
    %v1443 = vunpack.c.l.b16 %v1420
    %v1444 = vunpack.c.l.b16 %v1421
    %v1445 = vunpack.c.l.b16 %v1422
    %v1446 = vpack.c.b16 %v1439, %v1438
    %v1447 = vpack.c.b16 %v1441, %v1440
    %v1448 = vpack.c.b16 %v1443, %v1442
    %v1449 = vpack.c.b16 %v1445, %v1444
    %vm1454 = vcmask 523264
    %v1456 = vsel %vm1454, %v1414, 0
    %1458 = vmatprep.subr.bf16.mxu0 0
    %1459 = vmatpush1.bf16.msra.mxu0 %v1446
    %1460 = vmatprep.subr.bf16.mxu0 0
    %1461 = vmatpush1.bf16.msra.mxu0 %v1447
    %1462 = vmatprep.subr.bf16.mxu0 0
    %1463 = vmatpush1.bf16.msra.mxu0 %v1448
    %1464 = vmatprep.subr.bf16.mxu0 0
    %1465 = vmatpush1.bf16.msra.mxu0 %v1449
    %1466 = vmatprep.subr.bf16.mxu0 0
    %1467 = vmatpush1.bf16.msra.mxu0 0
    %1468 = vmatprep.subr.bf16.mxu0 0
    %1469 = vmatpush1.bf16.msra.mxu0 0
    %1470 = vmatprep.subr.bf16.mxu0 0
    %1471 = vmatpush1.bf16.msra.mxu0 0
    %1472 = vmatprep.subr.bf16.mxu0 0
    %1473 = vmatpush1.bf16.msra.mxu0 0
    %1474 = vmatprep.subr.bf16.mxu0 0
    %1475 = vmatpush1.bf16.msra.mxu0 0
    %1476 = vmatprep.subr.bf16.mxu0 0
    %1477 = vmatpush1.bf16.msra.mxu0 0
    %1478 = vmatprep.subr.bf16.mxu0 0
    %1479 = vmatpush1.bf16.msra.mxu0 0
    %1480 = vmatprep.subr.bf16.mxu0 0
    %1481 = vmatpush1.bf16.msra.mxu0 0
    %1482 = vmatprep.subr.bf16.mxu0 0
    %1483 = vmatpush1.bf16.msra.mxu0 0
    %1484 = vmatprep.subr.bf16.mxu0 0
    %1485 = vmatpush1.bf16.msra.mxu0 0
    %1486 = vmatprep.subr.bf16.mxu0 0
    %1487 = vmatpush1.bf16.msra.mxu0 0
    %1488 = vmatprep.subr.bf16.mxu0 0
    %1489 = vmatpush1.bf16.msra.mxu0 0
    %1490 = vmatprep.mubr.bf16.mxu0 0
    %1491 = vmatmul.mubr.bf16.gmra.mrb[0].mxu0 %v1456
    %v1492 = vpop.f32.mrb[0].mxu0
    %v1493 = vadd.f32 %v1428, %v1492
    %v1494 = vpop.f32.mrb[0].mxu0
    %v1495 = vpop.f32.mrb[0].mxu0
    %v1496 = vadd.f32 %v1428, %v1495
    %v1497 = vpop.f32.mrb[0].mxu0
    %1498 = vdwg.mxu0
    %v1499 = vadd.f32 %v1342, %v1493
    %v1500 = vadd.f32 %v1343, %v1496
    %s1501 = scalar_lea.vmem %s2, 16
    %v1502 = vld [vmem:[%s1501] sm:$0xf]
    %v1503 = vld [vmem:[%s1501 + $0x4] sm:$0xf]
    %v1504 = vld [vmem:[%s1501 + $0x8] sm:$0xf]
    %v1505 = vld [vmem:[%s1501 + $0xc] sm:$0xf]
    %s1506 = scalar_lea.vmem %s3, 1
    %v1507 = vld [vmem:[%s1506] sm:$0x1]
    %v1509 = vlaneseq
    %v1510 = vshrl.u32 %v1509, 7
    %v1511 = vsub.s32 0, %v1510
    %v1512 = vrot.slane %v1507, %v1511
    %v1518 = vunpack.c.l.b16 %v1502
    %v1519 = vunpack.c.l.b16 %v1503
    %v1520 = vunpack.c.l.b16 %v1504
    %v1521 = vunpack.c.l.b16 %v1505
    %v1522 = vpack.c.b16 %v1519, %v1518
    %v1523 = vpack.c.b16 %v1521, %v1520
    %1526 = vmatprep.subr.bf16.mxu0 0
    %1527 = vmatpush1.bf16.msra.mxu0 %v1522
    %1528 = vmatprep.subr.bf16.mxu0 0
    %1529 = vmatpush1.bf16.msra.mxu0 %v1523
    %1530 = vmatprep.subr.bf16.mxu0 0
    %1531 = vmatpush1.bf16.msra.mxu0 0
    %1532 = vmatprep.subr.bf16.mxu0 0
    %1533 = vmatpush1.bf16.msra.mxu0 0
    %1534 = vmatprep.subr.bf16.mxu0 0
    %1535 = vmatpush1.bf16.msra.mxu0 0
    %1536 = vmatprep.subr.bf16.mxu0 0
    %1537 = vmatpush1.bf16.msra.mxu0 0
    %1538 = vmatprep.subr.bf16.mxu0 0
    %1539 = vmatpush1.bf16.msra.mxu0 0
    %1540 = vmatprep.subr.bf16.mxu0 0
    %1541 = vmatpush1.bf16.msra.mxu0 0
    %1542 = vmatprep.subr.bf16.mxu0 0
    %1543 = vmatpush1.bf16.msra.mxu0 0
    %1544 = vmatprep.subr.bf16.mxu0 0
    %1545 = vmatpush1.bf16.msra.mxu0 0
    %1546 = vmatprep.subr.bf16.mxu0 0
    %1547 = vmatpush1.bf16.msra.mxu0 0
    %1548 = vmatprep.subr.bf16.mxu0 0
    %1549 = vmatpush1.bf16.msra.mxu0 0
    %1550 = vmatprep.subr.bf16.mxu0 0
    %1551 = vmatpush1.bf16.msra.mxu0 0
    %1552 = vmatprep.subr.bf16.mxu0 0
    %1553 = vmatpush1.bf16.msra.mxu0 0
    %1554 = vmatprep.subr.bf16.mxu0 0
    %1555 = vmatpush1.bf16.msra.mxu0 0
    %1556 = vmatprep.subr.bf16.mxu0 0
    %1557 = vmatpush1.bf16.msra.mxu0 0
    %1558 = vmatprep.mubr.bf16.mxu0 0
    %1559 = vmatmul.mubr.bf16.gmra.mrb[0].mxu0 %v155
    %v1560 = vpop.f32.mrb[0].mxu0
    %v1561 = vadd.f32 %v1512, %v1560
    %v1562 = vpop.f32.mrb[0].mxu0
    %v1563 = vpop.f32.mrb[0].mxu0
    %v1564 = vadd.f32 %v1512, %v1563
    %v1565 = vpop.f32.mrb[0].mxu0
    %1566 = vmatprep.mubr.bf16.mxu0 0
    %1567 = vmatmul.mubr.bf16.gmra.mrb[0].mxu0 %v158
    %v1568 = vpop.f32.mrb[0].mxu0
    %v1569 = vadd.f32 %v1512, %v1568
    %v1570 = vpop.f32.mrb[0].mxu0
    %v1571 = vpop.f32.mrb[0].mxu0
    %v1572 = vadd.f32 %v1512, %v1571
    %v1573 = vpop.f32.mrb[0].mxu0
    %1574 = vdwg.mxu0
    %1575 = vrot.lane.b32.xlu0 %v1522, 96
    %v1576 = vpop.permute.xlu0 %1575
    %1577 = vrot.lane.b32.xlu0 %v1523, 96
    %v1578 = vpop.permute.xlu0 %1577
    %1581 = vrot.lane.b32.xlu0 %v1512, 96
    %v1582 = vpop.permute.xlu0 %1581
    %1584 = vmatprep.subr.bf16.mxu0 0
    %1585 = vmatpush1.bf16.msra.mxu0 %v1576
    %1586 = vmatprep.subr.bf16.mxu0 0
    %1587 = vmatpush1.bf16.msra.mxu0 %v1578
    %1588 = vmatprep.subr.bf16.mxu0 0
    %1589 = vmatpush1.bf16.msra.mxu0 0
    %1590 = vmatprep.subr.bf16.mxu0 0
    %1591 = vmatpush1.bf16.msra.mxu0 0
    %1592 = vmatprep.subr.bf16.mxu0 0
    %1593 = vmatpush1.bf16.msra.mxu0 0
    %1594 = vmatprep.subr.bf16.mxu0 0
    %1595 = vmatpush1.bf16.msra.mxu0 0
    %1596 = vmatprep.subr.bf16.mxu0 0
    %1597 = vmatpush1.bf16.msra.mxu0 0
    %1598 = vmatprep.subr.bf16.mxu0 0
    %1599 = vmatpush1.bf16.msra.mxu0 0
    %1600 = vmatprep.subr.bf16.mxu0 0
    %1601 = vmatpush1.bf16.msra.mxu0 0
    %1602 = vmatprep.subr.bf16.mxu0 0
    %1603 = vmatpush1.bf16.msra.mxu0 0
    %1604 = vmatprep.subr.bf16.mxu0 0
    %1605 = vmatpush1.bf16.msra.mxu0 0
    %1606 = vmatprep.subr.bf16.mxu0 0
    %1607 = vmatpush1.bf16.msra.mxu0 0
    %1608 = vmatprep.subr.bf16.mxu0 0
    %1609 = vmatpush1.bf16.msra.mxu0 0
    %1610 = vmatprep.subr.bf16.mxu0 0
    %1611 = vmatpush1.bf16.msra.mxu0 0
    %1612 = vmatprep.subr.bf16.mxu0 0
    %1613 = vmatpush1.bf16.msra.mxu0 0
    %1614 = vmatprep.subr.bf16.mxu0 0
    %1615 = vmatpush1.bf16.msra.mxu0 0
    %1616 = vmatprep.mubr.bf16.mxu0 0
    %1617 = vmatmul.mubr.bf16.gmra.mrb[0].mxu0 %v102
    %v1618 = vpop.f32.mrb[0].mxu0
    %v1619 = vadd.f32 %v1582, %v1618
    %v1620 = vpop.f32.mrb[0].mxu0
    %v1621 = vpop.f32.mrb[0].mxu0
    %v1622 = vadd.f32 %v1582, %v1621
    %v1623 = vpop.f32.mrb[0].mxu0
    %1624 = vdwg.mxu0
    %v1625 = vpack.c.bf16 %v1564, %v1561
    %v1626 = vpack.c.bf16 %v1572, %v1569
    %v1627 = vpack.c.bf16 %v1622, %v1619
    %v1629 = vunpack.c.l.b16 %v1627
    %v1630 = vunpack.c.h.b16 %v1627
    %v1631 = vpack.c.b16 %v1629, %v1629
    %v1632 = vpack.c.b16 %v1630, %v1630
    %v1634 = vsel %vm217, %v1625, 0
    %v1637 = vsel %vm217, %v1631, 0
    %1639 = vmatprep.subr.bf16.mxu0 0
    %1640 = vmatpush1.bf16.xpose.msra.mxu0 %v1637
    %1641 = vmatprep.subr.bf16.mxu0 0
    %1642 = vmatpush1.bf16.xpose.msra.mxu0 0
    %1643 = vmatprep.subr.bf16.mxu0 0
    %1644 = vmatpush1.bf16.xpose.msra.mxu0 0
    %1645 = vmatprep.subr.bf16.mxu0 0
    %1646 = vmatpush1.bf16.xpose.msra.mxu0 0
    %1647 = vmatprep.subr.bf16.mxu0 0
    %1648 = vmatpush1.bf16.xpose.msra.mxu0 0
    %1649 = vmatprep.subr.bf16.mxu0 0
    %1650 = vmatpush1.bf16.xpose.msra.mxu0 0
    %1651 = vmatprep.subr.bf16.mxu0 0
    %1652 = vmatpush1.bf16.xpose.msra.mxu0 0
    %1653 = vmatprep.subr.bf16.mxu0 0
    %1654 = vmatpush1.bf16.xpose.msra.mxu0 0
    %1655 = vmatprep.subr.bf16.mxu0 0
    %1656 = vmatpush1.bf16.xpose.msra.mxu0 0
    %1657 = vmatprep.subr.bf16.mxu0 0
    %1658 = vmatpush1.bf16.xpose.msra.mxu0 0
    %1659 = vmatprep.subr.bf16.mxu0 0
    %1660 = vmatpush1.bf16.xpose.msra.mxu0 0
    %1661 = vmatprep.subr.bf16.mxu0 0
    %1662 = vmatpush1.bf16.xpose.msra.mxu0 0
    %1663 = vmatprep.subr.bf16.mxu0 0
    %1664 = vmatpush1.bf16.xpose.msra.mxu0 0
    %1665 = vmatprep.subr.bf16.mxu0 0
    %1666 = vmatpush1.bf16.xpose.msra.mxu0 0
    %1667 = vmatprep.subr.bf16.mxu0 0
    %1668 = vmatpush1.bf16.xpose.msra.mxu0 0
    %1669 = vmatprep.subr.bf16.mxu0 0
    %1670 = vmatpush1.bf16.xpose.msra.mxu0 0
    %1671 = vmatprep.mubr.bf16.mxu0 0
    %1672 = vmatmul.mubr.bf16.gmra.mrb[0].mxu0 %v1634
    %v1673 = vpop.f32.mrb[0].mxu0
    %v1674 = vadd.f32 0.0, %v1673
    %v1675 = vpop.f32.mrb[0].mxu0
    %v1676 = vpop.f32.mrb[0].mxu0
    %v1677 = vadd.f32 0.0, %v1676
    %v1678 = vpop.f32.mrb[0].mxu0
    %1679 = vdwg.mxu0
    %v1681 = vsel %vm217, %v1626, 0
    %v1684 = vsel %vm217, %v1632, 0
    %1686 = vmatprep.subr.bf16.mxu0 0
    %1687 = vmatpush1.bf16.xpose.msra.mxu0 %v1684
    %1688 = vmatprep.subr.bf16.mxu0 0
    %1689 = vmatpush1.bf16.xpose.msra.mxu0 0
    %1690 = vmatprep.subr.bf16.mxu0 0
    %1691 = vmatpush1.bf16.xpose.msra.mxu0 0
    %1692 = vmatprep.subr.bf16.mxu0 0
    %1693 = vmatpush1.bf16.xpose.msra.mxu0 0
    %1694 = vmatprep.subr.bf16.mxu0 0
    %1695 = vmatpush1.bf16.xpose.msra.mxu0 0
    %1696 = vmatprep.subr.bf16.mxu0 0
    %1697 = vmatpush1.bf16.xpose.msra.mxu0 0
    %1698 = vmatprep.subr.bf16.mxu0 0
    %1699 = vmatpush1.bf16.xpose.msra.mxu0 0
    %1700 = vmatprep.subr.bf16.mxu0 0
    %1701 = vmatpush1.bf16.xpose.msra.mxu0 0
    %1702 = vmatprep.subr.bf16.mxu0 0
    %1703 = vmatpush1.bf16.xpose.msra.mxu0 0
    %1704 = vmatprep.subr.bf16.mxu0 0
    %1705 = vmatpush1.bf16.xpose.msra.mxu0 0
    %1706 = vmatprep.subr.bf16.mxu0 0
    %1707 = vmatpush1.bf16.xpose.msra.mxu0 0
    %1708 = vmatprep.subr.bf16.mxu0 0
    %1709 = vmatpush1.bf16.xpose.msra.mxu0 0
    %1710 = vmatprep.subr.bf16.mxu0 0
    %1711 = vmatpush1.bf16.xpose.msra.mxu0 0
    %1712 = vmatprep.subr.bf16.mxu0 0
    %1713 = vmatpush1.bf16.xpose.msra.mxu0 0
    %1714 = vmatprep.subr.bf16.mxu0 0
    %1715 = vmatpush1.bf16.xpose.msra.mxu0 0
    %1716 = vmatprep.subr.bf16.mxu0 0
    %1717 = vmatpush1.bf16.xpose.msra.mxu0 0
    %1718 = vmatprep.mubr.bf16.mxu0 0
    %1719 = vmatmul.mubr.bf16.gmra.mrb[0].mxu0 %v1681
    %v1720 = vpop.f32.mrb[0].mxu0
    %v1721 = vadd.f32 0.0, %v1720
    %v1722 = vpop.f32.mrb[0].mxu0
    %v1723 = vpop.f32.mrb[0].mxu0
    %v1724 = vadd.f32 0.0, %v1723
    %v1725 = vpop.f32.mrb[0].mxu0
    %1726 = vdwg.mxu0
    %v1727 = vsel %vm217, %v1674, -inf
    %1728 = vmax.xlane.f32.xlu0 %v1727
    %v1729 = vpop.xlane.xlu0 %1728
    %v1730 = vsel %vm217, %v1677, -inf
    %1731 = vmax.xlane.f32.xlu0 %v1730
    %v1732 = vpop.xlane.xlu0 %1731
    %v1733 = vsel %vm217, %v1721, -inf
    %1734 = vmax.xlane.f32.xlu0 %v1733
    %v1735 = vpop.xlane.xlu0 %1734
    %v1736 = vsel %vm217, %v1724, -inf
    %1737 = vmax.xlane.f32.xlu0 %v1736
    %v1738 = vpop.xlane.xlu0 %1737
    %v1739 = vsub.f32 %v1674, %v1729
    %v1740 = vsub.f32 %v1677, %v1732
    %v1741 = vsub.f32 %v1721, %v1735
    %v1742 = vsub.f32 %v1724, %v1738
    %v1743 = vmul.f32 %v1739, 1.442695
    %v1744 = vpow.pop %v1743
    %v1745 = vmul.f32 %v1740, 1.442695
    %v1746 = vpow.pop %v1745
    %v1747 = vmul.f32 %v1741, 1.442695
    %v1748 = vpow.pop %v1747
    %v1749 = vmul.f32 %v1742, 1.442695
    %v1750 = vpow.pop %v1749
    %v1751 = vsel %vm217, %v1744, 0.0
    %1752 = vadd.xlane.f32.xlu0 %v1751
    %v1753 = vpop.xlane.xlu0 %1752
    %v1754 = vsel %vm217, %v1746, 0.0
    %1755 = vadd.xlane.f32.xlu0 %v1754
    %v1756 = vpop.xlane.xlu0 %1755
    %v1757 = vsel %vm217, %v1748, 0.0
    %1758 = vadd.xlane.f32.xlu0 %v1757
    %v1759 = vpop.xlane.xlu0 %1758
    %v1760 = vsel %vm217, %v1750, 0.0
    %1761 = vadd.xlane.f32.xlu0 %v1760
    %v1762 = vpop.xlane.xlu0 %1761
    %v1763 = vrcp.pop %v1753
    %v1764 = vrcp.pop %v1756
    %v1765 = vrcp.pop %v1759
    %v1766 = vrcp.pop %v1762
    %v1767 = vmul.f32 %v1744, %v1763
    %v1768 = vmul.f32 %v1746, %v1764
    %v1769 = vmul.f32 %v1748, %v1765
    %v1770 = vmul.f32 %v1750, %v1766
    %v1771 = vpack.c.bf16 %v1768, %v1767
    %v1772 = vpack.c.bf16 %v1770, %v1769
    %1773 = vrot.lane.b32.xlu0 %v1631, 96
    %v1774 = vpop.permute.xlu0 %1773
    %v1776 = vsel %vm217, %v1771, 0
    %v1779 = vsel %vm439, %v1774, 0
    %1781 = vmatprep.subr.bf16.mxu0 0
    %1782 = vmatpush1.bf16.msra.mxu0 %v1779
    %1783 = vmatprep.subr.bf16.mxu0 0
    %1784 = vmatpush1.bf16.msra.mxu0 0
    %1785 = vmatprep.subr.bf16.mxu0 0
    %1786 = vmatpush1.bf16.msra.mxu0 0
    %1787 = vmatprep.subr.bf16.mxu0 0
    %1788 = vmatpush1.bf16.msra.mxu0 0
    %1789 = vmatprep.subr.bf16.mxu0 0
    %1790 = vmatpush1.bf16.msra.mxu0 0
    %1791 = vmatprep.subr.bf16.mxu0 0
    %1792 = vmatpush1.bf16.msra.mxu0 0
    %1793 = vmatprep.subr.bf16.mxu0 0
    %1794 = vmatpush1.bf16.msra.mxu0 0
    %1795 = vmatprep.subr.bf16.mxu0 0
    %1796 = vmatpush1.bf16.msra.mxu0 0
    %1797 = vmatprep.subr.bf16.mxu0 0
    %1798 = vmatpush1.bf16.msra.mxu0 0
    %1799 = vmatprep.subr.bf16.mxu0 0
    %1800 = vmatpush1.bf16.msra.mxu0 0
    %1801 = vmatprep.subr.bf16.mxu0 0
    %1802 = vmatpush1.bf16.msra.mxu0 0
    %1803 = vmatprep.subr.bf16.mxu0 0
    %1804 = vmatpush1.bf16.msra.mxu0 0
    %1805 = vmatprep.subr.bf16.mxu0 0
    %1806 = vmatpush1.bf16.msra.mxu0 0
    %1807 = vmatprep.subr.bf16.mxu0 0
    %1808 = vmatpush1.bf16.msra.mxu0 0
    %1809 = vmatprep.subr.bf16.mxu0 0
    %1810 = vmatpush1.bf16.msra.mxu0 0
    %1811 = vmatprep.subr.bf16.mxu0 0
    %1812 = vmatpush1.bf16.msra.mxu0 0
    %1813 = vmatprep.mubr.bf16.mxu0 0
    %1814 = vmatmul.mubr.bf16.gmra.mrb[0].mxu0 %v1776
    %v1815 = vpop.f32.mrb[0].mxu0
    %v1816 = vadd.f32 0.0, %v1815
    %v1817 = vpop.f32.mrb[0].mxu0
    %v1818 = vpop.f32.mrb[0].mxu0
    %v1819 = vadd.f32 0.0, %v1818
    %v1820 = vpop.f32.mrb[0].mxu0
    %1821 = vdwg.mxu0
    %1822 = vrot.lane.b32.xlu0 %v1632, 96
    %v1823 = vpop.permute.xlu0 %1822
    %v1825 = vsel %vm217, %v1772, 0
    %v1828 = vsel %vm439, %v1823, 0
    %1830 = vmatprep.subr.bf16.mxu0 0
    %1831 = vmatpush1.bf16.msra.mxu0 %v1828
    %1832 = vmatprep.subr.bf16.mxu0 0
    %1833 = vmatpush1.bf16.msra.mxu0 0
    %1834 = vmatprep.subr.bf16.mxu0 0
    %1835 = vmatpush1.bf16.msra.mxu0 0
    %1836 = vmatprep.subr.bf16.mxu0 0
    %1837 = vmatpush1.bf16.msra.mxu0 0
    %1838 = vmatprep.subr.bf16.mxu0 0
    %1839 = vmatpush1.bf16.msra.mxu0 0
    %1840 = vmatprep.subr.bf16.mxu0 0
    %1841 = vmatpush1.bf16.msra.mxu0 0
    %1842 = vmatprep.subr.bf16.mxu0 0
    %1843 = vmatpush1.bf16.msra.mxu0 0
    %1844 = vmatprep.subr.bf16.mxu0 0
    %1845 = vmatpush1.bf16.msra.mxu0 0
    %1846 = vmatprep.subr.bf16.mxu0 0
    %1847 = vmatpush1.bf16.msra.mxu0 0
    %1848 = vmatprep.subr.bf16.mxu0 0
    %1849 = vmatpush1.bf16.msra.mxu0 0
    %1850 = vmatprep.subr.bf16.mxu0 0
    %1851 = vmatpush1.bf16.msra.mxu0 0
    %1852 = vmatprep.subr.bf16.mxu0 0
    %1853 = vmatpush1.bf16.msra.mxu0 0
    %1854 = vmatprep.subr.bf16.mxu0 0
    %1855 = vmatpush1.bf16.msra.mxu0 0
    %1856 = vmatprep.subr.bf16.mxu0 0
    %1857 = vmatpush1.bf16.msra.mxu0 0
    %1858 = vmatprep.subr.bf16.mxu0 0
    %1859 = vmatpush1.bf16.msra.mxu0 0
    %1860 = vmatprep.subr.bf16.mxu0 0
    %1861 = vmatpush1.bf16.msra.mxu0 0
    %1862 = vmatprep.mubr.bf16.mxu0 0
    %1863 = vmatmul.mubr.bf16.gmra.mrb[0].mxu0 %v1825
    %v1864 = vpop.f32.mrb[0].mxu0
    %v1865 = vadd.f32 0.0, %v1864
    %v1866 = vpop.f32.mrb[0].mxu0
    %v1867 = vpop.f32.mrb[0].mxu0
    %v1868 = vadd.f32 0.0, %v1867
    %v1869 = vpop.f32.mrb[0].mxu0
    %1870 = vdwg.mxu0
    %v1871 = vpack.c.bf16 %v1819, %v1816
    %v1872 = vpack.c.bf16 %v1868, %v1865
    %v1873 = vld [vmem:[%s1501] sm:$0xf]
    %v1875 = vunpack.c.l.b16 %v1873
    %v1876 = vpack.c.b16 %v1875, %v1875
    %1877 = vrot.lane.b32.xlu0 %v1876, 32
    %v1878 = vpop.permute.xlu0 %1877
    %v1880 = vsel %vm217, %v1871, 0
    %v1883 = vsel %vm217, %v1872, 0
    %v1886 = vsel %vm439, %v1878, 0
    %1888 = vmatprep.subr.bf16.mxu0 0
    %1889 = vmatpush1.bf16.msra.mxu0 %v1886
    %1890 = vmatprep.subr.bf16.mxu0 0
    %1891 = vmatpush1.bf16.msra.mxu0 0
    %1892 = vmatprep.subr.bf16.mxu0 0
    %1893 = vmatpush1.bf16.msra.mxu0 0
    %1894 = vmatprep.subr.bf16.mxu0 0
    %1895 = vmatpush1.bf16.msra.mxu0 0
    %1896 = vmatprep.subr.bf16.mxu0 0
    %1897 = vmatpush1.bf16.msra.mxu0 0
    %1898 = vmatprep.subr.bf16.mxu0 0
    %1899 = vmatpush1.bf16.msra.mxu0 0
    %1900 = vmatprep.subr.bf16.mxu0 0
    %1901 = vmatpush1.bf16.msra.mxu0 0
    %1902 = vmatprep.subr.bf16.mxu0 0
    %1903 = vmatpush1.bf16.msra.mxu0 0
    %1904 = vmatprep.subr.bf16.mxu0 0
    %1905 = vmatpush1.bf16.msra.mxu0 0
    %1906 = vmatprep.subr.bf16.mxu0 0
    %1907 = vmatpush1.bf16.msra.mxu0 0
    %1908 = vmatprep.subr.bf16.mxu0 0
    %1909 = vmatpush1.bf16.msra.mxu0 0
    %1910 = vmatprep.subr.bf16.mxu0 0
    %1911 = vmatpush1.bf16.msra.mxu0 0
    %1912 = vmatprep.subr.bf16.mxu0 0
    %1913 = vmatpush1.bf16.msra.mxu0 0
    %1914 = vmatprep.subr.bf16.mxu0 0
    %1915 = vmatpush1.bf16.msra.mxu0 0
    %1916 = vmatprep.subr.bf16.mxu0 0
    %1917 = vmatpush1.bf16.msra.mxu0 0
    %1918 = vmatprep.subr.bf16.mxu0 0
    %1919 = vmatpush1.bf16.msra.mxu0 0
    %1920 = vmatprep.mubr.bf16.mxu0 0
    %1921 = vmatmul.mubr.bf16.gmra.mrb[0].mxu0 %v1880
    %v1922 = vpop.f32.mrb[0].mxu0
    %v1923 = vadd.f32 0.0, %v1922
    %v1924 = vpop.f32.mrb[0].mxu0
    %v1925 = vpop.f32.mrb[0].mxu0
    %v1926 = vadd.f32 0.0, %v1925
    %v1927 = vpop.f32.mrb[0].mxu0
    %1928 = vmatprep.mubr.bf16.mxu0 0
    %1929 = vmatmul.mubr.bf16.gmra.mrb[0].mxu0 %v1883
    %v1930 = vpop.f32.mrb[0].mxu0
    %v1931 = vadd.f32 0.0, %v1930
    %v1932 = vpop.f32.mrb[0].mxu0
    %v1933 = vpop.f32.mrb[0].mxu0
    %v1934 = vadd.f32 0.0, %v1933
    %v1935 = vpop.f32.mrb[0].mxu0
    %1936 = vdwg.mxu0
    %1941 = vrot.lane.b32.xlu0 %v1923, 96
    %v1942 = vpop.permute.xlu0 %1941
    %1943 = vrot.lane.b32.xlu0 %v1926, 96
    %v1944 = vpop.permute.xlu0 %1943
    %1945 = vrot.lane.b32.xlu0 %v1931, 96
    %v1946 = vpop.permute.xlu0 %1945
    %1947 = vrot.lane.b32.xlu0 %v1934, 96
    %v1948 = vpop.permute.xlu0 %1947
    %v1953 = vadd.f32 %v1512, %v1942
    %v1954 = vadd.f32 %v1512, %v1944
    %v1955 = vadd.f32 %v1512, %v1946
    %v1956 = vadd.f32 %v1512, %v1948
    %1958 = vrot.lane.b32.xlu0 %v1625, 120
    %v1959 = vpop.permute.xlu0 %1958
    %1960 = vrot.lane.b32.xlu0 %v1631, 120
    %v1961 = vpop.permute.xlu0 %1960
    %v1963 = vsel %vm217, %v1959, 0
    %v1966 = vsel %vm217, %v1961, 0
    %1968 = vmatprep.subr.bf16.mxu0 0
    %1969 = vmatpush1.bf16.xpose.msra.mxu0 %v1966
    %1970 = vmatprep.subr.bf16.mxu0 0
    %1971 = vmatpush1.bf16.xpose.msra.mxu0 0
    %1972 = vmatprep.subr.bf16.mxu0 0
    %1973 = vmatpush1.bf16.xpose.msra.mxu0 0
    %1974 = vmatprep.subr.bf16.mxu0 0
    %1975 = vmatpush1.bf16.xpose.msra.mxu0 0
    %1976 = vmatprep.subr.bf16.mxu0 0
    %1977 = vmatpush1.bf16.xpose.msra.mxu0 0
    %1978 = vmatprep.subr.bf16.mxu0 0
    %1979 = vmatpush1.bf16.xpose.msra.mxu0 0
    %1980 = vmatprep.subr.bf16.mxu0 0
    %1981 = vmatpush1.bf16.xpose.msra.mxu0 0
    %1982 = vmatprep.subr.bf16.mxu0 0
    %1983 = vmatpush1.bf16.xpose.msra.mxu0 0
    %1984 = vmatprep.subr.bf16.mxu0 0
    %1985 = vmatpush1.bf16.xpose.msra.mxu0 0
    %1986 = vmatprep.subr.bf16.mxu0 0
    %1987 = vmatpush1.bf16.xpose.msra.mxu0 0
    %1988 = vmatprep.subr.bf16.mxu0 0
    %1989 = vmatpush1.bf16.xpose.msra.mxu0 0
    %1990 = vmatprep.subr.bf16.mxu0 0
    %1991 = vmatpush1.bf16.xpose.msra.mxu0 0
    %1992 = vmatprep.subr.bf16.mxu0 0
    %1993 = vmatpush1.bf16.xpose.msra.mxu0 0
    %1994 = vmatprep.subr.bf16.mxu0 0
    %1995 = vmatpush1.bf16.xpose.msra.mxu0 0
    %1996 = vmatprep.subr.bf16.mxu0 0
    %1997 = vmatpush1.bf16.xpose.msra.mxu0 0
    %1998 = vmatprep.subr.bf16.mxu0 0
    %1999 = vmatpush1.bf16.xpose.msra.mxu0 0
    %2000 = vmatprep.mubr.bf16.mxu0 0
    %2001 = vmatmul.mubr.bf16.gmra.mrb[0].mxu0 %v1963
    %v2002 = vpop.f32.mrb[0].mxu0
    %v2003 = vadd.f32 0.0, %v2002
    %v2004 = vpop.f32.mrb[0].mxu0
    %v2005 = vpop.f32.mrb[0].mxu0
    %v2006 = vadd.f32 0.0, %v2005
    %v2007 = vpop.f32.mrb[0].mxu0
    %2008 = vdwg.mxu0
    %2010 = vrot.lane.b32.xlu0 %v1626, 120
    %v2011 = vpop.permute.xlu0 %2010
    %2012 = vrot.lane.b32.xlu0 %v1632, 120
    %v2013 = vpop.permute.xlu0 %2012
    %v2015 = vsel %vm217, %v2011, 0
    %v2018 = vsel %vm217, %v2013, 0
    %2020 = vmatprep.subr.bf16.mxu0 0
    %2021 = vmatpush1.bf16.xpose.msra.mxu0 %v2018
    %2022 = vmatprep.subr.bf16.mxu0 0
    %2023 = vmatpush1.bf16.xpose.msra.mxu0 0
    %2024 = vmatprep.subr.bf16.mxu0 0
    %2025 = vmatpush1.bf16.xpose.msra.mxu0 0
    %2026 = vmatprep.subr.bf16.mxu0 0
    %2027 = vmatpush1.bf16.xpose.msra.mxu0 0
    %2028 = vmatprep.subr.bf16.mxu0 0
    %2029 = vmatpush1.bf16.xpose.msra.mxu0 0
    %2030 = vmatprep.subr.bf16.mxu0 0
    %2031 = vmatpush1.bf16.xpose.msra.mxu0 0
    %2032 = vmatprep.subr.bf16.mxu0 0
    %2033 = vmatpush1.bf16.xpose.msra.mxu0 0
    %2034 = vmatprep.subr.bf16.mxu0 0
    %2035 = vmatpush1.bf16.xpose.msra.mxu0 0
    %2036 = vmatprep.subr.bf16.mxu0 0
    %2037 = vmatpush1.bf16.xpose.msra.mxu0 0
    %2038 = vmatprep.subr.bf16.mxu0 0
    %2039 = vmatpush1.bf16.xpose.msra.mxu0 0
    %2040 = vmatprep.subr.bf16.mxu0 0
    %2041 = vmatpush1.bf16.xpose.msra.mxu0 0
    %2042 = vmatprep.subr.bf16.mxu0 0
    %2043 = vmatpush1.bf16.xpose.msra.mxu0 0
    %2044 = vmatprep.subr.bf16.mxu0 0
    %2045 = vmatpush1.bf16.xpose.msra.mxu0 0
    %2046 = vmatprep.subr.bf16.mxu0 0
    %2047 = vmatpush1.bf16.xpose.msra.mxu0 0
    %2048 = vmatprep.subr.bf16.mxu0 0
    %2049 = vmatpush1.bf16.xpose.msra.mxu0 0
    %2050 = vmatprep.subr.bf16.mxu0 0
    %2051 = vmatpush1.bf16.xpose.msra.mxu0 0
    %2052 = vmatprep.mubr.bf16.mxu0 0
    %2053 = vmatmul.mubr.bf16.gmra.mrb[0].mxu0 %v2015
    %v2054 = vpop.f32.mrb[0].mxu0
    %v2055 = vadd.f32 0.0, %v2054
    %v2056 = vpop.f32.mrb[0].mxu0
    %v2057 = vpop.f32.mrb[0].mxu0
    %v2058 = vadd.f32 0.0, %v2057
    %v2059 = vpop.f32.mrb[0].mxu0
    %2060 = vdwg.mxu0
    %v2061 = vsel %vm217, %v2003, -inf
    %2062 = vmax.xlane.f32.xlu0 %v2061
    %v2063 = vpop.xlane.xlu0 %2062
    %v2064 = vsel %vm217, %v2006, -inf
    %2065 = vmax.xlane.f32.xlu0 %v2064
    %v2066 = vpop.xlane.xlu0 %2065
    %v2067 = vsel %vm217, %v2055, -inf
    %2068 = vmax.xlane.f32.xlu0 %v2067
    %v2069 = vpop.xlane.xlu0 %2068
    %v2070 = vsel %vm217, %v2058, -inf
    %2071 = vmax.xlane.f32.xlu0 %v2070
    %v2072 = vpop.xlane.xlu0 %2071
    %v2073 = vsub.f32 %v2003, %v2063
    %v2074 = vsub.f32 %v2006, %v2066
    %v2075 = vsub.f32 %v2055, %v2069
    %v2076 = vsub.f32 %v2058, %v2072
    %v2077 = vmul.f32 %v2073, 1.442695
    %v2078 = vpow.pop %v2077
    %v2079 = vmul.f32 %v2074, 1.442695
    %v2080 = vpow.pop %v2079
    %v2081 = vmul.f32 %v2075, 1.442695
    %v2082 = vpow.pop %v2081
    %v2083 = vmul.f32 %v2076, 1.442695
    %v2084 = vpow.pop %v2083
    %v2085 = vsel %vm217, %v2078, 0.0
    %2086 = vadd.xlane.f32.xlu0 %v2085
    %v2087 = vpop.xlane.xlu0 %2086
    %v2088 = vsel %vm217, %v2080, 0.0
    %2089 = vadd.xlane.f32.xlu0 %v2088
    %v2090 = vpop.xlane.xlu0 %2089
    %v2091 = vsel %vm217, %v2082, 0.0
    %2092 = vadd.xlane.f32.xlu0 %v2091
    %v2093 = vpop.xlane.xlu0 %2092
    %v2094 = vsel %vm217, %v2084, 0.0
    %2095 = vadd.xlane.f32.xlu0 %v2094
    %v2096 = vpop.xlane.xlu0 %2095
    %v2097 = vrcp.pop %v2087
    %v2098 = vrcp.pop %v2090
    %v2099 = vrcp.pop %v2093
    %v2100 = vrcp.pop %v2096
    %v2101 = vmul.f32 %v2078, %v2097
    %v2102 = vmul.f32 %v2080, %v2098
    %v2103 = vmul.f32 %v2082, %v2099
    %v2104 = vmul.f32 %v2084, %v2100
    %v2105 = vpack.c.bf16 %v2102, %v2101
    %v2106 = vpack.c.bf16 %v2104, %v2103
    %2107 = vrot.lane.b32.xlu0 %v1631, 88
    %v2108 = vpop.permute.xlu0 %2107
    %v2110 = vsel %vm217, %v2105, 0
    %v2113 = vsel %vm439, %v2108, 0
    %2115 = vmatprep.subr.bf16.mxu0 0
    %2116 = vmatpush1.bf16.msra.mxu0 %v2113
    %2117 = vmatprep.subr.bf16.mxu0 0
    %2118 = vmatpush1.bf16.msra.mxu0 0
    %2119 = vmatprep.subr.bf16.mxu0 0
    %2120 = vmatpush1.bf16.msra.mxu0 0
    %2121 = vmatprep.subr.bf16.mxu0 0
    %2122 = vmatpush1.bf16.msra.mxu0 0
    %2123 = vmatprep.subr.bf16.mxu0 0
    %2124 = vmatpush1.bf16.msra.mxu0 0
    %2125 = vmatprep.subr.bf16.mxu0 0
    %2126 = vmatpush1.bf16.msra.mxu0 0
    %2127 = vmatprep.subr.bf16.mxu0 0
    %2128 = vmatpush1.bf16.msra.mxu0 0
    %2129 = vmatprep.subr.bf16.mxu0 0
    %2130 = vmatpush1.bf16.msra.mxu0 0
    %2131 = vmatprep.subr.bf16.mxu0 0
    %2132 = vmatpush1.bf16.msra.mxu0 0
    %2133 = vmatprep.subr.bf16.mxu0 0
    %2134 = vmatpush1.bf16.msra.mxu0 0
    %2135 = vmatprep.subr.bf16.mxu0 0
    %2136 = vmatpush1.bf16.msra.mxu0 0
    %2137 = vmatprep.subr.bf16.mxu0 0
    %2138 = vmatpush1.bf16.msra.mxu0 0
    %2139 = vmatprep.subr.bf16.mxu0 0
    %2140 = vmatpush1.bf16.msra.mxu0 0
    %2141 = vmatprep.subr.bf16.mxu0 0
    %2142 = vmatpush1.bf16.msra.mxu0 0
    %2143 = vmatprep.subr.bf16.mxu0 0
    %2144 = vmatpush1.bf16.msra.mxu0 0
    %2145 = vmatprep.subr.bf16.mxu0 0
    %2146 = vmatpush1.bf16.msra.mxu0 0
    %2147 = vmatprep.mubr.bf16.mxu0 0
    %2148 = vmatmul.mubr.bf16.gmra.mrb[0].mxu0 %v2110
    %v2149 = vpop.f32.mrb[0].mxu0
    %v2150 = vadd.f32 0.0, %v2149
    %v2151 = vpop.f32.mrb[0].mxu0
    %v2152 = vpop.f32.mrb[0].mxu0
    %v2153 = vadd.f32 0.0, %v2152
    %v2154 = vpop.f32.mrb[0].mxu0
    %2155 = vdwg.mxu0
    %2156 = vrot.lane.b32.xlu0 %v1632, 88
    %v2157 = vpop.permute.xlu0 %2156
    %v2159 = vsel %vm217, %v2106, 0
    %v2162 = vsel %vm439, %v2157, 0
    %2164 = vmatprep.subr.bf16.mxu0 0
    %2165 = vmatpush1.bf16.msra.mxu0 %v2162
    %2166 = vmatprep.subr.bf16.mxu0 0
    %2167 = vmatpush1.bf16.msra.mxu0 0
    %2168 = vmatprep.subr.bf16.mxu0 0
    %2169 = vmatpush1.bf16.msra.mxu0 0
    %2170 = vmatprep.subr.bf16.mxu0 0
    %2171 = vmatpush1.bf16.msra.mxu0 0
    %2172 = vmatprep.subr.bf16.mxu0 0
    %2173 = vmatpush1.bf16.msra.mxu0 0
    %2174 = vmatprep.subr.bf16.mxu0 0
    %2175 = vmatpush1.bf16.msra.mxu0 0
    %2176 = vmatprep.subr.bf16.mxu0 0
    %2177 = vmatpush1.bf16.msra.mxu0 0
    %2178 = vmatprep.subr.bf16.mxu0 0
    %2179 = vmatpush1.bf16.msra.mxu0 0
    %2180 = vmatprep.subr.bf16.mxu0 0
    %2181 = vmatpush1.bf16.msra.mxu0 0
    %2182 = vmatprep.subr.bf16.mxu0 0
    %2183 = vmatpush1.bf16.msra.mxu0 0
    %2184 = vmatprep.subr.bf16.mxu0 0
    %2185 = vmatpush1.bf16.msra.mxu0 0
    %2186 = vmatprep.subr.bf16.mxu0 0
    %2187 = vmatpush1.bf16.msra.mxu0 0
    %2188 = vmatprep.subr.bf16.mxu0 0
    %2189 = vmatpush1.bf16.msra.mxu0 0
    %2190 = vmatprep.subr.bf16.mxu0 0
    %2191 = vmatpush1.bf16.msra.mxu0 0
    %2192 = vmatprep.subr.bf16.mxu0 0
    %2193 = vmatpush1.bf16.msra.mxu0 0
    %2194 = vmatprep.subr.bf16.mxu0 0
    %2195 = vmatpush1.bf16.msra.mxu0 0
    %2196 = vmatprep.mubr.bf16.mxu0 0
    %2197 = vmatmul.mubr.bf16.gmra.mrb[0].mxu0 %v2159
    %v2198 = vpop.f32.mrb[0].mxu0
    %v2199 = vadd.f32 0.0, %v2198
    %v2200 = vpop.f32.mrb[0].mxu0
    %v2201 = vpop.f32.mrb[0].mxu0
    %v2202 = vadd.f32 0.0, %v2201
    %v2203 = vpop.f32.mrb[0].mxu0
    %2204 = vdwg.mxu0
    %v2205 = vpack.c.bf16 %v2153, %v2150
    %v2206 = vpack.c.bf16 %v2202, %v2199
    %v2207 = vld [vmem:[%s1501 + $0x4] sm:$0xf]
    %v2209 = vunpack.c.l.b16 %v2207
    %v2210 = vpack.c.b16 %v2209, %v2209
    %2211 = vrot.lane.b32.xlu0 %v2210, 32
    %v2212 = vpop.permute.xlu0 %2211
    %v2214 = vsel %vm217, %v2205, 0
    %v2217 = vsel %vm217, %v2206, 0
    %v2220 = vsel %vm439, %v2212, 0
    %2222 = vmatprep.subr.bf16.mxu0 0
    %2223 = vmatpush1.bf16.msra.mxu0 %v2220
    %2224 = vmatprep.subr.bf16.mxu0 0
    %2225 = vmatpush1.bf16.msra.mxu0 0
    %2226 = vmatprep.subr.bf16.mxu0 0
    %2227 = vmatpush1.bf16.msra.mxu0 0
    %2228 = vmatprep.subr.bf16.mxu0 0
    %2229 = vmatpush1.bf16.msra.mxu0 0
    %2230 = vmatprep.subr.bf16.mxu0 0
    %2231 = vmatpush1.bf16.msra.mxu0 0
    %2232 = vmatprep.subr.bf16.mxu0 0
    %2233 = vmatpush1.bf16.msra.mxu0 0
    %2234 = vmatprep.subr.bf16.mxu0 0
    %2235 = vmatpush1.bf16.msra.mxu0 0
    %2236 = vmatprep.subr.bf16.mxu0 0
    %2237 = vmatpush1.bf16.msra.mxu0 0
    %2238 = vmatprep.subr.bf16.mxu0 0
    %2239 = vmatpush1.bf16.msra.mxu0 0
    %2240 = vmatprep.subr.bf16.mxu0 0
    %2241 = vmatpush1.bf16.msra.mxu0 0
    %2242 = vmatprep.subr.bf16.mxu0 0
    %2243 = vmatpush1.bf16.msra.mxu0 0
    %2244 = vmatprep.subr.bf16.mxu0 0
    %2245 = vmatpush1.bf16.msra.mxu0 0
    %2246 = vmatprep.subr.bf16.mxu0 0
    %2247 = vmatpush1.bf16.msra.mxu0 0
    %2248 = vmatprep.subr.bf16.mxu0 0
    %2249 = vmatpush1.bf16.msra.mxu0 0
    %2250 = vmatprep.subr.bf16.mxu0 0
    %2251 = vmatpush1.bf16.msra.mxu0 0
    %2252 = vmatprep.subr.bf16.mxu0 0
    %2253 = vmatpush1.bf16.msra.mxu0 0
    %2254 = vmatprep.mubr.bf16.mxu0 0
    %2255 = vmatmul.mubr.bf16.gmra.mrb[0].mxu0 %v2214
    %v2256 = vpop.f32.mrb[0].mxu0
    %v2257 = vadd.f32 0.0, %v2256
    %v2258 = vpop.f32.mrb[0].mxu0
    %v2259 = vpop.f32.mrb[0].mxu0
    %v2260 = vadd.f32 0.0, %v2259
    %v2261 = vpop.f32.mrb[0].mxu0
    %2262 = vmatprep.mubr.bf16.mxu0 0
    %2263 = vmatmul.mubr.bf16.gmra.mrb[0].mxu0 %v2217
    %v2264 = vpop.f32.mrb[0].mxu0
    %v2265 = vadd.f32 0.0, %v2264
    %v2266 = vpop.f32.mrb[0].mxu0
    %v2267 = vpop.f32.mrb[0].mxu0
    %v2268 = vadd.f32 0.0, %v2267
    %v2269 = vpop.f32.mrb[0].mxu0
    %2270 = vdwg.mxu0
    %2275 = vrot.lane.b32.xlu0 %v2257, 96
    %v2276 = vpop.permute.xlu0 %2275
    %2277 = vrot.lane.b32.xlu0 %v2260, 96
    %v2278 = vpop.permute.xlu0 %2277
    %2279 = vrot.lane.b32.xlu0 %v2265, 96
    %v2280 = vpop.permute.xlu0 %2279
    %2281 = vrot.lane.b32.xlu0 %v2268, 96
    %v2282 = vpop.permute.xlu0 %2281
    %v2287 = vadd.f32 %v1953, %v2276
    %v2288 = vadd.f32 %v1954, %v2278
    %v2289 = vadd.f32 %v1955, %v2280
    %v2290 = vadd.f32 %v1956, %v2282
    %2291 = vrot.lane.b32.xlu0 %v1625, 112
    %v2292 = vpop.permute.xlu0 %2291
    %2293 = vrot.lane.b32.xlu0 %v1631, 112
    %v2294 = vpop.permute.xlu0 %2293
    %v2296 = vsel %vm217, %v2292, 0
    %v2299 = vsel %vm217, %v2294, 0
    %2301 = vmatprep.subr.bf16.mxu0 0
    %2302 = vmatpush1.bf16.xpose.msra.mxu0 %v2299
    %2303 = vmatprep.subr.bf16.mxu0 0
    %2304 = vmatpush1.bf16.xpose.msra.mxu0 0
    %2305 = vmatprep.subr.bf16.mxu0 0
    %2306 = vmatpush1.bf16.xpose.msra.mxu0 0
    %2307 = vmatprep.subr.bf16.mxu0 0
    %2308 = vmatpush1.bf16.xpose.msra.mxu0 0
    %2309 = vmatprep.subr.bf16.mxu0 0
    %2310 = vmatpush1.bf16.xpose.msra.mxu0 0
    %2311 = vmatprep.subr.bf16.mxu0 0
    %2312 = vmatpush1.bf16.xpose.msra.mxu0 0
    %2313 = vmatprep.subr.bf16.mxu0 0
    %2314 = vmatpush1.bf16.xpose.msra.mxu0 0
    %2315 = vmatprep.subr.bf16.mxu0 0
    %2316 = vmatpush1.bf16.xpose.msra.mxu0 0
    %2317 = vmatprep.subr.bf16.mxu0 0
    %2318 = vmatpush1.bf16.xpose.msra.mxu0 0
    %2319 = vmatprep.subr.bf16.mxu0 0
    %2320 = vmatpush1.bf16.xpose.msra.mxu0 0
    %2321 = vmatprep.subr.bf16.mxu0 0
    %2322 = vmatpush1.bf16.xpose.msra.mxu0 0
    %2323 = vmatprep.subr.bf16.mxu0 0
    %2324 = vmatpush1.bf16.xpose.msra.mxu0 0
    %2325 = vmatprep.subr.bf16.mxu0 0
    %2326 = vmatpush1.bf16.xpose.msra.mxu0 0
    %2327 = vmatprep.subr.bf16.mxu0 0
    %2328 = vmatpush1.bf16.xpose.msra.mxu0 0
    %2329 = vmatprep.subr.bf16.mxu0 0
    %2330 = vmatpush1.bf16.xpose.msra.mxu0 0
    %2331 = vmatprep.subr.bf16.mxu0 0
    %2332 = vmatpush1.bf16.xpose.msra.mxu0 0
    %2333 = vmatprep.mubr.bf16.mxu0 0
    %2334 = vmatmul.mubr.bf16.gmra.mrb[0].mxu0 %v2296
    %v2335 = vpop.f32.mrb[0].mxu0
    %v2336 = vadd.f32 0.0, %v2335
    %v2337 = vpop.f32.mrb[0].mxu0
    %v2338 = vpop.f32.mrb[0].mxu0
    %v2339 = vadd.f32 0.0, %v2338
    %v2340 = vpop.f32.mrb[0].mxu0
    %2341 = vdwg.mxu0
    %2342 = vrot.lane.b32.xlu0 %v1626, 112
    %v2343 = vpop.permute.xlu0 %2342
    %2344 = vrot.lane.b32.xlu0 %v1632, 112
    %v2345 = vpop.permute.xlu0 %2344
    %v2347 = vsel %vm217, %v2343, 0
    %v2350 = vsel %vm217, %v2345, 0
    %2352 = vmatprep.subr.bf16.mxu0 0
    %2353 = vmatpush1.bf16.xpose.msra.mxu0 %v2350
    %2354 = vmatprep.subr.bf16.mxu0 0
    %2355 = vmatpush1.bf16.xpose.msra.mxu0 0
    %2356 = vmatprep.subr.bf16.mxu0 0
    %2357 = vmatpush1.bf16.xpose.msra.mxu0 0
    %2358 = vmatprep.subr.bf16.mxu0 0
    %2359 = vmatpush1.bf16.xpose.msra.mxu0 0
    %2360 = vmatprep.subr.bf16.mxu0 0
    %2361 = vmatpush1.bf16.xpose.msra.mxu0 0
    %2362 = vmatprep.subr.bf16.mxu0 0
    %2363 = vmatpush1.bf16.xpose.msra.mxu0 0
    %2364 = vmatprep.subr.bf16.mxu0 0
    %2365 = vmatpush1.bf16.xpose.msra.mxu0 0
    %2366 = vmatprep.subr.bf16.mxu0 0
    %2367 = vmatpush1.bf16.xpose.msra.mxu0 0
    %2368 = vmatprep.subr.bf16.mxu0 0
    %2369 = vmatpush1.bf16.xpose.msra.mxu0 0
    %2370 = vmatprep.subr.bf16.mxu0 0
    %2371 = vmatpush1.bf16.xpose.msra.mxu0 0
    %2372 = vmatprep.subr.bf16.mxu0 0
    %2373 = vmatpush1.bf16.xpose.msra.mxu0 0
    %2374 = vmatprep.subr.bf16.mxu0 0
    %2375 = vmatpush1.bf16.xpose.msra.mxu0 0
    %2376 = vmatprep.subr.bf16.mxu0 0
    %2377 = vmatpush1.bf16.xpose.msra.mxu0 0
    %2378 = vmatprep.subr.bf16.mxu0 0
    %2379 = vmatpush1.bf16.xpose.msra.mxu0 0
    %2380 = vmatprep.subr.bf16.mxu0 0
    %2381 = vmatpush1.bf16.xpose.msra.mxu0 0
    %2382 = vmatprep.subr.bf16.mxu0 0
    %2383 = vmatpush1.bf16.xpose.msra.mxu0 0
    %2384 = vmatprep.mubr.bf16.mxu0 0
    %2385 = vmatmul.mubr.bf16.gmra.mrb[0].mxu0 %v2347
    %v2386 = vpop.f32.mrb[0].mxu0
    %v2387 = vadd.f32 0.0, %v2386
    %v2388 = vpop.f32.mrb[0].mxu0
    %v2389 = vpop.f32.mrb[0].mxu0
    %v2390 = vadd.f32 0.0, %v2389
    %v2391 = vpop.f32.mrb[0].mxu0
    %2392 = vdwg.mxu0
    %v2393 = vsel %vm217, %v2336, -inf
    %2394 = vmax.xlane.f32.xlu0 %v2393
    %v2395 = vpop.xlane.xlu0 %2394
    %v2396 = vsel %vm217, %v2339, -inf
    %2397 = vmax.xlane.f32.xlu0 %v2396
    %v2398 = vpop.xlane.xlu0 %2397
    %v2399 = vsel %vm217, %v2387, -inf
    %2400 = vmax.xlane.f32.xlu0 %v2399
    %v2401 = vpop.xlane.xlu0 %2400
    %v2402 = vsel %vm217, %v2390, -inf
    %2403 = vmax.xlane.f32.xlu0 %v2402
    %v2404 = vpop.xlane.xlu0 %2403
    %v2405 = vsub.f32 %v2336, %v2395
    %v2406 = vsub.f32 %v2339, %v2398
    %v2407 = vsub.f32 %v2387, %v2401
    %v2408 = vsub.f32 %v2390, %v2404
    %v2409 = vmul.f32 %v2405, 1.442695
    %v2410 = vpow.pop %v2409
    %v2411 = vmul.f32 %v2406, 1.442695
    %v2412 = vpow.pop %v2411
    %v2413 = vmul.f32 %v2407, 1.442695
    %v2414 = vpow.pop %v2413
    %v2415 = vmul.f32 %v2408, 1.442695
    %v2416 = vpow.pop %v2415
    %v2417 = vsel %vm217, %v2410, 0.0
    %2418 = vadd.xlane.f32.xlu0 %v2417
    %v2419 = vpop.xlane.xlu0 %2418
    %v2420 = vsel %vm217, %v2412, 0.0
    %2421 = vadd.xlane.f32.xlu0 %v2420
    %v2422 = vpop.xlane.xlu0 %2421
    %v2423 = vsel %vm217, %v2414, 0.0
    %2424 = vadd.xlane.f32.xlu0 %v2423
    %v2425 = vpop.xlane.xlu0 %2424
    %v2426 = vsel %vm217, %v2416, 0.0
    %2427 = vadd.xlane.f32.xlu0 %v2426
    %v2428 = vpop.xlane.xlu0 %2427
    %v2429 = vrcp.pop %v2419
    %v2430 = vrcp.pop %v2422
    %v2431 = vrcp.pop %v2425
    %v2432 = vrcp.pop %v2428
    %v2433 = vmul.f32 %v2410, %v2429
    %v2434 = vmul.f32 %v2412, %v2430
    %v2435 = vmul.f32 %v2414, %v2431
    %v2436 = vmul.f32 %v2416, %v2432
    %v2437 = vpack.c.bf16 %v2434, %v2433
    %v2438 = vpack.c.bf16 %v2436, %v2435
    %2439 = vrot.lane.b32.xlu0 %v1631, 80
    %v2440 = vpop.permute.xlu0 %2439
    %v2442 = vsel %vm217, %v2437, 0
    %v2445 = vsel %vm439, %v2440, 0
    %2447 = vmatprep.subr.bf16.mxu0 0
    %2448 = vmatpush1.bf16.msra.mxu0 %v2445
    %2449 = vmatprep.subr.bf16.mxu0 0
    %2450 = vmatpush1.bf16.msra.mxu0 0
    %2451 = vmatprep.subr.bf16.mxu0 0
    %2452 = vmatpush1.bf16.msra.mxu0 0
    %2453 = vmatprep.subr.bf16.mxu0 0
    %2454 = vmatpush1.bf16.msra.mxu0 0
    %2455 = vmatprep.subr.bf16.mxu0 0
    %2456 = vmatpush1.bf16.msra.mxu0 0
    %2457 = vmatprep.subr.bf16.mxu0 0
    %2458 = vmatpush1.bf16.msra.mxu0 0
    %2459 = vmatprep.subr.bf16.mxu0 0
    %2460 = vmatpush1.bf16.msra.mxu0 0
    %2461 = vmatprep.subr.bf16.mxu0 0
    %2462 = vmatpush1.bf16.msra.mxu0 0
    %2463 = vmatprep.subr.bf16.mxu0 0
    %2464 = vmatpush1.bf16.msra.mxu0 0
    %2465 = vmatprep.subr.bf16.mxu0 0
    %2466 = vmatpush1.bf16.msra.mxu0 0
    %2467 = vmatprep.subr.bf16.mxu0 0
    %2468 = vmatpush1.bf16.msra.mxu0 0
    %2469 = vmatprep.subr.bf16.mxu0 0
    %2470 = vmatpush1.bf16.msra.mxu0 0
    %2471 = vmatprep.subr.bf16.mxu0 0
    %2472 = vmatpush1.bf16.msra.mxu0 0
    %2473 = vmatprep.subr.bf16.mxu0 0
    %2474 = vmatpush1.bf16.msra.mxu0 0
    %2475 = vmatprep.subr.bf16.mxu0 0
    %2476 = vmatpush1.bf16.msra.mxu0 0
    %2477 = vmatprep.subr.bf16.mxu0 0
    %2478 = vmatpush1.bf16.msra.mxu0 0
    %2479 = vmatprep.mubr.bf16.mxu0 0
    %2480 = vmatmul.mubr.bf16.gmra.mrb[0].mxu0 %v2442
    %v2481 = vpop.f32.mrb[0].mxu0
    %v2482 = vadd.f32 0.0, %v2481
    %v2483 = vpop.f32.mrb[0].mxu0
    %v2484 = vpop.f32.mrb[0].mxu0
    %v2485 = vadd.f32 0.0, %v2484
    %v2486 = vpop.f32.mrb[0].mxu0
    %2487 = vdwg.mxu0
    %2488 = vrot.lane.b32.xlu0 %v1632, 80
    %v2489 = vpop.permute.xlu0 %2488
    %v2491 = vsel %vm217, %v2438, 0
    %v2494 = vsel %vm439, %v2489, 0
    %2496 = vmatprep.subr.bf16.mxu0 0
    %2497 = vmatpush1.bf16.msra.mxu0 %v2494
    %2498 = vmatprep.subr.bf16.mxu0 0
    %2499 = vmatpush1.bf16.msra.mxu0 0
    %2500 = vmatprep.subr.bf16.mxu0 0
    %2501 = vmatpush1.bf16.msra.mxu0 0
    %2502 = vmatprep.subr.bf16.mxu0 0
    %2503 = vmatpush1.bf16.msra.mxu0 0
    %2504 = vmatprep.subr.bf16.mxu0 0
    %2505 = vmatpush1.bf16.msra.mxu0 0
    %2506 = vmatprep.subr.bf16.mxu0 0
    %2507 = vmatpush1.bf16.msra.mxu0 0
    %2508 = vmatprep.subr.bf16.mxu0 0
    %2509 = vmatpush1.bf16.msra.mxu0 0
    %2510 = vmatprep.subr.bf16.mxu0 0
    %2511 = vmatpush1.bf16.msra.mxu0 0
    %2512 = vmatprep.subr.bf16.mxu0 0
    %2513 = vmatpush1.bf16.msra.mxu0 0
    %2514 = vmatprep.subr.bf16.mxu0 0
    %2515 = vmatpush1.bf16.msra.mxu0 0
    %2516 = vmatprep.subr.bf16.mxu0 0
    %2517 = vmatpush1.bf16.msra.mxu0 0
    %2518 = vmatprep.subr.bf16.mxu0 0
    %2519 = vmatpush1.bf16.msra.mxu0 0
    %2520 = vmatprep.subr.bf16.mxu0 0
    %2521 = vmatpush1.bf16.msra.mxu0 0
    %2522 = vmatprep.subr.bf16.mxu0 0
    %2523 = vmatpush1.bf16.msra.mxu0 0
    %2524 = vmatprep.subr.bf16.mxu0 0
    %2525 = vmatpush1.bf16.msra.mxu0 0
    %2526 = vmatprep.subr.bf16.mxu0 0
    %2527 = vmatpush1.bf16.msra.mxu0 0
    %2528 = vmatprep.mubr.bf16.mxu0 0
    %2529 = vmatmul.mubr.bf16.gmra.mrb[0].mxu0 %v2491
    %v2530 = vpop.f32.mrb[0].mxu0
    %v2531 = vadd.f32 0.0, %v2530
    %v2532 = vpop.f32.mrb[0].mxu0
    %v2533 = vpop.f32.mrb[0].mxu0
    %v2534 = vadd.f32 0.0, %v2533
    %v2535 = vpop.f32.mrb[0].mxu0
    %2536 = vdwg.mxu0
    %v2537 = vpack.c.bf16 %v2485, %v2482
    %v2538 = vpack.c.bf16 %v2534, %v2531
    %v2539 = vld [vmem:[%s1501 + $0x8] sm:$0xf]
    %v2541 = vunpack.c.l.b16 %v2539
    %v2542 = vpack.c.b16 %v2541, %v2541
    %2543 = vrot.lane.b32.xlu0 %v2542, 32
    %v2544 = vpop.permute.xlu0 %2543
    %v2546 = vsel %vm217, %v2537, 0
    %v2549 = vsel %vm217, %v2538, 0
    %v2552 = vsel %vm439, %v2544, 0
    %2554 = vmatprep.subr.bf16.mxu0 0
    %2555 = vmatpush1.bf16.msra.mxu0 %v2552
    %2556 = vmatprep.subr.bf16.mxu0 0
    %2557 = vmatpush1.bf16.msra.mxu0 0
    %2558 = vmatprep.subr.bf16.mxu0 0
    %2559 = vmatpush1.bf16.msra.mxu0 0
    %2560 = vmatprep.subr.bf16.mxu0 0
    %2561 = vmatpush1.bf16.msra.mxu0 0
    %2562 = vmatprep.subr.bf16.mxu0 0
    %2563 = vmatpush1.bf16.msra.mxu0 0
    %2564 = vmatprep.subr.bf16.mxu0 0
    %2565 = vmatpush1.bf16.msra.mxu0 0
    %2566 = vmatprep.subr.bf16.mxu0 0
    %2567 = vmatpush1.bf16.msra.mxu0 0
    %2568 = vmatprep.subr.bf16.mxu0 0
    %2569 = vmatpush1.bf16.msra.mxu0 0
    %2570 = vmatprep.subr.bf16.mxu0 0
    %2571 = vmatpush1.bf16.msra.mxu0 0
    %2572 = vmatprep.subr.bf16.mxu0 0
    %2573 = vmatpush1.bf16.msra.mxu0 0
    %2574 = vmatprep.subr.bf16.mxu0 0
    %2575 = vmatpush1.bf16.msra.mxu0 0
    %2576 = vmatprep.subr.bf16.mxu0 0
    %2577 = vmatpush1.bf16.msra.mxu0 0
    %2578 = vmatprep.subr.bf16.mxu0 0
    %2579 = vmatpush1.bf16.msra.mxu0 0
    %2580 = vmatprep.subr.bf16.mxu0 0
    %2581 = vmatpush1.bf16.msra.mxu0 0
    %2582 = vmatprep.subr.bf16.mxu0 0
    %2583 = vmatpush1.bf16.msra.mxu0 0
    %2584 = vmatprep.subr.bf16.mxu0 0
    %2585 = vmatpush1.bf16.msra.mxu0 0
    %2586 = vmatprep.mubr.bf16.mxu0 0
    %2587 = vmatmul.mubr.bf16.gmra.mrb[0].mxu0 %v2546
    %v2588 = vpop.f32.mrb[0].mxu0
    %v2589 = vadd.f32 0.0, %v2588
    %v2590 = vpop.f32.mrb[0].mxu0
    %v2591 = vpop.f32.mrb[0].mxu0
    %v2592 = vadd.f32 0.0, %v2591
    %v2593 = vpop.f32.mrb[0].mxu0
    %2594 = vmatprep.mubr.bf16.mxu0 0
    %2595 = vmatmul.mubr.bf16.gmra.mrb[0].mxu0 %v2549
    %v2596 = vpop.f32.mrb[0].mxu0
    %v2597 = vadd.f32 0.0, %v2596
    %v2598 = vpop.f32.mrb[0].mxu0
    %v2599 = vpop.f32.mrb[0].mxu0
    %v2600 = vadd.f32 0.0, %v2599
    %v2601 = vpop.f32.mrb[0].mxu0
    %2602 = vdwg.mxu0
    %2607 = vrot.lane.b32.xlu0 %v2589, 96
    %v2608 = vpop.permute.xlu0 %2607
    %2609 = vrot.lane.b32.xlu0 %v2592, 96
    %v2610 = vpop.permute.xlu0 %2609
    %2611 = vrot.lane.b32.xlu0 %v2597, 96
    %v2612 = vpop.permute.xlu0 %2611
    %2613 = vrot.lane.b32.xlu0 %v2600, 96
    %v2614 = vpop.permute.xlu0 %2613
    %v2619 = vadd.f32 %v2287, %v2608
    %v2620 = vadd.f32 %v2288, %v2610
    %v2621 = vadd.f32 %v2289, %v2612
    %v2622 = vadd.f32 %v2290, %v2614
    %2623 = vrot.lane.b32.xlu0 %v1625, 104
    %v2624 = vpop.permute.xlu0 %2623
    %2625 = vrot.lane.b32.xlu0 %v1631, 104
    %v2626 = vpop.permute.xlu0 %2625
    %v2628 = vsel %vm217, %v2624, 0
    %v2631 = vsel %vm217, %v2626, 0
    %2633 = vmatprep.subr.bf16.mxu0 0
    %2634 = vmatpush1.bf16.xpose.msra.mxu0 %v2631
    %2635 = vmatprep.subr.bf16.mxu0 0
    %2636 = vmatpush1.bf16.xpose.msra.mxu0 0
    %2637 = vmatprep.subr.bf16.mxu0 0
    %2638 = vmatpush1.bf16.xpose.msra.mxu0 0
    %2639 = vmatprep.subr.bf16.mxu0 0
    %2640 = vmatpush1.bf16.xpose.msra.mxu0 0
    %2641 = vmatprep.subr.bf16.mxu0 0
    %2642 = vmatpush1.bf16.xpose.msra.mxu0 0
    %2643 = vmatprep.subr.bf16.mxu0 0
    %2644 = vmatpush1.bf16.xpose.msra.mxu0 0
    %2645 = vmatprep.subr.bf16.mxu0 0
    %2646 = vmatpush1.bf16.xpose.msra.mxu0 0
    %2647 = vmatprep.subr.bf16.mxu0 0
    %2648 = vmatpush1.bf16.xpose.msra.mxu0 0
    %2649 = vmatprep.subr.bf16.mxu0 0
    %2650 = vmatpush1.bf16.xpose.msra.mxu0 0
    %2651 = vmatprep.subr.bf16.mxu0 0
    %2652 = vmatpush1.bf16.xpose.msra.mxu0 0
    %2653 = vmatprep.subr.bf16.mxu0 0
    %2654 = vmatpush1.bf16.xpose.msra.mxu0 0
    %2655 = vmatprep.subr.bf16.mxu0 0
    %2656 = vmatpush1.bf16.xpose.msra.mxu0 0
    %2657 = vmatprep.subr.bf16.mxu0 0
    %2658 = vmatpush1.bf16.xpose.msra.mxu0 0
    %2659 = vmatprep.subr.bf16.mxu0 0
    %2660 = vmatpush1.bf16.xpose.msra.mxu0 0
    %2661 = vmatprep.subr.bf16.mxu0 0
    %2662 = vmatpush1.bf16.xpose.msra.mxu0 0
    %2663 = vmatprep.subr.bf16.mxu0 0
    %2664 = vmatpush1.bf16.xpose.msra.mxu0 0
    %2665 = vmatprep.mubr.bf16.mxu0 0
    %2666 = vmatmul.mubr.bf16.gmra.mrb[0].mxu0 %v2628
    %v2667 = vpop.f32.mrb[0].mxu0
    %v2668 = vadd.f32 0.0, %v2667
    %v2669 = vpop.f32.mrb[0].mxu0
    %v2670 = vpop.f32.mrb[0].mxu0
    %v2671 = vadd.f32 0.0, %v2670
    %v2672 = vpop.f32.mrb[0].mxu0
    %2673 = vdwg.mxu0
    %2674 = vrot.lane.b32.xlu0 %v1626, 104
    %v2675 = vpop.permute.xlu0 %2674
    %2676 = vrot.lane.b32.xlu0 %v1632, 104
    %v2677 = vpop.permute.xlu0 %2676
    %v2679 = vsel %vm217, %v2675, 0
    %v2682 = vsel %vm217, %v2677, 0
    %2684 = vmatprep.subr.bf16.mxu0 0
    %2685 = vmatpush1.bf16.xpose.msra.mxu0 %v2682
    %2686 = vmatprep.subr.bf16.mxu0 0
    %2687 = vmatpush1.bf16.xpose.msra.mxu0 0
    %2688 = vmatprep.subr.bf16.mxu0 0
    %2689 = vmatpush1.bf16.xpose.msra.mxu0 0
    %2690 = vmatprep.subr.bf16.mxu0 0
    %2691 = vmatpush1.bf16.xpose.msra.mxu0 0
    %2692 = vmatprep.subr.bf16.mxu0 0
    %2693 = vmatpush1.bf16.xpose.msra.mxu0 0
    %2694 = vmatprep.subr.bf16.mxu0 0
    %2695 = vmatpush1.bf16.xpose.msra.mxu0 0
    %2696 = vmatprep.subr.bf16.mxu0 0
    %2697 = vmatpush1.bf16.xpose.msra.mxu0 0
    %2698 = vmatprep.subr.bf16.mxu0 0
    %2699 = vmatpush1.bf16.xpose.msra.mxu0 0
    %2700 = vmatprep.subr.bf16.mxu0 0
    %2701 = vmatpush1.bf16.xpose.msra.mxu0 0
    %2702 = vmatprep.subr.bf16.mxu0 0
    %2703 = vmatpush1.bf16.xpose.msra.mxu0 0
    %2704 = vmatprep.subr.bf16.mxu0 0
    %2705 = vmatpush1.bf16.xpose.msra.mxu0 0
    %2706 = vmatprep.subr.bf16.mxu0 0
    %2707 = vmatpush1.bf16.xpose.msra.mxu0 0
    %2708 = vmatprep.subr.bf16.mxu0 0
    %2709 = vmatpush1.bf16.xpose.msra.mxu0 0
    %2710 = vmatprep.subr.bf16.mxu0 0
    %2711 = vmatpush1.bf16.xpose.msra.mxu0 0
    %2712 = vmatprep.subr.bf16.mxu0 0
    %2713 = vmatpush1.bf16.xpose.msra.mxu0 0
    %2714 = vmatprep.subr.bf16.mxu0 0
    %2715 = vmatpush1.bf16.xpose.msra.mxu0 0
    %2716 = vmatprep.mubr.bf16.mxu0 0
    %2717 = vmatmul.mubr.bf16.gmra.mrb[0].mxu0 %v2679
    %v2718 = vpop.f32.mrb[0].mxu0
    %v2719 = vadd.f32 0.0, %v2718
    %v2720 = vpop.f32.mrb[0].mxu0
    %v2721 = vpop.f32.mrb[0].mxu0
    %v2722 = vadd.f32 0.0, %v2721
    %v2723 = vpop.f32.mrb[0].mxu0
    %2724 = vdwg.mxu0
    %v2725 = vsel %vm217, %v2668, -inf
    %2726 = vmax.xlane.f32.xlu0 %v2725
    %v2727 = vpop.xlane.xlu0 %2726
    %v2728 = vsel %vm217, %v2671, -inf
    %2729 = vmax.xlane.f32.xlu0 %v2728
    %v2730 = vpop.xlane.xlu0 %2729
    %v2731 = vsel %vm217, %v2719, -inf
    %2732 = vmax.xlane.f32.xlu0 %v2731
    %v2733 = vpop.xlane.xlu0 %2732
    %v2734 = vsel %vm217, %v2722, -inf
    %2735 = vmax.xlane.f32.xlu0 %v2734
    %v2736 = vpop.xlane.xlu0 %2735
    %v2737 = vsub.f32 %v2668, %v2727
    %v2738 = vsub.f32 %v2671, %v2730
    %v2739 = vsub.f32 %v2719, %v2733
    %v2740 = vsub.f32 %v2722, %v2736
    %v2741 = vmul.f32 %v2737, 1.442695
    %v2742 = vpow.pop %v2741
    %v2743 = vmul.f32 %v2738, 1.442695
    %v2744 = vpow.pop %v2743
    %v2745 = vmul.f32 %v2739, 1.442695
    %v2746 = vpow.pop %v2745
    %v2747 = vmul.f32 %v2740, 1.442695
    %v2748 = vpow.pop %v2747
    %v2749 = vsel %vm217, %v2742, 0.0
    %2750 = vadd.xlane.f32.xlu0 %v2749
    %v2751 = vpop.xlane.xlu0 %2750
    %v2752 = vsel %vm217, %v2744, 0.0
    %2753 = vadd.xlane.f32.xlu0 %v2752
    %v2754 = vpop.xlane.xlu0 %2753
    %v2755 = vsel %vm217, %v2746, 0.0
    %2756 = vadd.xlane.f32.xlu0 %v2755
    %v2757 = vpop.xlane.xlu0 %2756
    %v2758 = vsel %vm217, %v2748, 0.0
    %2759 = vadd.xlane.f32.xlu0 %v2758
    %v2760 = vpop.xlane.xlu0 %2759
    %v2761 = vrcp.pop %v2751
    %v2762 = vrcp.pop %v2754
    %v2763 = vrcp.pop %v2757
    %v2764 = vrcp.pop %v2760
    %v2765 = vmul.f32 %v2742, %v2761
    %v2766 = vmul.f32 %v2744, %v2762
    %v2767 = vmul.f32 %v2746, %v2763
    %v2768 = vmul.f32 %v2748, %v2764
    %v2769 = vpack.c.bf16 %v2766, %v2765
    %v2770 = vpack.c.bf16 %v2768, %v2767
    %2771 = vrot.lane.b32.xlu0 %v1631, 72
    %v2772 = vpop.permute.xlu0 %2771
    %v2774 = vsel %vm217, %v2769, 0
    %v2777 = vsel %vm439, %v2772, 0
    %2779 = vmatprep.subr.bf16.mxu0 0
    %2780 = vmatpush1.bf16.msra.mxu0 %v2777
    %2781 = vmatprep.subr.bf16.mxu0 0
    %2782 = vmatpush1.bf16.msra.mxu0 0
    %2783 = vmatprep.subr.bf16.mxu0 0
    %2784 = vmatpush1.bf16.msra.mxu0 0
    %2785 = vmatprep.subr.bf16.mxu0 0
    %2786 = vmatpush1.bf16.msra.mxu0 0
    %2787 = vmatprep.subr.bf16.mxu0 0
    %2788 = vmatpush1.bf16.msra.mxu0 0
    %2789 = vmatprep.subr.bf16.mxu0 0
    %2790 = vmatpush1.bf16.msra.mxu0 0
    %2791 = vmatprep.subr.bf16.mxu0 0
    %2792 = vmatpush1.bf16.msra.mxu0 0
    %2793 = vmatprep.subr.bf16.mxu0 0
    %2794 = vmatpush1.bf16.msra.mxu0 0
    %2795 = vmatprep.subr.bf16.mxu0 0
    %2796 = vmatpush1.bf16.msra.mxu0 0
    %2797 = vmatprep.subr.bf16.mxu0 0
    %2798 = vmatpush1.bf16.msra.mxu0 0
    %2799 = vmatprep.subr.bf16.mxu0 0
    %2800 = vmatpush1.bf16.msra.mxu0 0
    %2801 = vmatprep.subr.bf16.mxu0 0
    %2802 = vmatpush1.bf16.msra.mxu0 0
    %2803 = vmatprep.subr.bf16.mxu0 0
    %2804 = vmatpush1.bf16.msra.mxu0 0
    %2805 = vmatprep.subr.bf16.mxu0 0
    %2806 = vmatpush1.bf16.msra.mxu0 0
    %2807 = vmatprep.subr.bf16.mxu0 0
    %2808 = vmatpush1.bf16.msra.mxu0 0
    %2809 = vmatprep.subr.bf16.mxu0 0
    %2810 = vmatpush1.bf16.msra.mxu0 0
    %2811 = vmatprep.mubr.bf16.mxu0 0
    %2812 = vmatmul.mubr.bf16.gmra.mrb[0].mxu0 %v2774
    %v2813 = vpop.f32.mrb[0].mxu0
    %v2814 = vadd.f32 0.0, %v2813
    %v2815 = vpop.f32.mrb[0].mxu0
    %v2816 = vpop.f32.mrb[0].mxu0
    %v2817 = vadd.f32 0.0, %v2816
    %v2818 = vpop.f32.mrb[0].mxu0
    %2819 = vdwg.mxu0
    %2820 = vrot.lane.b32.xlu0 %v1632, 72
    %v2821 = vpop.permute.xlu0 %2820
    %v2823 = vsel %vm217, %v2770, 0
    %v2826 = vsel %vm439, %v2821, 0
    %2828 = vmatprep.subr.bf16.mxu0 0
    %2829 = vmatpush1.bf16.msra.mxu0 %v2826
    %2830 = vmatprep.subr.bf16.mxu0 0
    %2831 = vmatpush1.bf16.msra.mxu0 0
    %2832 = vmatprep.subr.bf16.mxu0 0
    %2833 = vmatpush1.bf16.msra.mxu0 0
    %2834 = vmatprep.subr.bf16.mxu0 0
    %2835 = vmatpush1.bf16.msra.mxu0 0
    %2836 = vmatprep.subr.bf16.mxu0 0
    %2837 = vmatpush1.bf16.msra.mxu0 0
    %2838 = vmatprep.subr.bf16.mxu0 0
    %2839 = vmatpush1.bf16.msra.mxu0 0
    %2840 = vmatprep.subr.bf16.mxu0 0
    %2841 = vmatpush1.bf16.msra.mxu0 0
    %2842 = vmatprep.subr.bf16.mxu0 0
    %2843 = vmatpush1.bf16.msra.mxu0 0
    %2844 = vmatprep.subr.bf16.mxu0 0
    %2845 = vmatpush1.bf16.msra.mxu0 0
    %2846 = vmatprep.subr.bf16.mxu0 0
    %2847 = vmatpush1.bf16.msra.mxu0 0
    %2848 = vmatprep.subr.bf16.mxu0 0
    %2849 = vmatpush1.bf16.msra.mxu0 0
    %2850 = vmatprep.subr.bf16.mxu0 0
    %2851 = vmatpush1.bf16.msra.mxu0 0
    %2852 = vmatprep.subr.bf16.mxu0 0
    %2853 = vmatpush1.bf16.msra.mxu0 0
    %2854 = vmatprep.subr.bf16.mxu0 0
    %2855 = vmatpush1.bf16.msra.mxu0 0
    %2856 = vmatprep.subr.bf16.mxu0 0
    %2857 = vmatpush1.bf16.msra.mxu0 0
    %2858 = vmatprep.subr.bf16.mxu0 0
    %2859 = vmatpush1.bf16.msra.mxu0 0
    %2860 = vmatprep.mubr.bf16.mxu0 0
    %2861 = vmatmul.mubr.bf16.gmra.mrb[0].mxu0 %v2823
    %v2862 = vpop.f32.mrb[0].mxu0
    %v2863 = vadd.f32 0.0, %v2862
    %v2864 = vpop.f32.mrb[0].mxu0
    %v2865 = vpop.f32.mrb[0].mxu0
    %v2866 = vadd.f32 0.0, %v2865
    %v2867 = vpop.f32.mrb[0].mxu0
    %2868 = vdwg.mxu0
    %v2869 = vpack.c.bf16 %v2817, %v2814
    %v2870 = vpack.c.bf16 %v2866, %v2863
    %v2871 = vld [vmem:[%s1501 + $0xc] sm:$0xf]
    %v2873 = vunpack.c.l.b16 %v2871
    %v2874 = vpack.c.b16 %v2873, %v2873
    %2875 = vrot.lane.b32.xlu0 %v2874, 32
    %v2876 = vpop.permute.xlu0 %2875
    %v2878 = vsel %vm217, %v2869, 0
    %v2881 = vsel %vm217, %v2870, 0
    %v2884 = vsel %vm439, %v2876, 0
    %2886 = vmatprep.subr.bf16.mxu0 0
    %2887 = vmatpush1.bf16.msra.mxu0 %v2884
    %2888 = vmatprep.subr.bf16.mxu0 0
    %2889 = vmatpush1.bf16.msra.mxu0 0
    %2890 = vmatprep.subr.bf16.mxu0 0
    %2891 = vmatpush1.bf16.msra.mxu0 0
    %2892 = vmatprep.subr.bf16.mxu0 0
    %2893 = vmatpush1.bf16.msra.mxu0 0
    %2894 = vmatprep.subr.bf16.mxu0 0
    %2895 = vmatpush1.bf16.msra.mxu0 0
    %2896 = vmatprep.subr.bf16.mxu0 0
    %2897 = vmatpush1.bf16.msra.mxu0 0
    %2898 = vmatprep.subr.bf16.mxu0 0
    %2899 = vmatpush1.bf16.msra.mxu0 0
    %2900 = vmatprep.subr.bf16.mxu0 0
    %2901 = vmatpush1.bf16.msra.mxu0 0
    %2902 = vmatprep.subr.bf16.mxu0 0
    %2903 = vmatpush1.bf16.msra.mxu0 0
    %2904 = vmatprep.subr.bf16.mxu0 0
    %2905 = vmatpush1.bf16.msra.mxu0 0
    %2906 = vmatprep.subr.bf16.mxu0 0
    %2907 = vmatpush1.bf16.msra.mxu0 0
    %2908 = vmatprep.subr.bf16.mxu0 0
    %2909 = vmatpush1.bf16.msra.mxu0 0
    %2910 = vmatprep.subr.bf16.mxu0 0
    %2911 = vmatpush1.bf16.msra.mxu0 0
    %2912 = vmatprep.subr.bf16.mxu0 0
    %2913 = vmatpush1.bf16.msra.mxu0 0
    %2914 = vmatprep.subr.bf16.mxu0 0
    %2915 = vmatpush1.bf16.msra.mxu0 0
    %2916 = vmatprep.subr.bf16.mxu0 0
    %2917 = vmatpush1.bf16.msra.mxu0 0
    %2918 = vmatprep.mubr.bf16.mxu0 0
    %2919 = vmatmul.mubr.bf16.gmra.mrb[0].mxu0 %v2878
    %v2920 = vpop.f32.mrb[0].mxu0
    %v2921 = vadd.f32 0.0, %v2920
    %v2922 = vpop.f32.mrb[0].mxu0
    %v2923 = vpop.f32.mrb[0].mxu0
    %v2924 = vadd.f32 0.0, %v2923
    %v2925 = vpop.f32.mrb[0].mxu0
    %2926 = vmatprep.mubr.bf16.mxu0 0
    %2927 = vmatmul.mubr.bf16.gmra.mrb[0].mxu0 %v2881
    %v2928 = vpop.f32.mrb[0].mxu0
    %v2929 = vadd.f32 0.0, %v2928
    %v2930 = vpop.f32.mrb[0].mxu0
    %v2931 = vpop.f32.mrb[0].mxu0
    %v2932 = vadd.f32 0.0, %v2931
    %v2933 = vpop.f32.mrb[0].mxu0
    %2934 = vdwg.mxu0
    %2939 = vrot.lane.b32.xlu0 %v2921, 96
    %v2940 = vpop.permute.xlu0 %2939
    %2941 = vrot.lane.b32.xlu0 %v2924, 96
    %v2942 = vpop.permute.xlu0 %2941
    %2943 = vrot.lane.b32.xlu0 %v2929, 96
    %v2944 = vpop.permute.xlu0 %2943
    %2945 = vrot.lane.b32.xlu0 %v2932, 96
    %v2946 = vpop.permute.xlu0 %2945
    %v2951 = vadd.f32 %v2619, %v2940
    %v2952 = vadd.f32 %v2620, %v2942
    %v2953 = vadd.f32 %v2621, %v2944
    %v2954 = vadd.f32 %v2622, %v2946
    %2959 = vrot.lane.b32.xlu0 %v2951, 32
    %v2960 = vpop.permute.xlu0 %2959
    %2961 = vrot.lane.b32.xlu0 %v2952, 32
    %v2962 = vpop.permute.xlu0 %2961
    %2963 = vrot.lane.b32.xlu0 %v2953, 32
    %v2964 = vpop.permute.xlu0 %2963
    %2965 = vrot.lane.b32.xlu0 %v2954, 32
    %v2966 = vpop.permute.xlu0 %2965
    %v2971 = vadd.f32 %v70, %v2960
    %v2972 = vadd.f32 %v71, %v2962
    %v2973 = vadd.f32 %v72, %v2964
    %v2974 = vadd.f32 %v73, %v2966
    %v2975 = vpack.c.bf16 %v2972, %v2971
    %v2976 = vpack.c.bf16 %v2974, %v2973
    %s2977 = scalar_lea.vmem %s4, 16
    %v2978 = vld [vmem:[%s2977] sm:$0xf]
    %v2979 = vld [vmem:[%s2977 + $0x4] sm:$0xf]
    %v2980 = vld [vmem:[%s2977 + $0x8] sm:$0xf]
    %v2981 = vld [vmem:[%s2977 + $0xc] sm:$0xf]
    %s2982 = scalar_lea.vmem %s5, 1
    %v2983 = vld [vmem:[%s2982] sm:$0x1]
    %v2985 = vlaneseq
    %v2986 = vshrl.u32 %v2985, 7
    %v2987 = vsub.s32 0, %v2986
    %v2988 = vrot.slane %v2983, %v2987
    %v2994 = vunpack.c.l.b16 %v2978
    %v2995 = vunpack.c.l.b16 %v2979
    %v2996 = vunpack.c.l.b16 %v2980
    %v2997 = vunpack.c.l.b16 %v2981
    %v2998 = vpack.c.b16 %v2995, %v2994
    %v2999 = vpack.c.b16 %v2997, %v2996
    %v3003 = vsel %vm100, %v2975, 0
    %v3006 = vsel %vm100, %v2976, 0
    %3008 = vmatprep.subr.bf16.mxu0 0
    %3009 = vmatpush1.bf16.msra.mxu0 %v2998
    %3010 = vmatprep.subr.bf16.mxu0 0
    %3011 = vmatpush1.bf16.msra.mxu0 %v2999
    %3012 = vmatprep.subr.bf16.mxu0 0
    %3013 = vmatpush1.bf16.msra.mxu0 0
    %3014 = vmatprep.subr.bf16.mxu0 0
    %3015 = vmatpush1.bf16.msra.mxu0 0
    %3016 = vmatprep.subr.bf16.mxu0 0
    %3017 = vmatpush1.bf16.msra.mxu0 0
    %3018 = vmatprep.subr.bf16.mxu0 0
    %3019 = vmatpush1.bf16.msra.mxu0 0
    %3020 = vmatprep.subr.bf16.mxu0 0
    %3021 = vmatpush1.bf16.msra.mxu0 0
    %3022 = vmatprep.subr.bf16.mxu0 0
    %3023 = vmatpush1.bf16.msra.mxu0 0
    %3024 = vmatprep.subr.bf16.mxu0 0
    %3025 = vmatpush1.bf16.msra.mxu0 0
    %3026 = vmatprep.subr.bf16.mxu0 0
    %3027 = vmatpush1.bf16.msra.mxu0 0
    %3028 = vmatprep.subr.bf16.mxu0 0
    %3029 = vmatpush1.bf16.msra.mxu0 0
    %3030 = vmatprep.subr.bf16.mxu0 0
    %3031 = vmatpush1.bf16.msra.mxu0 0
    %3032 = vmatprep.subr.bf16.mxu0 0
    %3033 = vmatpush1.bf16.msra.mxu0 0
    %3034 = vmatprep.subr.bf16.mxu0 0
    %3035 = vmatpush1.bf16.msra.mxu0 0
    %3036 = vmatprep.subr.bf16.mxu0 0
    %3037 = vmatpush1.bf16.msra.mxu0 0
    %3038 = vmatprep.subr.bf16.mxu0 0
    %3039 = vmatpush1.bf16.msra.mxu0 0
    %3040 = vmatprep.mubr.bf16.mxu0 0
    %3041 = vmatmul.mubr.bf16.gmra.mrb[0].mxu0 %v3003
    %v3042 = vpop.f32.mrb[0].mxu0
    %v3043 = vadd.f32 %v2988, %v3042
    %v3044 = vpop.f32.mrb[0].mxu0
    %v3045 = vpop.f32.mrb[0].mxu0
    %v3046 = vadd.f32 %v2988, %v3045
    %v3047 = vpop.f32.mrb[0].mxu0
    %3048 = vmatprep.mubr.bf16.mxu0 0
    %3049 = vmatmul.mubr.bf16.gmra.mrb[0].mxu0 %v3006
    %v3050 = vpop.f32.mrb[0].mxu0
    %v3051 = vadd.f32 %v2988, %v3050
    %v3052 = vpop.f32.mrb[0].mxu0
    %v3053 = vpop.f32.mrb[0].mxu0
    %v3054 = vadd.f32 %v2988, %v3053
    %v3055 = vpop.f32.mrb[0].mxu0
    %3056 = vdwg.mxu0
    %v3057 = vmax.f32 %v3043, 0.0
    %v3058 = vmax.f32 %v3046, 0.0
    %v3059 = vmax.f32 %v3051, 0.0
    %v3060 = vmax.f32 %v3054, 0.0
    %v3061 = vpack.c.bf16 %v3058, %v3057
    %v3062 = vpack.c.bf16 %v3060, %v3059
    %s3063 = scalar_lea.vmem %s6, 32
    %v3064 = vld [vmem:[%s3063] sm:$0xf]
    %v3065 = vld [vmem:[%s3063 + $0x4] sm:$0xf]
    %v3066 = vld [vmem:[%s3063 + $0x8] sm:$0xf]
    %v3067 = vld [vmem:[%s3063 + $0xc] sm:$0xf]
    %v3068 = vld [vmem:[%s3063 + $0x10] sm:$0xf]
    %v3069 = vld [vmem:[%s3063 + $0x14] sm:$0xf]
    %v3070 = vld [vmem:[%s3063 + $0x18] sm:$0xf]
    %v3071 = vld [vmem:[%s3063 + $0x1c] sm:$0xf]
    %s3072 = scalar_lea.vmem %s7, 1
    %v3073 = vld [vmem:[%s3072] sm:$0x1]
    %v3075 = vlaneseq
    %v3076 = vshrl.u32 %v3075, 7
    %v3077 = vsub.s32 0, %v3076
    %v3078 = vrot.slane %v3073, %v3077
    %v3088 = vunpack.c.l.b16 %v3064
    %v3089 = vunpack.c.l.b16 %v3065
    %v3090 = vunpack.c.l.b16 %v3066
    %v3091 = vunpack.c.l.b16 %v3067
    %v3092 = vunpack.c.l.b16 %v3068
    %v3093 = vunpack.c.l.b16 %v3069
    %v3094 = vunpack.c.l.b16 %v3070
    %v3095 = vunpack.c.l.b16 %v3071
    %v3096 = vpack.c.b16 %v3089, %v3088
    %v3097 = vpack.c.b16 %v3091, %v3090
    %v3098 = vpack.c.b16 %v3093, %v3092
    %v3099 = vpack.c.b16 %v3095, %v3094
    %v3105 = vsel %vm1454, %v3061, 0
    %v3108 = vsel %vm1454, %v3062, 0
    %3110 = vmatprep.subr.bf16.mxu0 0
    %3111 = vmatpush1.bf16.msra.mxu0 %v3096
    %3112 = vmatprep.subr.bf16.mxu0 0
    %3113 = vmatpush1.bf16.msra.mxu0 %v3097
    %3114 = vmatprep.subr.bf16.mxu0 0
    %3115 = vmatpush1.bf16.msra.mxu0 %v3098
    %3116 = vmatprep.subr.bf16.mxu0 0
    %3117 = vmatpush1.bf16.msra.mxu0 %v3099
    %3118 = vmatprep.subr.bf16.mxu0 0
    %3119 = vmatpush1.bf16.msra.mxu0 0
    %3120 = vmatprep.subr.bf16.mxu0 0
    %3121 = vmatpush1.bf16.msra.mxu0 0
    %3122 = vmatprep.subr.bf16.mxu0 0
    %3123 = vmatpush1.bf16.msra.mxu0 0
    %3124 = vmatprep.subr.bf16.mxu0 0
    %3125 = vmatpush1.bf16.msra.mxu0 0
    %3126 = vmatprep.subr.bf16.mxu0 0
    %3127 = vmatpush1.bf16.msra.mxu0 0
    %3128 = vmatprep.subr.bf16.mxu0 0
    %3129 = vmatpush1.bf16.msra.mxu0 0
    %3130 = vmatprep.subr.bf16.mxu0 0
    %3131 = vmatpush1.bf16.msra.mxu0 0
    %3132 = vmatprep.subr.bf16.mxu0 0
    %3133 = vmatpush1.bf16.msra.mxu0 0
    %3134 = vmatprep.subr.bf16.mxu0 0
    %3135 = vmatpush1.bf16.msra.mxu0 0
    %3136 = vmatprep.subr.bf16.mxu0 0
    %3137 = vmatpush1.bf16.msra.mxu0 0
    %3138 = vmatprep.subr.bf16.mxu0 0
    %3139 = vmatpush1.bf16.msra.mxu0 0
    %3140 = vmatprep.subr.bf16.mxu0 0
    %3141 = vmatpush1.bf16.msra.mxu0 0
    %3142 = vmatprep.mubr.bf16.mxu0 0
    %3143 = vmatmul.mubr.bf16.gmra.mrb[0].mxu0 %v3105
    %v3144 = vpop.f32.mrb[0].mxu0
    %v3145 = vadd.f32 %v3078, %v3144
    %v3146 = vpop.f32.mrb[0].mxu0
    %v3147 = vpop.f32.mrb[0].mxu0
    %v3148 = vadd.f32 %v3078, %v3147
    %v3149 = vpop.f32.mrb[0].mxu0
    %3150 = vmatprep.mubr.bf16.mxu0 0
    %3151 = vmatmul.mubr.bf16.gmra.mrb[0].mxu0 %v3108
    %v3152 = vpop.f32.mrb[0].mxu0
    %v3153 = vadd.f32 %v3078, %v3152
    %v3154 = vpop.f32.mrb[0].mxu0
    %v3155 = vpop.f32.mrb[0].mxu0
    %v3156 = vadd.f32 %v3078, %v3155
    %v3157 = vpop.f32.mrb[0].mxu0
    %3158 = vdwg.mxu0
    %v3159 = vadd.f32 %v2971, %v3145
    %v3160 = vadd.f32 %v2972, %v3148
    %v3161 = vadd.f32 %v2973, %v3153
    %v3162 = vadd.f32 %v2974, %v3156
    %v3163 = vpack.c.bf16 %v1500, %v1499
    %v3164 = vld [vmem:[#allocation5] sm:$0xf]
    %v3165 = vld [vmem:[#allocation5 + $0x4] sm:$0xf]
    %v3166 = vld [vmem:[#allocation5 + $0x8] sm:$0xf]
    %v3167 = vld [vmem:[#allocation5 + $0xc] sm:$0xf]
    %v3172 = vunpack.c.l.b16 %v3164
    %v3173 = vunpack.c.l.b16 %v3165
    %v3174 = vunpack.c.l.b16 %v3166
    %v3175 = vunpack.c.l.b16 %v3167
    %v3176 = vpack.c.b16 %v3173, %v3172
    %v3177 = vpack.c.b16 %v3175, %v3174
    %v3181 = vsel %vm100, %v3163, 0
    %3183 = vmatprep.subr.bf16.mxu0 0
    %3184 = vmatpush1.bf16.msra.mxu0 %v3176
    %3185 = vmatprep.subr.bf16.mxu0 0
    %3186 = vmatpush1.bf16.msra.mxu0 %v3177
    %3187 = vmatprep.subr.bf16.mxu0 0
    %3188 = vmatpush1.bf16.msra.mxu0 0
    %3189 = vmatprep.subr.bf16.mxu0 0
    %3190 = vmatpush1.bf16.msra.mxu0 0
    %3191 = vmatprep.subr.bf16.mxu0 0
    %3192 = vmatpush1.bf16.msra.mxu0 0
    %3193 = vmatprep.subr.bf16.mxu0 0
    %3194 = vmatpush1.bf16.msra.mxu0 0
    %3195 = vmatprep.subr.bf16.mxu0 0
    %3196 = vmatpush1.bf16.msra.mxu0 0
    %3197 = vmatprep.subr.bf16.mxu0 0
    %3198 = vmatpush1.bf16.msra.mxu0 0
    %3199 = vmatprep.subr.bf16.mxu0 0
    %3200 = vmatpush1.bf16.msra.mxu0 0
    %3201 = vmatprep.subr.bf16.mxu0 0
    %3202 = vmatpush1.bf16.msra.mxu0 0
    %3203 = vmatprep.subr.bf16.mxu0 0
    %3204 = vmatpush1.bf16.msra.mxu0 0
    %3205 = vmatprep.subr.bf16.mxu0 0
    %3206 = vmatpush1.bf16.msra.mxu0 0
    %3207 = vmatprep.subr.bf16.mxu0 0
    %3208 = vmatpush1.bf16.msra.mxu0 0
    %3209 = vmatprep.subr.bf16.mxu0 0
    %3210 = vmatpush1.bf16.msra.mxu0 0
    %3211 = vmatprep.subr.bf16.mxu0 0
    %3212 = vmatpush1.bf16.msra.mxu0 0
    %3213 = vmatprep.subr.bf16.mxu0 0
    %3214 = vmatpush1.bf16.msra.mxu0 0
    %3215 = vmatprep.mubr.bf16.mxu0 0
    %3216 = vmatmul.mubr.bf16.gmra.mrb[0].mxu0 %v3181
    %v3217 = vpop.f32.mrb[0].mxu0
    %v3218 = vadd.f32 0.0, %v3217
    %v3219 = vpop.f32.mrb[0].mxu0
    %v3220 = vpop.f32.mrb[0].mxu0
    %v3221 = vadd.f32 0.0, %v3220
    %v3222 = vpop.f32.mrb[0].mxu0
    %3223 = vdwg.mxu0
    %v3224 = vadd.f32 %v68, %v3218
    %v3225 = vadd.f32 %v69, %v3221
    %v3226 = vld [vmem:[%s9] sm:$0x1]
    %v3228 = vlaneseq
    %v3229 = vshrl.u32 %v3228, 7
    %v3230 = vsub.s32 0, %v3229
    %v3231 = vrot.slane %v3226, %v3230
    %v3233 = vadd.f32 %v3224, %v3231
    %v3234 = vadd.f32 %v3225, %v3231
    %v3235 = vpack.c.bf16 %v3160, %v3159
    %v3236 = vpack.c.bf16 %v3162, %v3161
    %s3237 = scalar_lea.vmem [#allocation5], 16
    %v3238 = vld [vmem:[%s3237] sm:$0xf]
    %v3239 = vld [vmem:[%s3237 + $0x4] sm:$0xf]
    %v3240 = vld [vmem:[%s3237 + $0x8] sm:$0xf]
    %v3241 = vld [vmem:[%s3237 + $0xc] sm:$0xf]
    %v3246 = vunpack.c.l.b16 %v3238
    %v3247 = vunpack.c.l.b16 %v3239
    %v3248 = vunpack.c.l.b16 %v3240
    %v3249 = vunpack.c.l.b16 %v3241
    %v3250 = vpack.c.b16 %v3247, %v3246
    %v3251 = vpack.c.b16 %v3249, %v3248
    %v3255 = vsel %vm100, %v3235, 0
    %v3258 = vsel %vm100, %v3236, 0
    %3260 = vmatprep.subr.bf16.mxu0 0
    %3261 = vmatpush1.bf16.msra.mxu0 %v3250
    %3262 = vmatprep.subr.bf16.mxu0 0
    %3263 = vmatpush1.bf16.msra.mxu0 %v3251
    %3264 = vmatprep.subr.bf16.mxu0 0
    %3265 = vmatpush1.bf16.msra.mxu0 0
    %3266 = vmatprep.subr.bf16.mxu0 0
    %3267 = vmatpush1.bf16.msra.mxu0 0
    %3268 = vmatprep.subr.bf16.mxu0 0
    %3269 = vmatpush1.bf16.msra.mxu0 0
    %3270 = vmatprep.subr.bf16.mxu0 0
    %3271 = vmatpush1.bf16.msra.mxu0 0
    %3272 = vmatprep.subr.bf16.mxu0 0
    %3273 = vmatpush1.bf16.msra.mxu0 0
    %3274 = vmatprep.subr.bf16.mxu0 0
    %3275 = vmatpush1.bf16.msra.mxu0 0
    %3276 = vmatprep.subr.bf16.mxu0 0
    %3277 = vmatpush1.bf16.msra.mxu0 0
    %3278 = vmatprep.subr.bf16.mxu0 0
    %3279 = vmatpush1.bf16.msra.mxu0 0
    %3280 = vmatprep.subr.bf16.mxu0 0
    %3281 = vmatpush1.bf16.msra.mxu0 0
    %3282 = vmatprep.subr.bf16.mxu0 0
    %3283 = vmatpush1.bf16.msra.mxu0 0
    %3284 = vmatprep.subr.bf16.mxu0 0
    %3285 = vmatpush1.bf16.msra.mxu0 0
    %3286 = vmatprep.subr.bf16.mxu0 0
    %3287 = vmatpush1.bf16.msra.mxu0 0
    %3288 = vmatprep.subr.bf16.mxu0 0
    %3289 = vmatpush1.bf16.msra.mxu0 0
    %3290 = vmatprep.subr.bf16.mxu0 0
    %3291 = vmatpush1.bf16.msra.mxu0 0
    %3292 = vmatprep.mubr.bf16.mxu0 0
    %3293 = vmatmul.mubr.bf16.gmra.mrb[0].mxu0 %v3255
    %v3294 = vpop.f32.mrb[0].mxu0
    %v3295 = vadd.f32 0.0, %v3294
    %v3296 = vpop.f32.mrb[0].mxu0
    %v3297 = vpop.f32.mrb[0].mxu0
    %v3298 = vadd.f32 0.0, %v3297
    %v3299 = vpop.f32.mrb[0].mxu0
    %3300 = vmatprep.mubr.bf16.mxu0 0
    %3301 = vmatmul.mubr.bf16.gmra.mrb[0].mxu0 %v3258
    %v3302 = vpop.f32.mrb[0].mxu0
    %v3303 = vadd.f32 0.0, %v3302
    %v3304 = vpop.f32.mrb[0].mxu0
    %v3305 = vpop.f32.mrb[0].mxu0
    %v3306 = vadd.f32 0.0, %v3305
    %v3307 = vpop.f32.mrb[0].mxu0
    %3308 = vdwg.mxu0
    %v3309 = vadd.f32 %v70, %v3295
    %v3310 = vadd.f32 %v71, %v3298
    %v3311 = vadd.f32 %v72, %v3303
    %v3312 = vadd.f32 %v73, %v3306
    %s3313 = scalar_lea.vmem %s9, 1
    %v3314 = vld [vmem:[%s3313] sm:$0x1]
    %v3316 = vlaneseq
    %v3317 = vshrl.u32 %v3316, 7
    %v3318 = vsub.s32 0, %v3317
    %v3319 = vrot.slane %v3314, %v3318
    %v3321 = vadd.f32 %v3309, %v3319
    %v3322 = vadd.f32 %v3310, %v3319
    %v3323 = vadd.f32 %v3311, %v3319
    %v3324 = vadd.f32 %v3312, %v3319
    %3325 = vst.msk [vmem:[#allocation7] sm:$0xff] %vm100, %v3233
    %3326 = vst.msk [vmem:[#allocation7 + $0x8] sm:$0xff] %vm100, %v3234
    %3327 = vst.msk [vmem:[#allocation8] sm:$0xff] %vm100, %v3321
    %3328 = vst.msk [vmem:[#allocation8 + $0x8] sm:$0xff] %vm100, %v3322
    %3329 = vst.msk [vmem:[#allocation8 + $0x10] sm:$0xff] %vm100, %v3323
    %3330 = vst.msk [vmem:[#allocation8 + $0x18] sm:$0xff] %vm100, %v3324
    // Predicated region
    $region50: #{tpu_custom_call.1} parent=1 // pred_check
      _
    $region51: #{tpu_custom_call.1} parent=1 // pred_check_branch
      %3332 = sbr.rel (0) target = $region53
    $region52: #{tpu_custom_call.1} parent=1 // pred_region
      %s3334 = ssub.s32 256, 256
      %3335 = vsyncadd [#allocation4], %s3334
      %s3336 = sshll.u32 [#allocation7], 4
      %s3337 = int_to_ptr.vmem [resolvable:$true] %s3336
      %3342 = dma.vmem_to_hbm [thread:$0]  %s3337, 256, %s10, [#allocation4], 128, 128, 8
    $region53: #{tpu_custom_call.1} parent=1 // pred_fallthru
      _
    // Predicated region
    $region54: #{tpu_custom_call.1} parent=1 // pred_check
      _
    $region55: #{tpu_custom_call.1} parent=1 // pred_check_branch
      %3344 = sbr.rel (0) target = $region57
    $region56: #{tpu_custom_call.1} parent=1 // pred_region
      %s3346 = ssub.s32 512, 512
      %3347 = vsyncadd [#allocation9], %s3346
      %s3348 = sshll.u32 [#allocation8], 4
      %s3349 = int_to_ptr.vmem [resolvable:$true] %s3348
      %3354 = dma.vmem_to_hbm [thread:$0]  %s3349, 512, %s11, [#allocation9], 128, 128, 8
    $region57: #{tpu_custom_call.1} parent=1 // pred_fallthru
      _
    // Predicated region
    $region58: #{tpu_custom_call.1} parent=1 // pred_check
      _
    $region59: #{tpu_custom_call.1} parent=1 // pred_check_branch
      %3356 = sbr.rel (0) target = $region61
    $region60: #{tpu_custom_call.1} parent=1 // pred_region
      %3357 = dma.done [#allocation4], 256
    $region61: #{tpu_custom_call.1} parent=1 // pred_fallthru
      _
    // Predicated region
    $region62: #{tpu_custom_call.1} parent=1 // pred_check
      _
    $region63: #{tpu_custom_call.1} parent=1 // pred_check_branch
      %3359 = sbr.rel (0) target = $region65
    $region64: #{tpu_custom_call.1} parent=1 // pred_region
      %3360 = dma.done [#allocation9], 512
    $region65: #{tpu_custom_call.1} parent=1 // pred_fallthru
      _
    %3361 = vsyncpa [#allocation3], 1
    %3362 = vsyncpa [#allocation6], 1
    %3363 = vsyncpa [#allocation4], 1
    %3364 = vsyncpa [#allocation9], 1

</llo_original>
